<compile_context>
chip_gen: v5e
topology: v5e:2x2
jax: 0.10.0
libtpu: 0.0.40
codegen_flags: <defaults>
</compile_context>

<pallas_src>
import functools
import math

import jax
import jax.numpy as jnp
from jax.experimental import pallas as pl
from jax.experimental.pallas import tpu as pltpu

# ---------------- hyper-parameters ----------------
EXEMPLAR_SEQ_DIM = 8      # exemplar sequence length
SEQ_DIM = 8               # target (lm) sequence length
GRAPH_DIM = 16
D4 = GRAPH_DIM * 4        # 64
NUM_HEADS = 4
HEAD_DIM = D4 // NUM_HEADS  # 16
MODEL_DIM = 32
LN_EPS = 1e-5

# bias-slab row assignments (one (8, 128) f32 tile holds every 1-D bias)
_B_LM, _B_Q, _B_KV, _B_OF, _B_GAMMA, _B_BETA = range(6)


def _softmax_last(x):
    m = jnp.max(x, axis=-1, keepdims=True)
    e = jnp.exp(x - m)
    return e * pl.reciprocal(jnp.sum(e, axis=-1, keepdims=True), approx=True)


def exemplar_kernel(lm_ref, ex_ref,
                    w_len_ref, w_ex_ref, b_exh_ref, w_lm_ref,
                    w_q_ref, w_kv_ref, w_of4_ref, bias_ref,
                    out_ref, *, ib):
    bf16 = jnp.bfloat16
    block_b = lm_ref.shape[0]           # batch elements per grid step (static)
    n_chunks = block_b // ib            # inner chunks per step (static)
    rows = ib * SEQ_DIM
    inv_sqrt_d4 = 1.0 / math.sqrt(D4)   # 0.125, exact in bf16

    # ---- grid-step invariants (hoisted out of the chunk loop) ----
    b_lm = bias_ref[_B_LM:_B_LM + 1, 0:D4]              # (1, 64)
    b_q = bias_ref[_B_Q:_B_Q + 1, 0:D4]                 # (1, 64) pre-scaled
    b_kv = bias_ref[_B_KV:_B_KV + 1, 0:2 * D4]          # (1, 128)
    b_of = bias_ref[_B_OF:_B_OF + 1, 0:MODEL_DIM]       # (1, 32) = b_o@w_fin+b_fin
    gamma = bias_ref[_B_GAMMA:_B_GAMMA + 1, 0:MODEL_DIM]
    beta = bias_ref[_B_BETA:_B_BETA + 1, 0:MODEL_DIM]
    b_exh = b_exh_ref[...]                               # (SEQ, D4) f32
    # Broadcast the seq-mix weight once per step (JAX does not CSE
    # broadcast_in_dim inside loops; ib copies only, not tb copies).
    w_len_b = jnp.broadcast_to(w_len_ref[...],
                               (ib, SEQ_DIM, EXEMPLAR_SEQ_DIM))       # bf16

    def chunk(c, carry):
        off = pl.multiple_of(c * ib, ib)
        lm_c = lm_ref[pl.ds(off, ib)]                    # (ib, SEQ, MODEL) f32
        ex_c = ex_ref[pl.ds(off, ib)]                    # (ib, EX_SEQ, MODEL) f32

        # ---------- exemplar path: seq-mix first, then feature projection ----
        ex_mix = jax.lax.dot_general(                    # (ib, SEQ, MODEL) f32
            w_len_b, ex_c.astype(bf16),
            dimension_numbers=(((2,), (1,)), ((0,), (0,))),
            preferred_element_type=jnp.float32)
        ex_h = jnp.dot(ex_mix.reshape(rows, MODEL_DIM).astype(bf16),
                       w_ex_ref[...],
                       preferred_element_type=jnp.float32)            # (rows, 64)
        # b_exh = b_len folded through w_ex  +  b_ex   (exact reassociation)
        ex_h3 = ex_h.reshape(ib, SEQ_DIM, D4) + b_exh[None, :, :]
        # exemplar_dropout == identity in eval mode

        # ---------- lm path: projection + relu ----------
        lm_h = jnp.dot(lm_c.reshape(rows, MODEL_DIM).astype(bf16),
                       w_lm_ref[...],
                       preferred_element_type=jnp.float32) + b_lm
        lm_h3 = jnp.maximum(lm_h, 0.0).reshape(ib, SEQ_DIM, D4)

        # ---------- fused exemplar + lm self-attention (one batched SDPA) ----
        h_b = jnp.concatenate([ex_h3.astype(bf16), lm_h3.astype(bf16)],
                              axis=0)                                  # (2ib, S, 64)
        sc = jax.lax.dot_general(h_b * inv_sqrt_d4, h_b,
                                 (((2,), (2,)), ((0,), (0,))),
                                 preferred_element_type=jnp.float32)   # (2ib, S, S)
        att = jax.lax.dot_general(_softmax_last(sc).astype(bf16), h_b,
                                  (((2,), (1,)), ((0,), (0,))),
                                  preferred_element_type=jnp.float32)  # (2ib, S, 64)
        ex_att = att[:ib]
        lm_att = att[ib:]

        # ---------- cross multi-head attention (Q = exemplar, K/V = lm) ------
        q = jnp.dot(ex_att.reshape(rows, D4).astype(bf16), w_q_ref[...],
                    preferred_element_type=jnp.float32) + b_q          # scale folded in
        kv = jnp.dot(lm_att.reshape(rows, D4).astype(bf16), w_kv_ref[...],
                     preferred_element_type=jnp.float32) + b_kv
        q3 = q.astype(bf16).reshape(ib, SEQ_DIM, D4)
        kv3 = kv.astype(bf16).reshape(ib, SEQ_DIM, 2 * D4)

        # Stack heads along the leading (batch) axis -> one batched SDPA for
        # all heads: 1 score dot + 1 softmax + 1 weighted sum.
        qh = jnp.concatenate(
            [q3[:, :, h * HEAD_DIM:(h + 1) * HEAD_DIM] for h in range(NUM_HEADS)],
            axis=0)                                                    # (4ib, S, hd)
        kh = jnp.concatenate(
            [kv3[:, :, h * HEAD_DIM:(h + 1) * HEAD_DIM] for h in range(NUM_HEADS)],
            axis=0)
        vh = jnp.concatenate(
            [kv3[:, :, D4 + h * HEAD_DIM:D4 + (h + 1) * HEAD_DIM]
             for h in range(NUM_HEADS)],
            axis=0)
        sh = jax.lax.dot_general(qh, kh, (((2,), (2,)), ((0,), (0,))),
                                 preferred_element_type=jnp.float32)   # (4ib, S, S)
        oh = jax.lax.dot_general(_softmax_last(sh).astype(bf16), vh,
                                 (((2,), (1,)), ((0,), (0,))),
                                 preferred_element_type=jnp.float32)   # (4ib, S, hd)

        # ---------- fused output + final transform:  w_of = w_o @ w_fin ------
        # Head h output hits its own 16-row block of w_o, so with w_of split
        # per head this is one 4-batch dot + a sum over heads (no lane concat).
        o4 = oh.astype(bf16).reshape(NUM_HEADS, rows, HEAD_DIM)
        out = jax.lax.dot_general(o4, w_of4_ref[...],
                                  (((2,), (1,)), ((0,), (0,))),
                                  preferred_element_type=jnp.float32)  # (4, rows, 32)
        out = jnp.sum(out, axis=0) + b_of
        out = jnp.maximum(out, 0.0)                                    # (rows, 32)

        # ---------- LayerNorm (f32) ----------
        mu = jnp.mean(out, axis=-1, keepdims=True)
        xc = out - mu
        var = jnp.mean(xc * xc, axis=-1, keepdims=True)
        out = xc * jax.lax.rsqrt(var + LN_EPS) * gamma + beta

        # TODO(synk): experiment with a lane-dense (ib, SEQ*MODEL=256) output
        # slab; the sublane->lane repack it needs is left out for robustness.
        out_ref[pl.ds(off, ib)] = out.reshape(ib, SEQ_DIM, MODEL_DIM)
        return carry

    jax.lax.fori_loop(0, n_chunks, chunk, 0)


# ------------------------------ parameters ---------------------------------
def init_raw_params(key):
    """Synthetic parameters (independent keys per tensor).

    Weights are stored as (in_features, out_features) so the math is x @ W + b,
    except w_len which keeps the torch (out=SEQ, in=EX_SEQ) layout used by the
    seq-mixing contraction.
    """
    shapes = dict(
        w_len=(SEQ_DIM, EXEMPLAR_SEQ_DIM), b_len=(SEQ_DIM,),
        w_ex=(MODEL_DIM, D4), b_ex=(D4,),
        w_lm=(MODEL_DIM, D4), b_lm=(D4,),
        w_q=(D4, D4), b_q=(D4,),
        w_k=(D4, D4), b_k=(D4,),
        w_v=(D4, D4), b_v=(D4,),
        w_o=(D4, D4), b_o=(D4,),
        w_fin=(D4, MODEL_DIM), b_fin=(MODEL_DIM,),
    )
    keys = jax.random.split(key, len(shapes))
    raw = {n: 0.05 * jax.random.normal(k, s, jnp.float32)
           for (n, s), k in zip(shapes.items(), keys)}
    raw["gamma"] = jnp.ones((MODEL_DIM,), jnp.float32)
    raw["beta"] = jnp.zeros((MODEL_DIM,), jnp.float32)
    return raw


def pack_params(raw):
    """Pack raw params into 8 kernel operands (weights in bf16, biases in f32)."""
    f32 = jnp.float32
    bf16 = jnp.bfloat16
    inv_sqrt_hd = 1.0 / math.sqrt(HEAD_DIM)
    # Fold b_len through exemplar_transform (exact):
    #   b_exh[s, d] = b_len[s] * sum_m w_ex[m, d] + b_ex[d]
    b_exh = (raw["b_len"][:, None] * jnp.sum(raw["w_ex"], axis=0)[None, :]
             + raw["b_ex"][None, :]).astype(f32)                      # (SEQ, D4)
    # Fused K/V projection (they share the lm activation).
    w_kv = jnp.concatenate([raw["w_k"], raw["w_v"]], axis=1)          # (D4, 128)
    b_kv = jnp.concatenate([raw["b_k"], raw["b_v"]])
    # Per-head 1/sqrt(head_dim) scale folded into the Q projection (exact).
    w_q = raw["w_q"] * inv_sqrt_hd
    b_q = raw["b_q"] * inv_sqrt_hd
    # Output projection fused with final_transform (exact: no nonlinearity
    # between them):  w_of = w_o @ w_fin,  b_of = b_o @ w_fin + b_fin.
    w_of = raw["w_o"] @ raw["w_fin"]                                  # (D4, MODEL)
    b_of = raw["b_o"] @ raw["w_fin"] + raw["b_fin"]                   # (MODEL,)
    w_of4 = w_of.reshape(NUM_HEADS, HEAD_DIM, MODEL_DIM)              # per-head blocks

    bias = jnp.zeros((8, 128), f32)
    bias = bias.at[_B_LM, 0:D4].set(raw["b_lm"])
    bias = bias.at[_B_Q, 0:D4].set(b_q)
    bias = bias.at[_B_KV, 0:2 * D4].set(b_kv)
    bias = bias.at[_B_OF, 0:MODEL_DIM].set(b_of)
    bias = bias.at[_B_GAMMA, 0:MODEL_DIM].set(raw["gamma"])
    bias = bias.at[_B_BETA, 0:MODEL_DIM].set(raw["beta"])

    return (raw["w_len"].astype(bf16), raw["w_ex"].astype(bf16), b_exh,
            raw["w_lm"].astype(bf16), w_q.astype(bf16), w_kv.astype(bf16),
            w_of4.astype(bf16), bias)


# ------------------------------ wrapper -------------------------------------
def _round_up(x, m):
    return ((x + m - 1) // m) * m


def exemplar_module(lm_tensor, exemplar_input, packed_params, *, tb=256, ib=32):
    """tb = batch elements per grid step; ib = inner fori_loop chunk size.

    ib=32 gives tb*SEQ = 256 rows per dense matmul (good on every generation;
    keep ib a multiple of 16 on v5e so rows is a multiple of 128).  tb is large
    so the ~0.35us per-grid-step overhead is amortized; the wrapper still
    prefers >= 2 grid steps so both v7x TensorCores get work."""
    B, s_lm, m = lm_tensor.shape
    _, s_ex, m2 = exemplar_input.shape
    assert s_lm == SEQ_DIM and m == MODEL_DIM
    assert s_ex == EXEMPLAR_SEQ_DIM and m2 == MODEL_DIM

    ib = max(8, min(_round_up(ib, 8), _round_up(B, 8)))   # inner chunk (mult. of 8)
    bp = _round_up(B, ib)
    block_b = min(_round_up(tb, ib), bp)                  # batch per grid step
    bp = _round_up(bp, block_b)
    # v7x has 2 TensorCores per chip: prefer >= 2 grid steps when possible.
    if bp // block_b < 2 and block_b > ib and (block_b // ib) % 2 == 0:
        block_b //= 2
    n_steps = bp // block_b

    if bp != B:
        pad = bp - B
        lm_tensor = jnp.pad(lm_tensor, ((0, pad), (0, 0), (0, 0)))
        exemplar_input = jnp.pad(exemplar_input, ((0, pad), (0, 0), (0, 0)))

    def _const_spec(p):
        nd = p.ndim
        return pl.BlockSpec(p.shape, lambda i: (0,) * nd)

    in_specs = [
        pl.BlockSpec((block_b, SEQ_DIM, MODEL_DIM), lambda i: (i, 0, 0)),
        pl.BlockSpec((block_b, EXEMPLAR_SEQ_DIM, MODEL_DIM), lambda i: (i, 0, 0)),
    ] + [_const_spec(p) for p in packed_params]

    out = pl.pallas_call(
        functools.partial(exemplar_kernel, ib=ib),
        out_shape=jax.ShapeDtypeStruct((bp, SEQ_DIM, MODEL_DIM), jnp.float32),
        grid_spec=pltpu.PrefetchScalarGridSpec(
            num_scalar_prefetch=0,
            grid=(n_steps,),
            in_specs=in_specs,
            out_specs=pl.BlockSpec((block_b, SEQ_DIM, MODEL_DIM),
                                   lambda i: (i, 0, 0)),
        ),
        compiler_params=pltpu.CompilerParams(dimension_semantics=("parallel",)),
    )(lm_tensor, exemplar_input, *packed_params)
    return out[:B]


# --------------------------- pure-JAX reference ------------------------------
def exemplar_reference(lm, ex, raw):
    def sdpa(q, k, v, scale):
        s = jnp.einsum('bsd,btd->bst', q, k) * scale
        return jnp.einsum('bst,btd->bsd', jax.nn.softmax(s, axis=-1), v)

    ex_p = jnp.swapaxes(ex, 1, 2)                     # (B, M, E)
    ex_p = ex_p @ raw["w_len"].T + raw["b_len"]       # Linear(EX_SEQ -> SEQ)
    ex_s = jnp.swapaxes(ex_p, 1, 2)                   # (B, S, M)
    ex_h = ex_s @ raw["w_ex"] + raw["b_ex"]
    ex_att = sdpa(ex_h, ex_h, ex_h, 1.0 / math.sqrt(D4))

    lm_h = jax.nn.relu(lm @ raw["w_lm"] + raw["b_lm"])
    lm_att = sdpa(lm_h, lm_h, lm_h, 1.0 / math.sqrt(D4))

    q = ex_att @ raw["w_q"] + raw["b_q"]
    k = lm_att @ raw["w_k"] + raw["b_k"]
    v = lm_att @ raw["w_v"] + raw["b_v"]
    B = q.shape[0]

    def split(x):
        return x.reshape(B, SEQ_DIM, NUM_HEADS, HEAD_DIM).transpose(0, 2, 1, 3)

    qh, kh, vh = split(q), split(k), split(v)
    s = jnp.einsum('bhsc,bhtc->bhst', qh, kh) / math.sqrt(HEAD_DIM)
    o = jnp.einsum('bhst,bhtc->bhsc', jax.nn.softmax(s, axis=-1), vh)
    o = o.transpose(0, 2, 1, 3).reshape(B, SEQ_DIM, D4)
    o = o @ raw["w_o"] + raw["b_o"]

    out = jax.nn.relu(o @ raw["w_fin"] + raw["b_fin"])
    mu = out.mean(-1, keepdims=True)
    var = ((out - mu) ** 2).mean(-1, keepdims=True)
    return (out - mu) / jnp.sqrt(var + LN_EPS) * raw["gamma"] + raw["beta"]


if __name__ == "__main__":
    key = jax.random.PRNGKey(0)
    k_lm, k_ex, k_p = jax.random.split(key, 3)

    B = 4
    lm_tensor = jax.random.normal(k_lm, (B, SEQ_DIM, MODEL_DIM), jnp.float32)
    exemplar_input = jax.random.normal(
        k_ex, (B, EXEMPLAR_SEQ_DIM, MODEL_DIM), jnp.float32)

    raw = init_raw_params(k_p)
    packed = pack_params(raw)

    out = exemplar_module(lm_tensor, exemplar_input, packed)
    jax.block_until_ready(out)
    assert out.shape == (B, SEQ_DIM, MODEL_DIM), out.shape
    assert bool(jnp.all(jnp.isfinite(out)))

    ref = exemplar_reference(lm_tensor, exemplar_input, raw)
    err = float(jnp.max(jnp.abs(out - ref)))
    # loose tolerance: bf16 MXU operands, approx reciprocal in softmax,
    # algebraically-reassociated (but exact) bias/weight fusions.
    assert err < 5e-2, f"max abs err vs reference: {err}"
    print("KERNEL_OK")
</pallas_src>

<mosaic_0001>
module attributes {stable_mosaic.version = 11 : i64} {
  func.func @exemplar_kernel(%arg0: i32, %arg1: memref<8x8x32xf32, #tpu.memory_space<vmem>>, %arg2: memref<8x8x32xf32, #tpu.memory_space<vmem>>, %arg3: memref<8x8xbf16, #tpu.memory_space<vmem>>, %arg4: memref<32x64xbf16, #tpu.memory_space<vmem>>, %arg5: memref<8x64xf32, #tpu.memory_space<vmem>>, %arg6: memref<32x64xbf16, #tpu.memory_space<vmem>>, %arg7: memref<64x64xbf16, #tpu.memory_space<vmem>>, %arg8: memref<64x128xbf16, #tpu.memory_space<vmem>>, %arg9: memref<4x16x32xbf16, #tpu.memory_space<vmem>>, %arg10: memref<8x128xf32, #tpu.memory_space<vmem>>, %arg11: memref<8x8x32xf32, #tpu.memory_space<vmem>>) attributes {dimension_semantics = [#tpu.dimension_semantics<parallel>], iteration_bounds = array<i64: 1>, scalar_prefetch = 0 : i64, scratch_operands = 0 : i64, tpu.core_type = #tpu.core_type<tc>, window_params = [{transform_indices = @transform_0, window_bounds = array<i64: 8, 8, 32>}, {transform_indices = @transform_1, window_bounds = array<i64: 8, 8, 32>}, {pipeline_mode = #tpu.pipeline_mode<synchronous>, transform_indices = @transform_2, window_bounds = array<i64: 8, 8>}, {pipeline_mode = #tpu.pipeline_mode<synchronous>, transform_indices = @transform_3, window_bounds = array<i64: 32, 64>}, {pipeline_mode = #tpu.pipeline_mode<synchronous>, transform_indices = @transform_4, window_bounds = array<i64: 8, 64>}, {pipeline_mode = #tpu.pipeline_mode<synchronous>, transform_indices = @transform_5, window_bounds = array<i64: 32, 64>}, {pipeline_mode = #tpu.pipeline_mode<synchronous>, transform_indices = @transform_6, window_bounds = array<i64: 64, 64>}, {pipeline_mode = #tpu.pipeline_mode<synchronous>, transform_indices = @transform_7, window_bounds = array<i64: 64, 128>}, {pipeline_mode = #tpu.pipeline_mode<synchronous>, transform_indices = @transform_8, window_bounds = array<i64: 4, 16, 32>}, {pipeline_mode = #tpu.pipeline_mode<synchronous>, transform_indices = @transform_9, window_bounds = array<i64: 8, 128>}, {transform_indices = @transform_10, window_bounds = array<i64: 8, 8, 32>}]} {
    %c0 = arith.constant 0 : index
    %c0_0 = arith.constant 0 : index
    %0 = vector.load %arg10[%c0, %c0_0] : memref<8x128xf32, #tpu.memory_space<vmem>>, vector<1x64xf32>
    %c1 = arith.constant 1 : index
    %c0_1 = arith.constant 0 : index
    %1 = vector.load %arg10[%c1, %c0_1] : memref<8x128xf32, #tpu.memory_space<vmem>>, vector<1x64xf32>
    %c2 = arith.constant 2 : index
    %c0_2 = arith.constant 0 : index
    %2 = vector.load %arg10[%c2, %c0_2] : memref<8x128xf32, #tpu.memory_space<vmem>>, vector<1x128xf32>
    %c3 = arith.constant 3 : index
    %c0_3 = arith.constant 0 : index
    %3 = vector.load %arg10[%c3, %c0_3] : memref<8x128xf32, #tpu.memory_space<vmem>>, vector<1x32xf32>
    %c4 = arith.constant 4 : index
    %c0_4 = arith.constant 0 : index
    %4 = vector.load %arg10[%c4, %c0_4] : memref<8x128xf32, #tpu.memory_space<vmem>>, vector<1x32xf32>
    %c5 = arith.constant 5 : index
    %c0_5 = arith.constant 0 : index
    %5 = vector.load %arg10[%c5, %c0_5] : memref<8x128xf32, #tpu.memory_space<vmem>>, vector<1x32xf32>
    %c0_6 = arith.constant 0 : index
    %c0_7 = arith.constant 0 : index
    %6 = vector.load %arg5[%c0_6, %c0_7] : memref<8x64xf32, #tpu.memory_space<vmem>>, vector<8x64xf32>
    %c0_8 = arith.constant 0 : index
    %c0_9 = arith.constant 0 : index
    %7 = vector.load %arg3[%c0_8, %c0_9] : memref<8x8xbf16, #tpu.memory_space<vmem>>, vector<8x8xbf16>
    %8 = vector.shape_cast %7 : vector<8x8xbf16> to vector<1x8x8xbf16>
    %9 = vector.broadcast %8 : vector<1x8x8xbf16> to vector<8x8x8xbf16>
    %c0_i32 = arith.constant 0 : i32
    %c8_i32 = arith.constant 8 : i32
    %10 = arith.muli %c0_i32, %c8_i32 : i32
    %11 = tpu.assume_multiple %10, 8 : i32
    %12 = arith.index_cast %11 : i32 to index
    %c0_10 = arith.constant 0 : index
    %c0_11 = arith.constant 0 : index
    %13 = vector.load %arg1[%12, %c0_10, %c0_11] : memref<8x8x32xf32, #tpu.memory_space<vmem>>, vector<8x8x32xf32>
    %14 = arith.index_cast %11 : i32 to index
    %c0_12 = arith.constant 0 : index
    %c0_13 = arith.constant 0 : index
    %15 = vector.load %arg2[%14, %c0_12, %c0_13] : memref<8x8x32xf32, #tpu.memory_space<vmem>>, vector<8x8x32xf32>
    %16 = arith.truncf %15 : vector<8x8x32xf32> to vector<8x8x32xbf16>
    %cst = arith.constant dense<0.000000e+00> : vector<8x8x32xf32>
    %17 = tpu.matmul %9, %16, %cst {dimension_numbers = #tpu.dot_dimension_numbers<[2], [1], [1], [2], [0, 0, 0, 1, 1, 2], [0], [0]>} : vector<8x8x8xbf16>, vector<8x8x32xbf16>, vector<8x8x32xf32> -> vector<8x8x32xf32>
    %18 = vector.shape_cast %17 : vector<8x8x32xf32> to vector<64x32xf32>
    %19 = arith.truncf %18 : vector<64x32xf32> to vector<64x32xbf16>
    %c0_14 = arith.constant 0 : index
    %c0_15 = arith.constant 0 : index
    %20 = vector.load %arg4[%c0_14, %c0_15] : memref<32x64xbf16, #tpu.memory_space<vmem>>, vector<32x64xbf16>
    %cst_16 = arith.constant dense<0.000000e+00> : vector<64x64xf32>
    %21 = tpu.matmul %19, %20, %cst_16 {dimension_numbers = #tpu.dot_dimension_numbers<[1], [0], [0], [1], [0, 0, 1, 1], [], []>} : vector<64x32xbf16>, vector<32x64xbf16>, vector<64x64xf32> -> vector<64x64xf32>
    %22 = vector.shape_cast %21 : vector<64x64xf32> to vector<8x8x64xf32>
    %23 = vector.shape_cast %6 : vector<8x64xf32> to vector<1x8x64xf32>
    %24 = vector.broadcast %23 : vector<1x8x64xf32> to vector<8x8x64xf32>
    %25 = arith.addf %22, %24 : vector<8x8x64xf32>
    %26 = vector.shape_cast %13 : vector<8x8x32xf32> to vector<64x32xf32>
    %27 = arith.truncf %26 : vector<64x32xf32> to vector<64x32xbf16>
    %c0_17 = arith.constant 0 : index
    %c0_18 = arith.constant 0 : index
    %28 = vector.load %arg6[%c0_17, %c0_18] : memref<32x64xbf16, #tpu.memory_space<vmem>>, vector<32x64xbf16>
    %cst_19 = arith.constant dense<0.000000e+00> : vector<64x64xf32>
    %29 = tpu.matmul %27, %28, %cst_19 {dimension_numbers = #tpu.dot_dimension_numbers<[1], [0], [0], [1], [0, 0, 1, 1], [], []>} : vector<64x32xbf16>, vector<32x64xbf16>, vector<64x64xf32> -> vector<64x64xf32>
    %30 = vector.broadcast %0 : vector<1x64xf32> to vector<64x64xf32>
    %31 = arith.addf %29, %30 : vector<64x64xf32>
    %cst_20 = arith.constant 0.000000e+00 : f32
    %32 = vector.broadcast %cst_20 : f32 to vector<64x64xf32>
    %33 = arith.maximumf %31, %32 : vector<64x64xf32>
    %34 = vector.shape_cast %33 : vector<64x64xf32> to vector<8x8x64xf32>
    %35 = arith.truncf %25 : vector<8x8x64xf32> to vector<8x8x64xbf16>
    %36 = arith.truncf %34 : vector<8x8x64xf32> to vector<8x8x64xbf16>
    %37 = tpu.concatenate %35, %36 in 0 : vector<8x8x64xbf16>, vector<8x8x64xbf16> -> vector<16x8x64xbf16>
    %cst_21 = arith.constant 1.250000e-01 : bf16
    %38 = vector.broadcast %cst_21 : bf16 to vector<16x8x64xbf16>
    %39 = arith.mulf %37, %38 : vector<16x8x64xbf16>
    %cst_22 = arith.constant dense<0.000000e+00> : vector<16x8x8xf32>
    %40 = tpu.matmul %39, %37, %cst_22 {dimension_numbers = #tpu.dot_dimension_numbers<[2], [2], [1], [1], [0, 0, 0, 1, 1, 1], [0], [0]>} : vector<16x8x64xbf16>, vector<16x8x64xbf16>, vector<16x8x8xf32> -> vector<16x8x8xf32>
    %cst_23 = arith.constant dense<0xFF800000> : vector<16x8xf32>
    %41 = vector.multi_reduction <maximumf>, %40, %cst_23 [2] : vector<16x8x8xf32> to vector<16x8xf32>
    %42 = vector.shape_cast %41 : vector<16x8xf32> to vector<16x8x1xf32>
    %43 = vector.broadcast %42 : vector<16x8x1xf32> to vector<16x8x8xf32>
    %44 = arith.subf %40, %43 : vector<16x8x8xf32>
    %45 = math.exp %44 : vector<16x8x8xf32>
    %cst_24 = arith.constant dense<0.000000e+00> : vector<16x8xf32>
    %46 = vector.multi_reduction <add>, %45, %cst_24 [2] : vector<16x8x8xf32> to vector<16x8xf32>
    %47 = vector.shape_cast %46 : vector<16x8xf32> to vector<16x8x1xf32>
    %48 = tpu.reciprocal %47 {approx = true} : vector<16x8x1xf32> -> vector<16x8x1xf32>
    %49 = vector.broadcast %48 : vector<16x8x1xf32> to vector<16x8x8xf32>
    %50 = arith.mulf %45, %49 : vector<16x8x8xf32>
    %51 = arith.truncf %50 : vector<16x8x8xf32> to vector<16x8x8xbf16>
    %cst_25 = arith.constant dense<0.000000e+00> : vector<16x8x64xf32>
    %52 = tpu.matmul %51, %37, %cst_25 {dimension_numbers = #tpu.dot_dimension_numbers<[2], [1], [1], [2], [0, 0, 0, 1, 1, 2], [0], [0]>} : vector<16x8x8xbf16>, vector<16x8x64xbf16>, vector<16x8x64xf32> -> vector<16x8x64xf32>
    %53 = vector.extract_strided_slice %52 {offsets = [0, 0, 0], sizes = [8, 8, 64], strides = [1, 1, 1]} : vector<16x8x64xf32> to vector<8x8x64xf32>
    %54 = vector.extract_strided_slice %52 {offsets = [8, 0, 0], sizes = [8, 8, 64], strides = [1, 1, 1]} : vector<16x8x64xf32> to vector<8x8x64xf32>
    %55 = vector.shape_cast %53 : vector<8x8x64xf32> to vector<64x64xf32>
    %56 = arith.truncf %55 : vector<64x64xf32> to vector<64x64xbf16>
    %c0_26 = arith.constant 0 : index
    %c0_27 = arith.constant 0 : index
    %57 = vector.load %arg7[%c0_26, %c0_27] : memref<64x64xbf16, #tpu.memory_space<vmem>>, vector<64x64xbf16>
    %cst_28 = arith.constant dense<0.000000e+00> : vector<64x64xf32>
    %58 = tpu.matmul %56, %57, %cst_28 {dimension_numbers = #tpu.dot_dimension_numbers<[1], [0], [0], [1], [0, 0, 1, 1], [], []>} : vector<64x64xbf16>, vector<64x64xbf16>, vector<64x64xf32> -> vector<64x64xf32>
    %59 = vector.broadcast %1 : vector<1x64xf32> to vector<64x64xf32>
    %60 = arith.addf %58, %59 : vector<64x64xf32>
    %61 = vector.shape_cast %54 : vector<8x8x64xf32> to vector<64x64xf32>
    %62 = arith.truncf %61 : vector<64x64xf32> to vector<64x64xbf16>
    %c0_29 = arith.constant 0 : index
    %c0_30 = arith.constant 0 : index
    %63 = vector.load %arg8[%c0_29, %c0_30] : memref<64x128xbf16, #tpu.memory_space<vmem>>, vector<64x128xbf16>
    %cst_31 = arith.constant dense<0.000000e+00> : vector<64x128xf32>
    %64 = tpu.matmul %62, %63, %cst_31 {dimension_numbers = #tpu.dot_dimension_numbers<[1], [0], [0], [1], [0, 0, 1, 1], [], []>} : vector<64x64xbf16>, vector<64x128xbf16>, vector<64x128xf32> -> vector<64x128xf32>
    %65 = vector.broadcast %2 : vector<1x128xf32> to vector<64x128xf32>
    %66 = arith.addf %64, %65 : vector<64x128xf32>
    %67 = arith.truncf %60 : vector<64x64xf32> to vector<64x64xbf16>
    %68 = vector.shape_cast %67 : vector<64x64xbf16> to vector<8x8x64xbf16>
    %69 = arith.truncf %66 : vector<64x128xf32> to vector<64x128xbf16>
    %70 = vector.shape_cast %69 : vector<64x128xbf16> to vector<8x8x128xbf16>
    %71 = vector.extract_strided_slice %68 {offsets = [0, 0, 0], sizes = [8, 8, 16], strides = [1, 1, 1]} : vector<8x8x64xbf16> to vector<8x8x16xbf16>
    %72 = vector.extract_strided_slice %68 {offsets = [0, 0, 16], sizes = [8, 8, 16], strides = [1, 1, 1]} : vector<8x8x64xbf16> to vector<8x8x16xbf16>
    %73 = vector.extract_strided_slice %68 {offsets = [0, 0, 32], sizes = [8, 8, 16], strides = [1, 1, 1]} : vector<8x8x64xbf16> to vector<8x8x16xbf16>
    %74 = vector.extract_strided_slice %68 {offsets = [0, 0, 48], sizes = [8, 8, 16], strides = [1, 1, 1]} : vector<8x8x64xbf16> to vector<8x8x16xbf16>
    %75 = tpu.concatenate %71, %72, %73, %74 in 0 : vector<8x8x16xbf16>, vector<8x8x16xbf16>, vector<8x8x16xbf16>, vector<8x8x16xbf16> -> vector<32x8x16xbf16>
    %76 = vector.extract_strided_slice %70 {offsets = [0, 0, 0], sizes = [8, 8, 16], strides = [1, 1, 1]} : vector<8x8x128xbf16> to vector<8x8x16xbf16>
    %77 = vector.extract_strided_slice %70 {offsets = [0, 0, 16], sizes = [8, 8, 16], strides = [1, 1, 1]} : vector<8x8x128xbf16> to vector<8x8x16xbf16>
    %78 = vector.extract_strided_slice %70 {offsets = [0, 0, 32], sizes = [8, 8, 16], strides = [1, 1, 1]} : vector<8x8x128xbf16> to vector<8x8x16xbf16>
    %79 = vector.extract_strided_slice %70 {offsets = [0, 0, 48], sizes = [8, 8, 16], strides = [1, 1, 1]} : vector<8x8x128xbf16> to vector<8x8x16xbf16>
    %80 = tpu.concatenate %76, %77, %78, %79 in 0 : vector<8x8x16xbf16>, vector<8x8x16xbf16>, vector<8x8x16xbf16>, vector<8x8x16xbf16> -> vector<32x8x16xbf16>
    %81 = vector.extract_strided_slice %70 {offsets = [0, 0, 64], sizes = [8, 8, 16], strides = [1, 1, 1]} : vector<8x8x128xbf16> to vector<8x8x16xbf16>
    %82 = vector.extract_strided_slice %70 {offsets = [0, 0, 80], sizes = [8, 8, 16], strides = [1, 1, 1]} : vector<8x8x128xbf16> to vector<8x8x16xbf16>
    %83 = vector.extract_strided_slice %70 {offsets = [0, 0, 96], sizes = [8, 8, 16], strides = [1, 1, 1]} : vector<8x8x128xbf16> to vector<8x8x16xbf16>
    %84 = vector.extract_strided_slice %70 {offsets = [0, 0, 112], sizes = [8, 8, 16], strides = [1, 1, 1]} : vector<8x8x128xbf16> to vector<8x8x16xbf16>
    %85 = tpu.concatenate %81, %82, %83, %84 in 0 : vector<8x8x16xbf16>, vector<8x8x16xbf16>, vector<8x8x16xbf16>, vector<8x8x16xbf16> -> vector<32x8x16xbf16>
    %cst_32 = arith.constant dense<0.000000e+00> : vector<32x8x8xf32>
    %86 = tpu.matmul %75, %80, %cst_32 {dimension_numbers = #tpu.dot_dimension_numbers<[2], [2], [1], [1], [0, 0, 0, 1, 1, 1], [0], [0]>} : vector<32x8x16xbf16>, vector<32x8x16xbf16>, vector<32x8x8xf32> -> vector<32x8x8xf32>
    %cst_33 = arith.constant dense<0xFF800000> : vector<32x8xf32>
    %87 = vector.multi_reduction <maximumf>, %86, %cst_33 [2] : vector<32x8x8xf32> to vector<32x8xf32>
    %88 = vector.shape_cast %87 : vector<32x8xf32> to vector<32x8x1xf32>
    %89 = vector.broadcast %88 : vector<32x8x1xf32> to vector<32x8x8xf32>
    %90 = arith.subf %86, %89 : vector<32x8x8xf32>
    %91 = math.exp %90 : vector<32x8x8xf32>
    %cst_34 = arith.constant dense<0.000000e+00> : vector<32x8xf32>
    %92 = vector.multi_reduction <add>, %91, %cst_34 [2] : vector<32x8x8xf32> to vector<32x8xf32>
    %93 = vector.shape_cast %92 : vector<32x8xf32> to vector<32x8x1xf32>
    %94 = tpu.reciprocal %93 {approx = true} : vector<32x8x1xf32> -> vector<32x8x1xf32>
    %95 = vector.broadcast %94 : vector<32x8x1xf32> to vector<32x8x8xf32>
    %96 = arith.mulf %91, %95 : vector<32x8x8xf32>
    %97 = arith.truncf %96 : vector<32x8x8xf32> to vector<32x8x8xbf16>
    %cst_35 = arith.constant dense<0.000000e+00> : vector<32x8x16xf32>
    %98 = tpu.matmul %97, %85, %cst_35 {dimension_numbers = #tpu.dot_dimension_numbers<[2], [1], [1], [2], [0, 0, 0, 1, 1, 2], [0], [0]>} : vector<32x8x8xbf16>, vector<32x8x16xbf16>, vector<32x8x16xf32> -> vector<32x8x16xf32>
    %99 = arith.truncf %98 : vector<32x8x16xf32> to vector<32x8x16xbf16>
    %100 = vector.shape_cast %99 : vector<32x8x16xbf16> to vector<4x64x16xbf16>
    %c0_36 = arith.constant 0 : index
    %c0_37 = arith.constant 0 : index
    %c0_38 = arith.constant 0 : index
    %101 = vector.load %arg9[%c0_36, %c0_37, %c0_38] : memref<4x16x32xbf16, #tpu.memory_space<vmem>>, vector<4x16x32xbf16>
    %cst_39 = arith.constant dense<0.000000e+00> : vector<4x64x32xf32>
    %102 = tpu.matmul %100, %101, %cst_39 {dimension_numbers = #tpu.dot_dimension_numbers<[2], [1], [1], [2], [0, 0, 0, 1, 1, 2], [0], [0]>} : vector<4x64x16xbf16>, vector<4x16x32xbf16>, vector<4x64x32xf32> -> vector<4x64x32xf32>
    %cst_40 = arith.constant dense<0.000000e+00> : vector<64x32xf32>
    %103 = vector.multi_reduction <add>, %102, %cst_40 [0] : vector<4x64x32xf32> to vector<64x32xf32>
    %104 = vector.broadcast %3 : vector<1x32xf32> to vector<64x32xf32>
    %105 = arith.addf %103, %104 : vector<64x32xf32>
    %cst_41 = arith.constant 0.000000e+00 : f32
    %106 = vector.broadcast %cst_41 : f32 to vector<64x32xf32>
    %107 = arith.maximumf %105, %106 : vector<64x32xf32>
    %cst_42 = arith.constant dense<0.000000e+00> : vector<64xf32>
    %108 = vector.multi_reduction <add>, %107, %cst_42 [1] : vector<64x32xf32> to vector<64xf32>
    %109 = vector.shape_cast %108 : vector<64xf32> to vector<64x1xf32>
    %cst_43 = arith.constant 3.200000e+01 : f32
    %110 = vector.broadcast %cst_43 : f32 to vector<64x1xf32>
    %111 = arith.divf %109, %110 : vector<64x1xf32>
    %112 = vector.broadcast %111 : vector<64x1xf32> to vector<64x32xf32>
    %113 = arith.subf %107, %112 : vector<64x32xf32>
    %114 = arith.mulf %113, %113 : vector<64x32xf32>
    %cst_44 = arith.constant dense<0.000000e+00> : vector<64xf32>
    %115 = vector.multi_reduction <add>, %114, %cst_44 [1] : vector<64x32xf32> to vector<64xf32>
    %116 = vector.shape_cast %115 : vector<64xf32> to vector<64x1xf32>
    %cst_45 = arith.constant 3.200000e+01 : f32
    %117 = vector.broadcast %cst_45 : f32 to vector<64x1xf32>
    %118 = arith.divf %116, %117 : vector<64x1xf32>
    %cst_46 = arith.constant 9.99999974E-6 : f32
    %119 = vector.broadcast %cst_46 : f32 to vector<64x1xf32>
    %120 = arith.addf %118, %119 : vector<64x1xf32>
    %121 = math.rsqrt %120 : vector<64x1xf32>
    %122 = vector.broadcast %121 : vector<64x1xf32> to vector<64x32xf32>
    %123 = arith.mulf %113, %122 : vector<64x32xf32>
    %124 = vector.broadcast %4 : vector<1x32xf32> to vector<64x32xf32>
    %125 = arith.mulf %123, %124 : vector<64x32xf32>
    %126 = vector.broadcast %5 : vector<1x32xf32> to vector<64x32xf32>
    %127 = arith.addf %125, %126 : vector<64x32xf32>
    %128 = vector.shape_cast %127 : vector<64x32xf32> to vector<8x8x32xf32>
    %129 = arith.index_cast %11 : i32 to index
    %c0_47 = arith.constant 0 : index
    %c0_48 = arith.constant 0 : index
    %130 = vector.load %arg11[%129, %c0_47, %c0_48] : memref<8x8x32xf32, #tpu.memory_space<vmem>>, vector<8x8x32xf32>
    tpu.vector_store %arg11[%129, %c0_47, %c0_48], %128 {strides = array<i32>} : memref<8x8x32xf32, #tpu.memory_space<vmem>>, vector<8x8x32xf32>,
    %c1_i32 = arith.constant 1 : i32
    return
  }
  func.func @transform_0(%arg0: i32) -> (i32, i32, i32) {
    %c0_i32 = arith.constant 0 : i32
    %c0_i32_0 = arith.constant 0 : i32
    %c0_i32_1 = arith.constant 0 : i32
    return %arg0, %c0_i32, %c0_i32_0 : i32, i32, i32
  }
  func.func @transform_1(%arg0: i32) -> (i32, i32, i32) {
    %c0_i32 = arith.constant 0 : i32
    %c0_i32_0 = arith.constant 0 : i32
    %c0_i32_1 = arith.constant 0 : i32
    return %arg0, %c0_i32, %c0_i32_0 : i32, i32, i32
  }
  func.func @transform_2(%arg0: i32) -> (i32, i32) {
    %c0_i32 = arith.constant 0 : i32
    %c0_i32_0 = arith.constant 0 : i32
    %c0_i32_1 = arith.constant 0 : i32
    return %c0_i32, %c0_i32_0 : i32, i32
  }
  func.func @transform_3(%arg0: i32) -> (i32, i32) {
    %c0_i32 = arith.constant 0 : i32
    %c0_i32_0 = arith.constant 0 : i32
    %c0_i32_1 = arith.constant 0 : i32
    return %c0_i32, %c0_i32_0 : i32, i32
  }
  func.func @transform_4(%arg0: i32) -> (i32, i32) {
    %c0_i32 = arith.constant 0 : i32
    %c0_i32_0 = arith.constant 0 : i32
    %c0_i32_1 = arith.constant 0 : i32
    return %c0_i32, %c0_i32_0 : i32, i32
  }
  func.func @transform_5(%arg0: i32) -> (i32, i32) {
    %c0_i32 = arith.constant 0 : i32
    %c0_i32_0 = arith.constant 0 : i32
    %c0_i32_1 = arith.constant 0 : i32
    return %c0_i32, %c0_i32_0 : i32, i32
  }
  func.func @transform_6(%arg0: i32) -> (i32, i32) {
    %c0_i32 = arith.constant 0 : i32
    %c0_i32_0 = arith.constant 0 : i32
    %c0_i32_1 = arith.constant 0 : i32
    return %c0_i32, %c0_i32_0 : i32, i32
  }
  func.func @transform_7(%arg0: i32) -> (i32, i32) {
    %c0_i32 = arith.constant 0 : i32
    %c0_i32_0 = arith.constant 0 : i32
    %c0_i32_1 = arith.constant 0 : i32
    return %c0_i32, %c0_i32_0 : i32, i32
  }
  func.func @transform_8(%arg0: i32) -> (i32, i32, i32) {
    %c0_i32 = arith.constant 0 : i32
    %c0_i32_0 = arith.constant 0 : i32
    %c0_i32_1 = arith.constant 0 : i32
    %c0_i32_2 = arith.constant 0 : i32
    return %c0_i32, %c0_i32_0, %c0_i32_1 : i32, i32, i32
  }
  func.func @transform_9(%arg0: i32) -> (i32, i32) {
    %c0_i32 = arith.constant 0 : i32
    %c0_i32_0 = arith.constant 0 : i32
    %c0_i32_1 = arith.constant 0 : i32
    return %c0_i32, %c0_i32_0 : i32, i32
  }
  func.func @transform_10(%arg0: i32) -> (i32, i32, i32) {
    %c0_i32 = arith.constant 0 : i32
    %c0_i32_0 = arith.constant 0 : i32
    %c0_i32_1 = arith.constant 0 : i32
    return %arg0, %c0_i32, %c0_i32_0 : i32, i32, i32
  }
}

</mosaic_0001>

<llo_original>
// kernel: tpu_custom_call.1
$region0: #{tpu_custom_call.1}
  #allocation0 [shape = 'u32[]', space=smem, size = 0x4, offset = 0x4, fixed_abs, tag = 'smem constant byte address 0x4 - core index']
  #allocation1 [shape = 'u32[72,128]{1,0:T(1,128)}', space=vmem, size = 0x9000, scoped, tag = 'internal scratch']
  %s0 = inlined_call_operand.hbm [shape: f32[8,8,32], index: 0, kind: input, shape index: {}]
  %s1 = inlined_call_operand.hbm [shape: f32[8,8,32], index: 1, kind: input, shape index: {}]
  %s2 = inlined_call_operand.hbm [shape: bf16[8,8], index: 2, kind: input, shape index: {}]
  %s3 = inlined_call_operand.hbm [shape: bf16[32,64], index: 3, kind: input, shape index: {}]
  %s4 = inlined_call_operand.hbm [shape: f32[8,64], index: 4, kind: input, shape index: {}]
  %s5 = inlined_call_operand.hbm [shape: bf16[32,64], index: 5, kind: input, shape index: {}]
  %s6 = inlined_call_operand.hbm [shape: bf16[64,64], index: 6, kind: input, shape index: {}]
  %s7 = inlined_call_operand.hbm [shape: bf16[64,128], index: 7, kind: input, shape index: {}]
  %s8 = inlined_call_operand.hbm [shape: bf16[4,16,32], index: 8, kind: input, shape index: {}]
  %s9 = inlined_call_operand.vmem [shape: f32[8,128], index: 9, kind: input, shape index: {}]
  %s10 = inlined_call_operand.hbm [shape: f32[8,8,32], index: 10, kind: output, shape index: {}]
  %s11 = sld [smem:[#allocation0]]
  $region86: #{tpu_custom_call.1} parent=0
    _
  %s13 = ssub.s32 1, %s11
  %s14 = scalar_select 0, %s13, %s11
  $region1: #{tpu_custom_call.1} parent=0
    #allocation2 [shape = 'u8[32768]{0}', space=vmem, size = 0x8000, scoped, tag = 'input window, operand 0, single buffered']
    #allocation3 [shape = 's32[1]{0}', space=sflag, size = 0x4, scoped, tag = 'scoped memory for tpu_custom_call.1']
    #allocation4 [shape = 's32[1]{0}', space=sflag, size = 0x4, scoped, tag = 'scoped memory for tpu_custom_call.1']
    #allocation5 [shape = 'u8[32768]{0}', space=vmem, size = 0x8000, scoped, tag = 'input window, operand 1, single buffered']
    #allocation6 [shape = 's32[1]{0}', space=sflag, size = 0x4, scoped, tag = 'scoped memory for tpu_custom_call.1']
    #allocation7 [shape = 'u8[2048]{0}', space=vmem, size = 0x800, scoped, tag = 'input window, operand 2, single buffered']
    #allocation8 [shape = 'u8[8192]{0}', space=vmem, size = 0x2000, scoped, tag = 'input window, operand 3, single buffered']
    #allocation9 [shape = 's32[1]{0}', space=sflag, size = 0x4, scoped, tag = 'scoped memory for tpu_custom_call.1']
    #allocation10 [shape = 'u8[4096]{0}', space=vmem, size = 0x1000, scoped, tag = 'input window, operand 4, single buffered']
    #allocation11 [shape = 'u8[8192]{0}', space=vmem, size = 0x2000, scoped, tag = 'input window, operand 5, single buffered']
    #allocation12 [shape = 's32[1]{0}', space=sflag, size = 0x4, scoped, tag = 'scoped memory for tpu_custom_call.1']
    #allocation13 [shape = 'u8[16384]{0}', space=vmem, size = 0x4000, scoped, tag = 'input window, operand 6, single buffered']
    #allocation14 [shape = 'u8[16384]{0}', space=vmem, size = 0x4000, scoped, tag = 'input window, operand 7, single buffered']
    #allocation15 [shape = 's32[1]{0}', space=sflag, size = 0x4, scoped, tag = 'scoped memory for tpu_custom_call.1']
    #allocation16 [shape = 'u8[16384]{0}', space=vmem, size = 0x4000, scoped, tag = 'input window, operand 8, single buffered']
    #allocation17 [shape = 'u8[32768]{0}', space=vmem, size = 0x8000, scoped, tag = 'output window, operand 0, single buffered']
    %15 = vsyncpa [#allocation3], 0
    %16 = vsyncpa [#allocation6], 0
    %17 = vsyncpa [#allocation9], 0
    %18 = vsyncpa [#allocation12], 0
    %19 = vsyncpa [#allocation15], 0
    %20 = vsyncpa [#allocation4], 0
    // Predicated region
    $region2: #{tpu_custom_call.1} parent=1 // pred_check
      _
    $region3: #{tpu_custom_call.1} parent=1 // pred_check_branch
      %22 = sbr.rel (0) target = $region5
    $region4: #{tpu_custom_call.1} parent=1 // pred_region
      %24 = vsyncadd [#allocation3], 0
      %s25 = sshll.u32 %s0, 4
      %s26 = int_to_ptr.hbm [resolvable:$true] %s25
      %s27 = sshll.u32 [#allocation2], 4
      %s28 = int_to_ptr.vmem [resolvable:$true] %s27
      %33 = dma.hbm_to_vmem [thread:$0]  %s26, 1024, %s28, [#allocation3], 128, 128, 8
    $region5: #{tpu_custom_call.1} parent=1 // pred_fallthru
      _
    // Predicated region
    $region6: #{tpu_custom_call.1} parent=1 // pred_check
      _
    $region7: #{tpu_custom_call.1} parent=1 // pred_check_branch
      %35 = sbr.rel (0) target = $region9
    $region8: #{tpu_custom_call.1} parent=1 // pred_region
      %37 = vsyncadd [#allocation6], 0
      %s38 = sshll.u32 %s1, 4
      %s39 = int_to_ptr.hbm [resolvable:$true] %s38
      %s40 = sshll.u32 [#allocation5], 4
      %s41 = int_to_ptr.vmem [resolvable:$true] %s40
      %46 = dma.hbm_to_vmem [thread:$0]  %s39, 1024, %s41, [#allocation6], 128, 128, 8
    $region9: #{tpu_custom_call.1} parent=1 // pred_fallthru
      _
    // Predicated region
    $region10: #{tpu_custom_call.1} parent=1 // pred_check
      _
    $region11: #{tpu_custom_call.1} parent=1 // pred_check_branch
      %48 = sbr.rel (0) target = $region13
    $region12: #{tpu_custom_call.1} parent=1 // pred_region
      %50 = vsyncadd [#allocation6], 0
      %s52 = sshll.u32 %s2, 4
      %s53 = int_to_ptr.hbm [resolvable:$true] %s52
      %s54 = sshll.u32 [#allocation7], 4
      %s55 = int_to_ptr.vmem [resolvable:$true] %s54
      %57 = dma.hbm_to_vmem [thread:$0]  %s53, 64, %s55, [#allocation6]
    $region13: #{tpu_custom_call.1} parent=1 // pred_fallthru
      _
    // Predicated region
    $region14: #{tpu_custom_call.1} parent=1 // pred_check
      _
    $region15: #{tpu_custom_call.1} parent=1 // pred_check_branch
      %59 = sbr.rel (0) target = $region17
    $region16: #{tpu_custom_call.1} parent=1 // pred_region
      %61 = vsyncadd [#allocation9], 0
      %s62 = sshll.u32 %s3, 4
      %s63 = int_to_ptr.hbm [resolvable:$true] %s62
      %s64 = sshll.u32 [#allocation8], 4
      %s65 = int_to_ptr.vmem [resolvable:$true] %s64
      %70 = dma.hbm_to_vmem [thread:$0]  %s63, 256, %s65, [#allocation9], 64, 64, 4
    $region17: #{tpu_custom_call.1} parent=1 // pred_fallthru
      _
    // Predicated region
    $region18: #{tpu_custom_call.1} parent=1 // pred_check
      _
    $region19: #{tpu_custom_call.1} parent=1 // pred_check_branch
      %72 = sbr.rel (0) target = $region21
    $region20: #{tpu_custom_call.1} parent=1 // pred_region
      %74 = vsyncadd [#allocation9], 0
      %s76 = sshll.u32 %s4, 4
      %s77 = int_to_ptr.hbm [resolvable:$true] %s76
      %s78 = sshll.u32 [#allocation10], 4
      %s79 = int_to_ptr.vmem [resolvable:$true] %s78
      %81 = dma.hbm_to_vmem [thread:$0]  %s77, 128, %s79, [#allocation9]
    $region21: #{tpu_custom_call.1} parent=1 // pred_fallthru
      _
    // Predicated region
    $region22: #{tpu_custom_call.1} parent=1 // pred_check
      _
    $region23: #{tpu_custom_call.1} parent=1 // pred_check_branch
      %83 = sbr.rel (0) target = $region25
    $region24: #{tpu_custom_call.1} parent=1 // pred_region
      %85 = vsyncadd [#allocation12], 0
      %s86 = sshll.u32 %s5, 4
      %s87 = int_to_ptr.hbm [resolvable:$true] %s86
      %s88 = sshll.u32 [#allocation11], 4
      %s89 = int_to_ptr.vmem [resolvable:$true] %s88
      %94 = dma.hbm_to_vmem [thread:$0]  %s87, 256, %s89, [#allocation12], 64, 64, 4
    $region25: #{tpu_custom_call.1} parent=1 // pred_fallthru
      _
    // Predicated region
    $region26: #{tpu_custom_call.1} parent=1 // pred_check
      _
    $region27: #{tpu_custom_call.1} parent=1 // pred_check_branch
      %96 = sbr.rel (0) target = $region29
    $region28: #{tpu_custom_call.1} parent=1 // pred_region
      %98 = vsyncadd [#allocation12], 0
      %s99 = sshll.u32 %s6, 4
      %s100 = int_to_ptr.hbm [resolvable:$true] %s99
      %s101 = sshll.u32 [#allocation13], 4
      %s102 = int_to_ptr.vmem [resolvable:$true] %s101
      %107 = dma.hbm_to_vmem [thread:$0]  %s100, 512, %s102, [#allocation12], 64, 64, 4
    $region29: #{tpu_custom_call.1} parent=1 // pred_fallthru
      _
    // Predicated region
    $region30: #{tpu_custom_call.1} parent=1 // pred_check
      _
    $region31: #{tpu_custom_call.1} parent=1 // pred_check_branch
      %109 = sbr.rel (0) target = $region33
    $region32: #{tpu_custom_call.1} parent=1 // pred_region
      %111 = vsyncadd [#allocation15], 0
      %s112 = sshll.u32 %s7, 4
      %s113 = int_to_ptr.hbm [resolvable:$true] %s112
      %s114 = sshll.u32 [#allocation14], 4
      %s115 = int_to_ptr.vmem [resolvable:$true] %s114
      %120 = dma.hbm_to_vmem [thread:$0]  %s113, 512, %s115, [#allocation15], 64, 64, 4
    $region33: #{tpu_custom_call.1} parent=1 // pred_fallthru
      _
    // Predicated region
    $region34: #{tpu_custom_call.1} parent=1 // pred_check
      _
    $region35: #{tpu_custom_call.1} parent=1 // pred_check_branch
      %122 = sbr.rel (0) target = $region37
    $region36: #{tpu_custom_call.1} parent=1 // pred_region
      %124 = vsyncadd [#allocation15], 0
      %s125 = sshll.u32 %s8, 4
      %s126 = int_to_ptr.hbm [resolvable:$true] %s125
      %s127 = sshll.u32 [#allocation16], 4
      %s128 = int_to_ptr.vmem [resolvable:$true] %s127
      %133 = dma.hbm_to_vmem [thread:$0]  %s126, 512, %s128, [#allocation15], 64, 64, 4
    $region37: #{tpu_custom_call.1} parent=1 // pred_fallthru
      _
    // Predicated region
    $region38: #{tpu_custom_call.1} parent=1 // pred_check
      _
    $region39: #{tpu_custom_call.1} parent=1 // pred_check_branch
      %135 = sbr.rel (0) target = $region41
    $region40: #{tpu_custom_call.1} parent=1 // pred_region
      _
    $region41: #{tpu_custom_call.1} parent=1 // pred_fallthru
      _
    // Predicated region
    $region42: #{tpu_custom_call.1} parent=1 // pred_check
      _
    $region43: #{tpu_custom_call.1} parent=1 // pred_check_branch
      %137 = sbr.rel (0) target = $region45
    $region44: #{tpu_custom_call.1} parent=1 // pred_region
      %139 = dma.done [#allocation3], 1024
    $region45: #{tpu_custom_call.1} parent=1 // pred_fallthru
      _
    // Predicated region
    $region46: #{tpu_custom_call.1} parent=1 // pred_check
      _
    $region47: #{tpu_custom_call.1} parent=1 // pred_check_branch
      %141 = sbr.rel (0) target = $region49
    $region48: #{tpu_custom_call.1} parent=1 // pred_region
      %143 = dma.done [#allocation6], 1024
    $region49: #{tpu_custom_call.1} parent=1 // pred_fallthru
      _
    // Predicated region
    $region50: #{tpu_custom_call.1} parent=1 // pred_check
      _
    $region51: #{tpu_custom_call.1} parent=1 // pred_check_branch
      %145 = sbr.rel (0) target = $region53
    $region52: #{tpu_custom_call.1} parent=1 // pred_region
      %147 = dma.done [#allocation6], 64
    $region53: #{tpu_custom_call.1} parent=1 // pred_fallthru
      _
    // Predicated region
    $region54: #{tpu_custom_call.1} parent=1 // pred_check
      _
    $region55: #{tpu_custom_call.1} parent=1 // pred_check_branch
      %149 = sbr.rel (0) target = $region57
    $region56: #{tpu_custom_call.1} parent=1 // pred_region
      %151 = dma.done [#allocation9], 256
    $region57: #{tpu_custom_call.1} parent=1 // pred_fallthru
      _
    // Predicated region
    $region58: #{tpu_custom_call.1} parent=1 // pred_check
      _
    $region59: #{tpu_custom_call.1} parent=1 // pred_check_branch
      %153 = sbr.rel (0) target = $region61
    $region60: #{tpu_custom_call.1} parent=1 // pred_region
      %155 = dma.done [#allocation9], 128
    $region61: #{tpu_custom_call.1} parent=1 // pred_fallthru
      _
    // Predicated region
    $region62: #{tpu_custom_call.1} parent=1 // pred_check
      _
    $region63: #{tpu_custom_call.1} parent=1 // pred_check_branch
      %157 = sbr.rel (0) target = $region65
    $region64: #{tpu_custom_call.1} parent=1 // pred_region
      %159 = dma.done [#allocation12], 256
    $region65: #{tpu_custom_call.1} parent=1 // pred_fallthru
      _
    // Predicated region
    $region66: #{tpu_custom_call.1} parent=1 // pred_check
      _
    $region67: #{tpu_custom_call.1} parent=1 // pred_check_branch
      %161 = sbr.rel (0) target = $region69
    $region68: #{tpu_custom_call.1} parent=1 // pred_region
      %163 = dma.done [#allocation12], 512
    $region69: #{tpu_custom_call.1} parent=1 // pred_fallthru
      _
    // Predicated region
    $region70: #{tpu_custom_call.1} parent=1 // pred_check
      _
    $region71: #{tpu_custom_call.1} parent=1 // pred_check_branch
      %165 = sbr.rel (0) target = $region73
    $region72: #{tpu_custom_call.1} parent=1 // pred_region
      %167 = dma.done [#allocation15], 512
    $region73: #{tpu_custom_call.1} parent=1 // pred_fallthru
      _
    // Predicated region
    $region74: #{tpu_custom_call.1} parent=1 // pred_check
      _
    $region75: #{tpu_custom_call.1} parent=1 // pred_check_branch
      %169 = sbr.rel (0) target = $region77
    $region76: #{tpu_custom_call.1} parent=1 // pred_region
      %171 = dma.done [#allocation15], 512
    $region77: #{tpu_custom_call.1} parent=1 // pred_fallthru
      _
    %v173 = vld [vmem:[%s9] sm:$0x1]
    %v174 = vld [vmem:[%s9 + $0x1] sm:$0x1]
    %v175 = vld [vmem:[%s9 + $0x2] sm:$0x1]
    %v176 = vld [vmem:[%s9 + $0x3] sm:$0x1]
    %v177 = vld [vmem:[%s9 + $0x4] sm:$0x1]
    %v178 = vld [vmem:[%s9 + $0x5] sm:$0x1]
    %v179 = vld [vmem:[#allocation10] sm:$0xff]
    %v180 = vld [vmem:[#allocation7] sm:$0xf]
    %s181 = smul.u32 0, 8
    %s182 = scalar_lea.vmem [#allocation2], %s181
    %v183 = vld [vmem:[%s182] sm:$0xff]
    %v184 = vld [vmem:[%s182 + $0x8] sm:$0xff]
    %v185 = vld [vmem:[%s182 + $0x10] sm:$0xff]
    %v186 = vld [vmem:[%s182 + $0x18] sm:$0xff]
    %v187 = vld [vmem:[%s182 + $0x20] sm:$0xff]
    %v188 = vld [vmem:[%s182 + $0x28] sm:$0xff]
    %v189 = vld [vmem:[%s182 + $0x30] sm:$0xff]
    %v190 = vld [vmem:[%s182 + $0x38] sm:$0xff]
    %s191 = scalar_lea.vmem [#allocation5], %s181
    %v192 = vld [vmem:[%s191] sm:$0xff]
    %v193 = vld [vmem:[%s191 + $0x8] sm:$0xff]
    %v194 = vld [vmem:[%s191 + $0x10] sm:$0xff]
    %v195 = vld [vmem:[%s191 + $0x18] sm:$0xff]
    %v196 = vld [vmem:[%s191 + $0x20] sm:$0xff]
    %v197 = vld [vmem:[%s191 + $0x28] sm:$0xff]
    %v198 = vld [vmem:[%s191 + $0x30] sm:$0xff]
    %v199 = vld [vmem:[%s191 + $0x38] sm:$0xff]
    %v200 = vpack.c.bf16 %v192, %v192
    %v201 = vpack.c.bf16 %v193, %v193
    %v202 = vpack.c.bf16 %v194, %v194
    %v203 = vpack.c.bf16 %v195, %v195
    %v204 = vpack.c.bf16 %v196, %v196
    %v205 = vpack.c.bf16 %v197, %v197
    %v206 = vpack.c.bf16 %v198, %v198
    %v207 = vpack.c.bf16 %v199, %v199
    %vm208 = vcmask 64512
    %v210 = vsel %vm208, %v180, 0
    %vm212 = vcmask 1043456
    %v214 = vsel %vm212, %v200, 0
    %216 = vmatpush.bf16.msra.mxu0 0
    %217 = vmatpush.bf16.msra.mxu0 0
    %218 = vmatpush.bf16.msra.mxu0 0
    %219 = vmatpush.bf16.msra.mxu0 0
    %220 = vmatpush.bf16.msra.mxu0 0
    %221 = vmatpush.bf16.msra.mxu0 0
    %222 = vmatpush.bf16.msra.mxu0 0
    %223 = vmatpush.bf16.msra.mxu0 %v214
    %224 = vmatmul.bf16.gmra.mxu0 %v210
    %v225 = vpop.f32.mrf.mxu0
    %v226 = vadd.f32 0.0, %v225
    %v227 = vpop.f32.mrf.mxu0
    %228 = vdwg.mxu0
    %v230 = vsel %vm212, %v201, 0
    %232 = vmatpush.bf16.msra.mxu0 0
    %233 = vmatpush.bf16.msra.mxu0 0
    %234 = vmatpush.bf16.msra.mxu0 0
    %235 = vmatpush.bf16.msra.mxu0 0
    %236 = vmatpush.bf16.msra.mxu0 0
    %237 = vmatpush.bf16.msra.mxu0 0
    %238 = vmatpush.bf16.msra.mxu0 0
    %239 = vmatpush.bf16.msra.mxu0 %v230
    %240 = vmatmul.bf16.gmra.mxu0 %v210
    %v241 = vpop.f32.mrf.mxu0
    %v242 = vadd.f32 0.0, %v241
    %v243 = vpop.f32.mrf.mxu0
    %244 = vdwg.mxu0
    %v246 = vsel %vm212, %v202, 0
    %248 = vmatpush.bf16.msra.mxu0 0
    %249 = vmatpush.bf16.msra.mxu0 0
    %250 = vmatpush.bf16.msra.mxu0 0
    %251 = vmatpush.bf16.msra.mxu0 0
    %252 = vmatpush.bf16.msra.mxu0 0
    %253 = vmatpush.bf16.msra.mxu0 0
    %254 = vmatpush.bf16.msra.mxu0 0
    %255 = vmatpush.bf16.msra.mxu0 %v246
    %256 = vmatmul.bf16.gmra.mxu0 %v210
    %v257 = vpop.f32.mrf.mxu0
    %v258 = vadd.f32 0.0, %v257
    %v259 = vpop.f32.mrf.mxu0
    %260 = vdwg.mxu0
    %v262 = vsel %vm212, %v203, 0
    %264 = vmatpush.bf16.msra.mxu0 0
    %265 = vmatpush.bf16.msra.mxu0 0
    %266 = vmatpush.bf16.msra.mxu0 0
    %267 = vmatpush.bf16.msra.mxu0 0
    %268 = vmatpush.bf16.msra.mxu0 0
    %269 = vmatpush.bf16.msra.mxu0 0
    %270 = vmatpush.bf16.msra.mxu0 0
    %271 = vmatpush.bf16.msra.mxu0 %v262
    %272 = vmatmul.bf16.gmra.mxu0 %v210
    %v273 = vpop.f32.mrf.mxu0
    %v274 = vadd.f32 0.0, %v273
    %v275 = vpop.f32.mrf.mxu0
    %276 = vdwg.mxu0
    %v278 = vsel %vm212, %v204, 0
    %280 = vmatpush.bf16.msra.mxu0 0
    %281 = vmatpush.bf16.msra.mxu0 0
    %282 = vmatpush.bf16.msra.mxu0 0
    %283 = vmatpush.bf16.msra.mxu0 0
    %284 = vmatpush.bf16.msra.mxu0 0
    %285 = vmatpush.bf16.msra.mxu0 0
    %286 = vmatpush.bf16.msra.mxu0 0
    %287 = vmatpush.bf16.msra.mxu0 %v278
    %288 = vmatmul.bf16.gmra.mxu0 %v210
    %v289 = vpop.f32.mrf.mxu0
    %v290 = vadd.f32 0.0, %v289
    %v291 = vpop.f32.mrf.mxu0
    %292 = vdwg.mxu0
    %v294 = vsel %vm212, %v205, 0
    %296 = vmatpush.bf16.msra.mxu0 0
    %297 = vmatpush.bf16.msra.mxu0 0
    %298 = vmatpush.bf16.msra.mxu0 0
    %299 = vmatpush.bf16.msra.mxu0 0
    %300 = vmatpush.bf16.msra.mxu0 0
    %301 = vmatpush.bf16.msra.mxu0 0
    %302 = vmatpush.bf16.msra.mxu0 0
    %303 = vmatpush.bf16.msra.mxu0 %v294
    %304 = vmatmul.bf16.gmra.mxu0 %v210
    %v305 = vpop.f32.mrf.mxu0
    %v306 = vadd.f32 0.0, %v305
    %v307 = vpop.f32.mrf.mxu0
    %308 = vdwg.mxu0
    %v310 = vsel %vm212, %v206, 0
    %312 = vmatpush.bf16.msra.mxu0 0
    %313 = vmatpush.bf16.msra.mxu0 0
    %314 = vmatpush.bf16.msra.mxu0 0
    %315 = vmatpush.bf16.msra.mxu0 0
    %316 = vmatpush.bf16.msra.mxu0 0
    %317 = vmatpush.bf16.msra.mxu0 0
    %318 = vmatpush.bf16.msra.mxu0 0
    %319 = vmatpush.bf16.msra.mxu0 %v310
    %320 = vmatmul.bf16.gmra.mxu0 %v210
    %v321 = vpop.f32.mrf.mxu0
    %v322 = vadd.f32 0.0, %v321
    %v323 = vpop.f32.mrf.mxu0
    %324 = vdwg.mxu0
    %v326 = vsel %vm212, %v207, 0
    %328 = vmatpush.bf16.msra.mxu0 0
    %329 = vmatpush.bf16.msra.mxu0 0
    %330 = vmatpush.bf16.msra.mxu0 0
    %331 = vmatpush.bf16.msra.mxu0 0
    %332 = vmatpush.bf16.msra.mxu0 0
    %333 = vmatpush.bf16.msra.mxu0 0
    %334 = vmatpush.bf16.msra.mxu0 0
    %335 = vmatpush.bf16.msra.mxu0 %v326
    %336 = vmatmul.bf16.gmra.mxu0 %v210
    %v337 = vpop.f32.mrf.mxu0
    %v338 = vadd.f32 0.0, %v337
    %v339 = vpop.f32.mrf.mxu0
    %340 = vdwg.mxu0
    %v341 = vpack.c.bf16 %v242, %v226
    %v342 = vpack.c.bf16 %v274, %v258
    %v343 = vpack.c.bf16 %v306, %v290
    %v344 = vpack.c.bf16 %v338, %v322
    %v345 = vld [vmem:[#allocation8] sm:$0xf]
    %v346 = vld [vmem:[#allocation8 + $0x4] sm:$0xf]
    %v347 = vld [vmem:[#allocation8 + $0x8] sm:$0xf]
    %v348 = vld [vmem:[#allocation8 + $0xc] sm:$0xf]
    %v353 = vunpack.c.l.b16 %v345
    %v354 = vunpack.c.l.b16 %v346
    %v355 = vunpack.c.l.b16 %v347
    %v356 = vunpack.c.l.b16 %v348
    %v357 = vpack.c.b16 %v354, %v353
    %v358 = vpack.c.b16 %v356, %v355
    %vm361 = vcmask 261120
    %v363 = vsel %vm361, %v341, 0
    %v366 = vsel %vm361, %v342, 0
    %v369 = vsel %vm361, %v343, 0
    %v372 = vsel %vm361, %v344, 0
    %374 = vmatpush.bf16.msra.mxu0 0
    %375 = vmatpush.bf16.msra.mxu0 0
    %376 = vmatpush.bf16.msra.mxu0 0
    %377 = vmatpush.bf16.msra.mxu0 0
    %378 = vmatpush.bf16.msra.mxu0 0
    %379 = vmatpush.bf16.msra.mxu0 0
    %380 = vmatpush.bf16.msra.mxu0 %v358
    %381 = vmatpush.bf16.msra.mxu0 %v357
    %382 = vmatmul.bf16.gmra.mxu0 %v363
    %v383 = vpop.f32.mrf.mxu0
    %v384 = vadd.f32 0.0, %v383
    %v385 = vpop.f32.mrf.mxu0
    %v386 = vadd.f32 0.0, %v385
    %387 = vmatmul.bf16.gmra.mxu0 %v366
    %v388 = vpop.f32.mrf.mxu0
    %v389 = vadd.f32 0.0, %v388
    %v390 = vpop.f32.mrf.mxu0
    %v391 = vadd.f32 0.0, %v390
    %392 = vmatmul.bf16.gmra.mxu0 %v369
    %v393 = vpop.f32.mrf.mxu0
    %v394 = vadd.f32 0.0, %v393
    %v395 = vpop.f32.mrf.mxu0
    %v396 = vadd.f32 0.0, %v395
    %397 = vmatmul.bf16.gmra.mxu0 %v372
    %v398 = vpop.f32.mrf.mxu0
    %v399 = vadd.f32 0.0, %v398
    %v400 = vpop.f32.mrf.mxu0
    %v401 = vadd.f32 0.0, %v400
    %402 = vdwg.mxu0
    %v403 = vadd.f32 %v384, %v179
    %v404 = vadd.f32 %v386, %v179
    %v405 = vadd.f32 %v389, %v179
    %v406 = vadd.f32 %v391, %v179
    %v407 = vadd.f32 %v394, %v179
    %v408 = vadd.f32 %v396, %v179
    %v409 = vadd.f32 %v399, %v179
    %v410 = vadd.f32 %v401, %v179
    %v411 = vpack.c.bf16 %v184, %v183
    %v412 = vpack.c.bf16 %v186, %v185
    %v413 = vpack.c.bf16 %v188, %v187
    %v414 = vpack.c.bf16 %v190, %v189
    %v415 = vld [vmem:[#allocation11] sm:$0xf]
    %v416 = vld [vmem:[#allocation11 + $0x4] sm:$0xf]
    %v417 = vld [vmem:[#allocation11 + $0x8] sm:$0xf]
    %v418 = vld [vmem:[#allocation11 + $0xc] sm:$0xf]
    %v419 = vperm.slane %v173, 0
    %v424 = vunpack.c.l.b16 %v415
    %v425 = vunpack.c.l.b16 %v416
    %v426 = vunpack.c.l.b16 %v417
    %v427 = vunpack.c.l.b16 %v418
    %v428 = vpack.c.b16 %v425, %v424
    %v429 = vpack.c.b16 %v427, %v426
    %v433 = vsel %vm361, %v411, 0
    %v436 = vsel %vm361, %v412, 0
    %v439 = vsel %vm361, %v413, 0
    %v442 = vsel %vm361, %v414, 0
    %444 = vmatpush.bf16.msra.mxu0 0
    %445 = vmatpush.bf16.msra.mxu0 0
    %446 = vmatpush.bf16.msra.mxu0 0
    %447 = vmatpush.bf16.msra.mxu0 0
    %448 = vmatpush.bf16.msra.mxu0 0
    %449 = vmatpush.bf16.msra.mxu0 0
    %450 = vmatpush.bf16.msra.mxu0 %v429
    %451 = vmatpush.bf16.msra.mxu0 %v428
    %452 = vmatmul.bf16.gmra.mxu0 %v433
    %v453 = vpop.f32.mrf.mxu0
    %v454 = vadd.f32 %v419, %v453
    %v455 = vpop.f32.mrf.mxu0
    %v456 = vadd.f32 %v419, %v455
    %457 = vmatmul.bf16.gmra.mxu0 %v436
    %v458 = vpop.f32.mrf.mxu0
    %v459 = vadd.f32 %v419, %v458
    %v460 = vpop.f32.mrf.mxu0
    %v461 = vadd.f32 %v419, %v460
    %462 = vmatmul.bf16.gmra.mxu0 %v439
    %v463 = vpop.f32.mrf.mxu0
    %v464 = vadd.f32 %v419, %v463
    %v465 = vpop.f32.mrf.mxu0
    %v466 = vadd.f32 %v419, %v465
    %467 = vmatmul.bf16.gmra.mxu0 %v442
    %v468 = vpop.f32.mrf.mxu0
    %v469 = vadd.f32 %v419, %v468
    %v470 = vpop.f32.mrf.mxu0
    %v471 = vadd.f32 %v419, %v470
    %472 = vdwg.mxu0
    %v473 = vmax.f32 %v454, 0.0
    %v474 = vmax.f32 %v456, 0.0
    %v475 = vmax.f32 %v459, 0.0
    %v476 = vmax.f32 %v461, 0.0
    %v477 = vmax.f32 %v464, 0.0
    %v478 = vmax.f32 %v466, 0.0
    %v479 = vmax.f32 %v469, 0.0
    %v480 = vmax.f32 %v471, 0.0
    %v481 = vpack.c.bf16 %v403, %v403
    %v482 = vpack.c.bf16 %v404, %v404
    %v483 = vpack.c.bf16 %v405, %v405
    %v484 = vpack.c.bf16 %v406, %v406
    %v485 = vpack.c.bf16 %v407, %v407
    %v486 = vpack.c.bf16 %v408, %v408
    %v487 = vpack.c.bf16 %v409, %v409
    %v488 = vpack.c.bf16 %v410, %v410
    %v489 = vpack.c.bf16 %v473, %v473
    %v490 = vpack.c.bf16 %v474, %v474
    %v491 = vpack.c.bf16 %v475, %v475
    %v492 = vpack.c.bf16 %v476, %v476
    %v493 = vpack.c.bf16 %v477, %v477
    %v494 = vpack.c.bf16 %v478, %v478
    %v495 = vpack.c.bf16 %v479, %v479
    %v496 = vpack.c.bf16 %v480, %v480
    %v497 = vunpack.c.l.bf16 %v481
    %v498 = vunpack.c.l.bf16 %v482
    %v499 = vunpack.c.l.bf16 %v483
    %v500 = vunpack.c.l.bf16 %v484
    %v501 = vunpack.c.l.bf16 %v485
    %v502 = vunpack.c.l.bf16 %v486
    %v503 = vunpack.c.l.bf16 %v487
    %v504 = vunpack.c.l.bf16 %v488
    %v505 = vunpack.c.l.bf16 %v489
    %v506 = vunpack.c.l.bf16 %v490
    %v507 = vunpack.c.l.bf16 %v491
    %v508 = vunpack.c.l.bf16 %v492
    %v509 = vunpack.c.l.bf16 %v493
    %v510 = vunpack.c.l.bf16 %v494
    %v511 = vunpack.c.l.bf16 %v495
    %v512 = vunpack.c.l.bf16 %v496
    %v513 = vmul.f32 %v497, 0.125
    %v514 = vmul.f32 %v498, 0.125
    %v515 = vmul.f32 %v499, 0.125
    %v516 = vmul.f32 %v500, 0.125
    %v517 = vmul.f32 %v501, 0.125
    %v518 = vmul.f32 %v502, 0.125
    %v519 = vmul.f32 %v503, 0.125
    %v520 = vmul.f32 %v504, 0.125
    %v521 = vmul.f32 %v505, 0.125
    %v522 = vmul.f32 %v506, 0.125
    %v523 = vmul.f32 %v507, 0.125
    %v524 = vmul.f32 %v508, 0.125
    %v525 = vmul.f32 %v509, 0.125
    %v526 = vmul.f32 %v510, 0.125
    %v527 = vmul.f32 %v511, 0.125
    %v528 = vmul.f32 %v512, 0.125
    %v529 = vpack.c.bf16 %v513, %v513
    %v530 = vpack.c.bf16 %v514, %v514
    %v531 = vpack.c.bf16 %v515, %v515
    %v532 = vpack.c.bf16 %v516, %v516
    %v533 = vpack.c.bf16 %v517, %v517
    %v534 = vpack.c.bf16 %v518, %v518
    %v535 = vpack.c.bf16 %v519, %v519
    %v536 = vpack.c.bf16 %v520, %v520
    %v537 = vpack.c.bf16 %v521, %v521
    %v538 = vpack.c.bf16 %v522, %v522
    %v539 = vpack.c.bf16 %v523, %v523
    %v540 = vpack.c.bf16 %v524, %v524
    %v541 = vpack.c.bf16 %v525, %v525
    %v542 = vpack.c.bf16 %v526, %v526
    %v543 = vpack.c.bf16 %v527, %v527
    %v544 = vpack.c.bf16 %v528, %v528
    %vm545 = vcmask 523264
    %v547 = vsel %vm545, %v529, 0
    %v550 = vsel %vm545, %v481, 0
    %552 = vmatpush.bf16.xpose.msra.mxu0 0
    %553 = vmatpush.bf16.xpose.msra.mxu0 0
    %554 = vmatpush.bf16.xpose.msra.mxu0 0
    %555 = vmatpush.bf16.xpose.msra.mxu0 0
    %556 = vmatpush.bf16.xpose.msra.mxu0 0
    %557 = vmatpush.bf16.xpose.msra.mxu0 0
    %558 = vmatpush.bf16.xpose.msra.mxu0 0
    %559 = vmatpush.bf16.xpose.msra.mxu0 %v550
    %560 = vmatmul.bf16.gmra.mxu0 %v547
    %v561 = vpop.f32.mrf.mxu0
    %v562 = vadd.f32 0.0, %v561
    %v563 = vpop.f32.mrf.mxu0
    %564 = vdwg.mxu0
    %v566 = vsel %vm545, %v530, 0
    %v569 = vsel %vm545, %v482, 0
    %571 = vmatpush.bf16.xpose.msra.mxu0 0
    %572 = vmatpush.bf16.xpose.msra.mxu0 0
    %573 = vmatpush.bf16.xpose.msra.mxu0 0
    %574 = vmatpush.bf16.xpose.msra.mxu0 0
    %575 = vmatpush.bf16.xpose.msra.mxu0 0
    %576 = vmatpush.bf16.xpose.msra.mxu0 0
    %577 = vmatpush.bf16.xpose.msra.mxu0 0
    %578 = vmatpush.bf16.xpose.msra.mxu0 %v569
    %579 = vmatmul.bf16.gmra.mxu0 %v566
    %v580 = vpop.f32.mrf.mxu0
    %v581 = vadd.f32 0.0, %v580
    %v582 = vpop.f32.mrf.mxu0
    %583 = vdwg.mxu0
    %v585 = vsel %vm545, %v531, 0
    %v588 = vsel %vm545, %v483, 0
    %590 = vmatpush.bf16.xpose.msra.mxu0 0
    %591 = vmatpush.bf16.xpose.msra.mxu0 0
    %592 = vmatpush.bf16.xpose.msra.mxu0 0
    %593 = vmatpush.bf16.xpose.msra.mxu0 0
    %594 = vmatpush.bf16.xpose.msra.mxu0 0
    %595 = vmatpush.bf16.xpose.msra.mxu0 0
    %596 = vmatpush.bf16.xpose.msra.mxu0 0
    %597 = vmatpush.bf16.xpose.msra.mxu0 %v588
    %598 = vmatmul.bf16.gmra.mxu0 %v585
    %v599 = vpop.f32.mrf.mxu0
    %v600 = vadd.f32 0.0, %v599
    %v601 = vpop.f32.mrf.mxu0
    %602 = vdwg.mxu0
    %v604 = vsel %vm545, %v532, 0
    %v607 = vsel %vm545, %v484, 0
    %609 = vmatpush.bf16.xpose.msra.mxu0 0
    %610 = vmatpush.bf16.xpose.msra.mxu0 0
    %611 = vmatpush.bf16.xpose.msra.mxu0 0
    %612 = vmatpush.bf16.xpose.msra.mxu0 0
    %613 = vmatpush.bf16.xpose.msra.mxu0 0
    %614 = vmatpush.bf16.xpose.msra.mxu0 0
    %615 = vmatpush.bf16.xpose.msra.mxu0 0
    %616 = vmatpush.bf16.xpose.msra.mxu0 %v607
    %617 = vmatmul.bf16.gmra.mxu0 %v604
    %v618 = vpop.f32.mrf.mxu0
    %v619 = vadd.f32 0.0, %v618
    %v620 = vpop.f32.mrf.mxu0
    %621 = vdwg.mxu0
    %v623 = vsel %vm545, %v533, 0
    %v626 = vsel %vm545, %v485, 0
    %628 = vmatpush.bf16.xpose.msra.mxu0 0
    %629 = vmatpush.bf16.xpose.msra.mxu0 0
    %630 = vmatpush.bf16.xpose.msra.mxu0 0
    %631 = vmatpush.bf16.xpose.msra.mxu0 0
    %632 = vmatpush.bf16.xpose.msra.mxu0 0
    %633 = vmatpush.bf16.xpose.msra.mxu0 0
    %634 = vmatpush.bf16.xpose.msra.mxu0 0
    %635 = vmatpush.bf16.xpose.msra.mxu0 %v626
    %636 = vmatmul.bf16.gmra.mxu0 %v623
    %v637 = vpop.f32.mrf.mxu0
    %v638 = vadd.f32 0.0, %v637
    %v639 = vpop.f32.mrf.mxu0
    %640 = vdwg.mxu0
    %v642 = vsel %vm545, %v534, 0
    %v645 = vsel %vm545, %v486, 0
    %647 = vmatpush.bf16.xpose.msra.mxu0 0
    %648 = vmatpush.bf16.xpose.msra.mxu0 0
    %649 = vmatpush.bf16.xpose.msra.mxu0 0
    %650 = vmatpush.bf16.xpose.msra.mxu0 0
    %651 = vmatpush.bf16.xpose.msra.mxu0 0
    %652 = vmatpush.bf16.xpose.msra.mxu0 0
    %653 = vmatpush.bf16.xpose.msra.mxu0 0
    %654 = vmatpush.bf16.xpose.msra.mxu0 %v645
    %655 = vmatmul.bf16.gmra.mxu0 %v642
    %v656 = vpop.f32.mrf.mxu0
    %v657 = vadd.f32 0.0, %v656
    %v658 = vpop.f32.mrf.mxu0
    %659 = vdwg.mxu0
    %v661 = vsel %vm545, %v535, 0
    %v664 = vsel %vm545, %v487, 0
    %666 = vmatpush.bf16.xpose.msra.mxu0 0
    %667 = vmatpush.bf16.xpose.msra.mxu0 0
    %668 = vmatpush.bf16.xpose.msra.mxu0 0
    %669 = vmatpush.bf16.xpose.msra.mxu0 0
    %670 = vmatpush.bf16.xpose.msra.mxu0 0
    %671 = vmatpush.bf16.xpose.msra.mxu0 0
    %672 = vmatpush.bf16.xpose.msra.mxu0 0
    %673 = vmatpush.bf16.xpose.msra.mxu0 %v664
    %674 = vmatmul.bf16.gmra.mxu0 %v661
    %v675 = vpop.f32.mrf.mxu0
    %v676 = vadd.f32 0.0, %v675
    %v677 = vpop.f32.mrf.mxu0
    %678 = vdwg.mxu0
    %v680 = vsel %vm545, %v536, 0
    %v683 = vsel %vm545, %v488, 0
    %685 = vmatpush.bf16.xpose.msra.mxu0 0
    %686 = vmatpush.bf16.xpose.msra.mxu0 0
    %687 = vmatpush.bf16.xpose.msra.mxu0 0
    %688 = vmatpush.bf16.xpose.msra.mxu0 0
    %689 = vmatpush.bf16.xpose.msra.mxu0 0
    %690 = vmatpush.bf16.xpose.msra.mxu0 0
    %691 = vmatpush.bf16.xpose.msra.mxu0 0
    %692 = vmatpush.bf16.xpose.msra.mxu0 %v683
    %693 = vmatmul.bf16.gmra.mxu0 %v680
    %v694 = vpop.f32.mrf.mxu0
    %v695 = vadd.f32 0.0, %v694
    %v696 = vpop.f32.mrf.mxu0
    %697 = vdwg.mxu0
    %v699 = vsel %vm545, %v537, 0
    %v702 = vsel %vm545, %v489, 0
    %704 = vmatpush.bf16.xpose.msra.mxu0 0
    %705 = vmatpush.bf16.xpose.msra.mxu0 0
    %706 = vmatpush.bf16.xpose.msra.mxu0 0
    %707 = vmatpush.bf16.xpose.msra.mxu0 0
    %708 = vmatpush.bf16.xpose.msra.mxu0 0
    %709 = vmatpush.bf16.xpose.msra.mxu0 0
    %710 = vmatpush.bf16.xpose.msra.mxu0 0
    %711 = vmatpush.bf16.xpose.msra.mxu0 %v702
    %712 = vmatmul.bf16.gmra.mxu0 %v699
    %v713 = vpop.f32.mrf.mxu0
    %v714 = vadd.f32 0.0, %v713
    %v715 = vpop.f32.mrf.mxu0
    %716 = vdwg.mxu0
    %v718 = vsel %vm545, %v538, 0
    %v721 = vsel %vm545, %v490, 0
    %723 = vmatpush.bf16.xpose.msra.mxu0 0
    %724 = vmatpush.bf16.xpose.msra.mxu0 0
    %725 = vmatpush.bf16.xpose.msra.mxu0 0
    %726 = vmatpush.bf16.xpose.msra.mxu0 0
    %727 = vmatpush.bf16.xpose.msra.mxu0 0
    %728 = vmatpush.bf16.xpose.msra.mxu0 0
    %729 = vmatpush.bf16.xpose.msra.mxu0 0
    %730 = vmatpush.bf16.xpose.msra.mxu0 %v721
    %731 = vmatmul.bf16.gmra.mxu0 %v718
    %v732 = vpop.f32.mrf.mxu0
    %v733 = vadd.f32 0.0, %v732
    %v734 = vpop.f32.mrf.mxu0
    %735 = vdwg.mxu0
    %v737 = vsel %vm545, %v539, 0
    %v740 = vsel %vm545, %v491, 0
    %742 = vmatpush.bf16.xpose.msra.mxu0 0
    %743 = vmatpush.bf16.xpose.msra.mxu0 0
    %744 = vmatpush.bf16.xpose.msra.mxu0 0
    %745 = vmatpush.bf16.xpose.msra.mxu0 0
    %746 = vmatpush.bf16.xpose.msra.mxu0 0
    %747 = vmatpush.bf16.xpose.msra.mxu0 0
    %748 = vmatpush.bf16.xpose.msra.mxu0 0
    %749 = vmatpush.bf16.xpose.msra.mxu0 %v740
    %750 = vmatmul.bf16.gmra.mxu0 %v737
    %v751 = vpop.f32.mrf.mxu0
    %v752 = vadd.f32 0.0, %v751
    %v753 = vpop.f32.mrf.mxu0
    %754 = vdwg.mxu0
    %v756 = vsel %vm545, %v540, 0
    %v759 = vsel %vm545, %v492, 0
    %761 = vmatpush.bf16.xpose.msra.mxu0 0
    %762 = vmatpush.bf16.xpose.msra.mxu0 0
    %763 = vmatpush.bf16.xpose.msra.mxu0 0
    %764 = vmatpush.bf16.xpose.msra.mxu0 0
    %765 = vmatpush.bf16.xpose.msra.mxu0 0
    %766 = vmatpush.bf16.xpose.msra.mxu0 0
    %767 = vmatpush.bf16.xpose.msra.mxu0 0
    %768 = vmatpush.bf16.xpose.msra.mxu0 %v759
    %769 = vmatmul.bf16.gmra.mxu0 %v756
    %v770 = vpop.f32.mrf.mxu0
    %v771 = vadd.f32 0.0, %v770
    %v772 = vpop.f32.mrf.mxu0
    %773 = vdwg.mxu0
    %v775 = vsel %vm545, %v541, 0
    %v778 = vsel %vm545, %v493, 0
    %780 = vmatpush.bf16.xpose.msra.mxu0 0
    %781 = vmatpush.bf16.xpose.msra.mxu0 0
    %782 = vmatpush.bf16.xpose.msra.mxu0 0
    %783 = vmatpush.bf16.xpose.msra.mxu0 0
    %784 = vmatpush.bf16.xpose.msra.mxu0 0
    %785 = vmatpush.bf16.xpose.msra.mxu0 0
    %786 = vmatpush.bf16.xpose.msra.mxu0 0
    %787 = vmatpush.bf16.xpose.msra.mxu0 %v778
    %788 = vmatmul.bf16.gmra.mxu0 %v775
    %v789 = vpop.f32.mrf.mxu0
    %v790 = vadd.f32 0.0, %v789
    %v791 = vpop.f32.mrf.mxu0
    %792 = vdwg.mxu0
    %v794 = vsel %vm545, %v542, 0
    %v797 = vsel %vm545, %v494, 0
    %799 = vmatpush.bf16.xpose.msra.mxu0 0
    %800 = vmatpush.bf16.xpose.msra.mxu0 0
    %801 = vmatpush.bf16.xpose.msra.mxu0 0
    %802 = vmatpush.bf16.xpose.msra.mxu0 0
    %803 = vmatpush.bf16.xpose.msra.mxu0 0
    %804 = vmatpush.bf16.xpose.msra.mxu0 0
    %805 = vmatpush.bf16.xpose.msra.mxu0 0
    %806 = vmatpush.bf16.xpose.msra.mxu0 %v797
    %807 = vmatmul.bf16.gmra.mxu0 %v794
    %v808 = vpop.f32.mrf.mxu0
    %v809 = vadd.f32 0.0, %v808
    %v810 = vpop.f32.mrf.mxu0
    %811 = vdwg.mxu0
    %v813 = vsel %vm545, %v543, 0
    %v816 = vsel %vm545, %v495, 0
    %818 = vmatpush.bf16.xpose.msra.mxu0 0
    %819 = vmatpush.bf16.xpose.msra.mxu0 0
    %820 = vmatpush.bf16.xpose.msra.mxu0 0
    %821 = vmatpush.bf16.xpose.msra.mxu0 0
    %822 = vmatpush.bf16.xpose.msra.mxu0 0
    %823 = vmatpush.bf16.xpose.msra.mxu0 0
    %824 = vmatpush.bf16.xpose.msra.mxu0 0
    %825 = vmatpush.bf16.xpose.msra.mxu0 %v816
    %826 = vmatmul.bf16.gmra.mxu0 %v813
    %v827 = vpop.f32.mrf.mxu0
    %v828 = vadd.f32 0.0, %v827
    %v829 = vpop.f32.mrf.mxu0
    %830 = vdwg.mxu0
    %v832 = vsel %vm545, %v544, 0
    %v835 = vsel %vm545, %v496, 0
    %837 = vmatpush.bf16.xpose.msra.mxu0 0
    %838 = vmatpush.bf16.xpose.msra.mxu0 0
    %839 = vmatpush.bf16.xpose.msra.mxu0 0
    %840 = vmatpush.bf16.xpose.msra.mxu0 0
    %841 = vmatpush.bf16.xpose.msra.mxu0 0
    %842 = vmatpush.bf16.xpose.msra.mxu0 0
    %843 = vmatpush.bf16.xpose.msra.mxu0 0
    %844 = vmatpush.bf16.xpose.msra.mxu0 %v835
    %845 = vmatmul.bf16.gmra.mxu0 %v832
    %v846 = vpop.f32.mrf.mxu0
    %v847 = vadd.f32 0.0, %v846
    %v848 = vpop.f32.mrf.mxu0
    %849 = vdwg.mxu0
    %v850 = vsel %vm208, %v562, -inf
    %851 = vmax.xlane.f32.xlu0 %v850
    %v852 = vpop.xlane.xlu0 %851
    %v853 = vsel %vm208, %v581, -inf
    %854 = vmax.xlane.f32.xlu0 %v853
    %v855 = vpop.xlane.xlu0 %854
    %v856 = vsel %vm208, %v600, -inf
    %857 = vmax.xlane.f32.xlu0 %v856
    %v858 = vpop.xlane.xlu0 %857
    %v859 = vsel %vm208, %v619, -inf
    %860 = vmax.xlane.f32.xlu0 %v859
    %v861 = vpop.xlane.xlu0 %860
    %v862 = vsel %vm208, %v638, -inf
    %863 = vmax.xlane.f32.xlu0 %v862
    %v864 = vpop.xlane.xlu0 %863
    %v865 = vsel %vm208, %v657, -inf
    %866 = vmax.xlane.f32.xlu0 %v865
    %v867 = vpop.xlane.xlu0 %866
    %v868 = vsel %vm208, %v676, -inf
    %869 = vmax.xlane.f32.xlu0 %v868
    %v870 = vpop.xlane.xlu0 %869
    %v871 = vsel %vm208, %v695, -inf
    %872 = vmax.xlane.f32.xlu0 %v871
    %v873 = vpop.xlane.xlu0 %872
    %v874 = vsel %vm208, %v714, -inf
    %875 = vmax.xlane.f32.xlu0 %v874
    %v876 = vpop.xlane.xlu0 %875
    %v877 = vsel %vm208, %v733, -inf
    %878 = vmax.xlane.f32.xlu0 %v877
    %v879 = vpop.xlane.xlu0 %878
    %v880 = vsel %vm208, %v752, -inf
    %881 = vmax.xlane.f32.xlu0 %v880
    %v882 = vpop.xlane.xlu0 %881
    %v883 = vsel %vm208, %v771, -inf
    %884 = vmax.xlane.f32.xlu0 %v883
    %v885 = vpop.xlane.xlu0 %884
    %v886 = vsel %vm208, %v790, -inf
    %887 = vmax.xlane.f32.xlu0 %v886
    %v888 = vpop.xlane.xlu0 %887
    %v889 = vsel %vm208, %v809, -inf
    %890 = vmax.xlane.f32.xlu0 %v889
    %v891 = vpop.xlane.xlu0 %890
    %v892 = vsel %vm208, %v828, -inf
    %893 = vmax.xlane.f32.xlu0 %v892
    %v894 = vpop.xlane.xlu0 %893
    %v895 = vsel %vm208, %v847, -inf
    %896 = vmax.xlane.f32.xlu0 %v895
    %v897 = vpop.xlane.xlu0 %896
    %v898 = vsub.f32 %v562, %v852
    %v899 = vsub.f32 %v581, %v855
    %v900 = vsub.f32 %v600, %v858
    %v901 = vsub.f32 %v619, %v861
    %v902 = vsub.f32 %v638, %v864
    %v903 = vsub.f32 %v657, %v867
    %v904 = vsub.f32 %v676, %v870
    %v905 = vsub.f32 %v695, %v873
    %v906 = vsub.f32 %v714, %v876
    %v907 = vsub.f32 %v733, %v879
    %v908 = vsub.f32 %v752, %v882
    %v909 = vsub.f32 %v771, %v885
    %v910 = vsub.f32 %v790, %v888
    %v911 = vsub.f32 %v809, %v891
    %v912 = vsub.f32 %v828, %v894
    %v913 = vsub.f32 %v847, %v897
    %v914 = vmul.f32 %v898, 1.442695
    %v915 = vpow.pop %v914
    %v916 = vmul.f32 %v899, 1.442695
    %v917 = vpow.pop %v916
    %v918 = vmul.f32 %v900, 1.442695
    %v919 = vpow.pop %v918
    %v920 = vmul.f32 %v901, 1.442695
    %v921 = vpow.pop %v920
    %v922 = vmul.f32 %v902, 1.442695
    %v923 = vpow.pop %v922
    %v924 = vmul.f32 %v903, 1.442695
    %v925 = vpow.pop %v924
    %v926 = vmul.f32 %v904, 1.442695
    %v927 = vpow.pop %v926
    %v928 = vmul.f32 %v905, 1.442695
    %v929 = vpow.pop %v928
    %v930 = vmul.f32 %v906, 1.442695
    %v931 = vpow.pop %v930
    %v932 = vmul.f32 %v907, 1.442695
    %v933 = vpow.pop %v932
    %v934 = vmul.f32 %v908, 1.442695
    %v935 = vpow.pop %v934
    %v936 = vmul.f32 %v909, 1.442695
    %v937 = vpow.pop %v936
    %v938 = vmul.f32 %v910, 1.442695
    %v939 = vpow.pop %v938
    %v940 = vmul.f32 %v911, 1.442695
    %v941 = vpow.pop %v940
    %v942 = vmul.f32 %v912, 1.442695
    %v943 = vpow.pop %v942
    %v944 = vmul.f32 %v913, 1.442695
    %v945 = vpow.pop %v944
    %v946 = vsel %vm208, %v915, 0.0
    %947 = vadd.xlane.f32.xlu0 %v946
    %v948 = vpop.xlane.xlu0 %947
    %v949 = vsel %vm208, %v917, 0.0
    %950 = vadd.xlane.f32.xlu0 %v949
    %v951 = vpop.xlane.xlu0 %950
    %v952 = vsel %vm208, %v919, 0.0
    %953 = vadd.xlane.f32.xlu0 %v952
    %v954 = vpop.xlane.xlu0 %953
    %v955 = vsel %vm208, %v921, 0.0
    %956 = vadd.xlane.f32.xlu0 %v955
    %v957 = vpop.xlane.xlu0 %956
    %v958 = vsel %vm208, %v923, 0.0
    %959 = vadd.xlane.f32.xlu0 %v958
    %v960 = vpop.xlane.xlu0 %959
    %v961 = vsel %vm208, %v925, 0.0
    %962 = vadd.xlane.f32.xlu0 %v961
    %v963 = vpop.xlane.xlu0 %962
    %v964 = vsel %vm208, %v927, 0.0
    %965 = vadd.xlane.f32.xlu0 %v964
    %v966 = vpop.xlane.xlu0 %965
    %v967 = vsel %vm208, %v929, 0.0
    %968 = vadd.xlane.f32.xlu0 %v967
    %v969 = vpop.xlane.xlu0 %968
    %v970 = vsel %vm208, %v931, 0.0
    %971 = vadd.xlane.f32.xlu0 %v970
    %v972 = vpop.xlane.xlu0 %971
    %v973 = vsel %vm208, %v933, 0.0
    %974 = vadd.xlane.f32.xlu0 %v973
    %v975 = vpop.xlane.xlu0 %974
    %v976 = vsel %vm208, %v935, 0.0
    %977 = vadd.xlane.f32.xlu0 %v976
    %v978 = vpop.xlane.xlu0 %977
    %v979 = vsel %vm208, %v937, 0.0
    %980 = vadd.xlane.f32.xlu0 %v979
    %v981 = vpop.xlane.xlu0 %980
    %v982 = vsel %vm208, %v939, 0.0
    %983 = vadd.xlane.f32.xlu0 %v982
    %v984 = vpop.xlane.xlu0 %983
    %v985 = vsel %vm208, %v941, 0.0
    %986 = vadd.xlane.f32.xlu0 %v985
    %v987 = vpop.xlane.xlu0 %986
    %v988 = vsel %vm208, %v943, 0.0
    %989 = vadd.xlane.f32.xlu0 %v988
    %v990 = vpop.xlane.xlu0 %989
    %v991 = vsel %vm208, %v945, 0.0
    %992 = vadd.xlane.f32.xlu0 %v991
    %v993 = vpop.xlane.xlu0 %992
    %v994 = vrcp.pop %v948
    %v995 = vrcp.pop %v951
    %v996 = vrcp.pop %v954
    %v997 = vrcp.pop %v957
    %v998 = vrcp.pop %v960
    %v999 = vrcp.pop %v963
    %v1000 = vrcp.pop %v966
    %v1001 = vrcp.pop %v969
    %v1002 = vrcp.pop %v972
    %v1003 = vrcp.pop %v975
    %v1004 = vrcp.pop %v978
    %v1005 = vrcp.pop %v981
    %v1006 = vrcp.pop %v984
    %v1007 = vrcp.pop %v987
    %v1008 = vrcp.pop %v990
    %v1009 = vrcp.pop %v993
    %v1010 = vmul.f32 %v915, %v994
    %v1011 = vmul.f32 %v917, %v995
    %v1012 = vmul.f32 %v919, %v996
    %v1013 = vmul.f32 %v921, %v997
    %v1014 = vmul.f32 %v923, %v998
    %v1015 = vmul.f32 %v925, %v999
    %v1016 = vmul.f32 %v927, %v1000
    %v1017 = vmul.f32 %v929, %v1001
    %v1018 = vmul.f32 %v931, %v1002
    %v1019 = vmul.f32 %v933, %v1003
    %v1020 = vmul.f32 %v935, %v1004
    %v1021 = vmul.f32 %v937, %v1005
    %v1022 = vmul.f32 %v939, %v1006
    %v1023 = vmul.f32 %v941, %v1007
    %v1024 = vmul.f32 %v943, %v1008
    %v1025 = vmul.f32 %v945, %v1009
    %v1026 = vpack.c.bf16 %v1010, %v1010
    %v1027 = vpack.c.bf16 %v1011, %v1011
    %v1028 = vpack.c.bf16 %v1012, %v1012
    %v1029 = vpack.c.bf16 %v1013, %v1013
    %v1030 = vpack.c.bf16 %v1014, %v1014
    %v1031 = vpack.c.bf16 %v1015, %v1015
    %v1032 = vpack.c.bf16 %v1016, %v1016
    %v1033 = vpack.c.bf16 %v1017, %v1017
    %v1034 = vpack.c.bf16 %v1018, %v1018
    %v1035 = vpack.c.bf16 %v1019, %v1019
    %v1036 = vpack.c.bf16 %v1020, %v1020
    %v1037 = vpack.c.bf16 %v1021, %v1021
    %v1038 = vpack.c.bf16 %v1022, %v1022
    %v1039 = vpack.c.bf16 %v1023, %v1023
    %v1040 = vpack.c.bf16 %v1024, %v1024
    %v1041 = vpack.c.bf16 %v1025, %v1025
    %v1043 = vsel %vm208, %v1026, 0
    %v1045 = vsel %vm212, %v481, 0
    %1047 = vmatpush.bf16.msra.mxu0 0
    %1048 = vmatpush.bf16.msra.mxu0 0
    %1049 = vmatpush.bf16.msra.mxu0 0
    %1050 = vmatpush.bf16.msra.mxu0 0
    %1051 = vmatpush.bf16.msra.mxu0 0
    %1052 = vmatpush.bf16.msra.mxu0 0
    %1053 = vmatpush.bf16.msra.mxu0 0
    %1054 = vmatpush.bf16.msra.mxu0 %v1045
    %1055 = vmatmul.bf16.gmra.mxu0 %v1043
    %v1056 = vpop.f32.mrf.mxu0
    %v1057 = vadd.f32 0.0, %v1056
    %v1058 = vpop.f32.mrf.mxu0
    %1059 = vdwg.mxu0
    %v1061 = vsel %vm208, %v1027, 0
    %v1063 = vsel %vm212, %v482, 0
    %1065 = vmatpush.bf16.msra.mxu0 0
    %1066 = vmatpush.bf16.msra.mxu0 0
    %1067 = vmatpush.bf16.msra.mxu0 0
    %1068 = vmatpush.bf16.msra.mxu0 0
    %1069 = vmatpush.bf16.msra.mxu0 0
    %1070 = vmatpush.bf16.msra.mxu0 0
    %1071 = vmatpush.bf16.msra.mxu0 0
    %1072 = vmatpush.bf16.msra.mxu0 %v1063
    %1073 = vmatmul.bf16.gmra.mxu0 %v1061
    %v1074 = vpop.f32.mrf.mxu0
    %v1075 = vadd.f32 0.0, %v1074
    %v1076 = vpop.f32.mrf.mxu0
    %1077 = vdwg.mxu0
    %v1079 = vsel %vm208, %v1028, 0
    %v1081 = vsel %vm212, %v483, 0
    %1083 = vmatpush.bf16.msra.mxu0 0
    %1084 = vmatpush.bf16.msra.mxu0 0
    %1085 = vmatpush.bf16.msra.mxu0 0
    %1086 = vmatpush.bf16.msra.mxu0 0
    %1087 = vmatpush.bf16.msra.mxu0 0
    %1088 = vmatpush.bf16.msra.mxu0 0
    %1089 = vmatpush.bf16.msra.mxu0 0
    %1090 = vmatpush.bf16.msra.mxu0 %v1081
    %1091 = vmatmul.bf16.gmra.mxu0 %v1079
    %v1092 = vpop.f32.mrf.mxu0
    %v1093 = vadd.f32 0.0, %v1092
    %v1094 = vpop.f32.mrf.mxu0
    %1095 = vdwg.mxu0
    %v1097 = vsel %vm208, %v1029, 0
    %v1099 = vsel %vm212, %v484, 0
    %1101 = vmatpush.bf16.msra.mxu0 0
    %1102 = vmatpush.bf16.msra.mxu0 0
    %1103 = vmatpush.bf16.msra.mxu0 0
    %1104 = vmatpush.bf16.msra.mxu0 0
    %1105 = vmatpush.bf16.msra.mxu0 0
    %1106 = vmatpush.bf16.msra.mxu0 0
    %1107 = vmatpush.bf16.msra.mxu0 0
    %1108 = vmatpush.bf16.msra.mxu0 %v1099
    %1109 = vmatmul.bf16.gmra.mxu0 %v1097
    %v1110 = vpop.f32.mrf.mxu0
    %v1111 = vadd.f32 0.0, %v1110
    %v1112 = vpop.f32.mrf.mxu0
    %1113 = vdwg.mxu0
    %v1115 = vsel %vm208, %v1030, 0
    %v1117 = vsel %vm212, %v485, 0
    %1119 = vmatpush.bf16.msra.mxu0 0
    %1120 = vmatpush.bf16.msra.mxu0 0
    %1121 = vmatpush.bf16.msra.mxu0 0
    %1122 = vmatpush.bf16.msra.mxu0 0
    %1123 = vmatpush.bf16.msra.mxu0 0
    %1124 = vmatpush.bf16.msra.mxu0 0
    %1125 = vmatpush.bf16.msra.mxu0 0
    %1126 = vmatpush.bf16.msra.mxu0 %v1117
    %1127 = vmatmul.bf16.gmra.mxu0 %v1115
    %v1128 = vpop.f32.mrf.mxu0
    %v1129 = vadd.f32 0.0, %v1128
    %v1130 = vpop.f32.mrf.mxu0
    %1131 = vdwg.mxu0
    %v1133 = vsel %vm208, %v1031, 0
    %v1135 = vsel %vm212, %v486, 0
    %1137 = vmatpush.bf16.msra.mxu0 0
    %1138 = vmatpush.bf16.msra.mxu0 0
    %1139 = vmatpush.bf16.msra.mxu0 0
    %1140 = vmatpush.bf16.msra.mxu0 0
    %1141 = vmatpush.bf16.msra.mxu0 0
    %1142 = vmatpush.bf16.msra.mxu0 0
    %1143 = vmatpush.bf16.msra.mxu0 0
    %1144 = vmatpush.bf16.msra.mxu0 %v1135
    %1145 = vmatmul.bf16.gmra.mxu0 %v1133
    %v1146 = vpop.f32.mrf.mxu0
    %v1147 = vadd.f32 0.0, %v1146
    %v1148 = vpop.f32.mrf.mxu0
    %1149 = vdwg.mxu0
    %v1151 = vsel %vm208, %v1032, 0
    %v1153 = vsel %vm212, %v487, 0
    %1155 = vmatpush.bf16.msra.mxu0 0
    %1156 = vmatpush.bf16.msra.mxu0 0
    %1157 = vmatpush.bf16.msra.mxu0 0
    %1158 = vmatpush.bf16.msra.mxu0 0
    %1159 = vmatpush.bf16.msra.mxu0 0
    %1160 = vmatpush.bf16.msra.mxu0 0
    %1161 = vmatpush.bf16.msra.mxu0 0
    %1162 = vmatpush.bf16.msra.mxu0 %v1153
    %1163 = vmatmul.bf16.gmra.mxu0 %v1151
    %v1164 = vpop.f32.mrf.mxu0
    %v1165 = vadd.f32 0.0, %v1164
    %v1166 = vpop.f32.mrf.mxu0
    %1167 = vdwg.mxu0
    %v1169 = vsel %vm208, %v1033, 0
    %v1171 = vsel %vm212, %v488, 0
    %1173 = vmatpush.bf16.msra.mxu0 0
    %1174 = vmatpush.bf16.msra.mxu0 0
    %1175 = vmatpush.bf16.msra.mxu0 0
    %1176 = vmatpush.bf16.msra.mxu0 0
    %1177 = vmatpush.bf16.msra.mxu0 0
    %1178 = vmatpush.bf16.msra.mxu0 0
    %1179 = vmatpush.bf16.msra.mxu0 0
    %1180 = vmatpush.bf16.msra.mxu0 %v1171
    %1181 = vmatmul.bf16.gmra.mxu0 %v1169
    %v1182 = vpop.f32.mrf.mxu0
    %v1183 = vadd.f32 0.0, %v1182
    %v1184 = vpop.f32.mrf.mxu0
    %1185 = vdwg.mxu0
    %v1187 = vsel %vm208, %v1034, 0
    %v1189 = vsel %vm212, %v489, 0
    %1191 = vmatpush.bf16.msra.mxu0 0
    %1192 = vmatpush.bf16.msra.mxu0 0
    %1193 = vmatpush.bf16.msra.mxu0 0
    %1194 = vmatpush.bf16.msra.mxu0 0
    %1195 = vmatpush.bf16.msra.mxu0 0
    %1196 = vmatpush.bf16.msra.mxu0 0
    %1197 = vmatpush.bf16.msra.mxu0 0
    %1198 = vmatpush.bf16.msra.mxu0 %v1189
    %1199 = vmatmul.bf16.gmra.mxu0 %v1187
    %v1200 = vpop.f32.mrf.mxu0
    %v1201 = vadd.f32 0.0, %v1200
    %v1202 = vpop.f32.mrf.mxu0
    %1203 = vdwg.mxu0
    %v1205 = vsel %vm208, %v1035, 0
    %v1207 = vsel %vm212, %v490, 0
    %1209 = vmatpush.bf16.msra.mxu0 0
    %1210 = vmatpush.bf16.msra.mxu0 0
    %1211 = vmatpush.bf16.msra.mxu0 0
    %1212 = vmatpush.bf16.msra.mxu0 0
    %1213 = vmatpush.bf16.msra.mxu0 0
    %1214 = vmatpush.bf16.msra.mxu0 0
    %1215 = vmatpush.bf16.msra.mxu0 0
    %1216 = vmatpush.bf16.msra.mxu0 %v1207
    %1217 = vmatmul.bf16.gmra.mxu0 %v1205
    %v1218 = vpop.f32.mrf.mxu0
    %v1219 = vadd.f32 0.0, %v1218
    %v1220 = vpop.f32.mrf.mxu0
    %1221 = vdwg.mxu0
    %v1223 = vsel %vm208, %v1036, 0
    %v1225 = vsel %vm212, %v491, 0
    %1227 = vmatpush.bf16.msra.mxu0 0
    %1228 = vmatpush.bf16.msra.mxu0 0
    %1229 = vmatpush.bf16.msra.mxu0 0
    %1230 = vmatpush.bf16.msra.mxu0 0
    %1231 = vmatpush.bf16.msra.mxu0 0
    %1232 = vmatpush.bf16.msra.mxu0 0
    %1233 = vmatpush.bf16.msra.mxu0 0
    %1234 = vmatpush.bf16.msra.mxu0 %v1225
    %1235 = vmatmul.bf16.gmra.mxu0 %v1223
    %v1236 = vpop.f32.mrf.mxu0
    %v1237 = vadd.f32 0.0, %v1236
    %v1238 = vpop.f32.mrf.mxu0
    %1239 = vdwg.mxu0
    %v1241 = vsel %vm208, %v1037, 0
    %v1243 = vsel %vm212, %v492, 0
    %1245 = vmatpush.bf16.msra.mxu0 0
    %1246 = vmatpush.bf16.msra.mxu0 0
    %1247 = vmatpush.bf16.msra.mxu0 0
    %1248 = vmatpush.bf16.msra.mxu0 0
    %1249 = vmatpush.bf16.msra.mxu0 0
    %1250 = vmatpush.bf16.msra.mxu0 0
    %1251 = vmatpush.bf16.msra.mxu0 0
    %1252 = vmatpush.bf16.msra.mxu0 %v1243
    %1253 = vmatmul.bf16.gmra.mxu0 %v1241
    %v1254 = vpop.f32.mrf.mxu0
    %v1255 = vadd.f32 0.0, %v1254
    %v1256 = vpop.f32.mrf.mxu0
    %1257 = vdwg.mxu0
    %v1259 = vsel %vm208, %v1038, 0
    %v1261 = vsel %vm212, %v493, 0
    %1263 = vmatpush.bf16.msra.mxu0 0
    %1264 = vmatpush.bf16.msra.mxu0 0
    %1265 = vmatpush.bf16.msra.mxu0 0
    %1266 = vmatpush.bf16.msra.mxu0 0
    %1267 = vmatpush.bf16.msra.mxu0 0
    %1268 = vmatpush.bf16.msra.mxu0 0
    %1269 = vmatpush.bf16.msra.mxu0 0
    %1270 = vmatpush.bf16.msra.mxu0 %v1261
    %1271 = vmatmul.bf16.gmra.mxu0 %v1259
    %v1272 = vpop.f32.mrf.mxu0
    %v1273 = vadd.f32 0.0, %v1272
    %v1274 = vpop.f32.mrf.mxu0
    %1275 = vdwg.mxu0
    %v1277 = vsel %vm208, %v1039, 0
    %v1279 = vsel %vm212, %v494, 0
    %1281 = vmatpush.bf16.msra.mxu0 0
    %1282 = vmatpush.bf16.msra.mxu0 0
    %1283 = vmatpush.bf16.msra.mxu0 0
    %1284 = vmatpush.bf16.msra.mxu0 0
    %1285 = vmatpush.bf16.msra.mxu0 0
    %1286 = vmatpush.bf16.msra.mxu0 0
    %1287 = vmatpush.bf16.msra.mxu0 0
    %1288 = vmatpush.bf16.msra.mxu0 %v1279
    %1289 = vmatmul.bf16.gmra.mxu0 %v1277
    %v1290 = vpop.f32.mrf.mxu0
    %v1291 = vadd.f32 0.0, %v1290
    %v1292 = vpop.f32.mrf.mxu0
    %1293 = vdwg.mxu0
    %v1295 = vsel %vm208, %v1040, 0
    %v1297 = vsel %vm212, %v495, 0
    %1299 = vmatpush.bf16.msra.mxu0 0
    %1300 = vmatpush.bf16.msra.mxu0 0
    %1301 = vmatpush.bf16.msra.mxu0 0
    %1302 = vmatpush.bf16.msra.mxu0 0
    %1303 = vmatpush.bf16.msra.mxu0 0
    %1304 = vmatpush.bf16.msra.mxu0 0
    %1305 = vmatpush.bf16.msra.mxu0 0
    %1306 = vmatpush.bf16.msra.mxu0 %v1297
    %1307 = vmatmul.bf16.gmra.mxu0 %v1295
    %v1308 = vpop.f32.mrf.mxu0
    %v1309 = vadd.f32 0.0, %v1308
    %v1310 = vpop.f32.mrf.mxu0
    %1311 = vdwg.mxu0
    %v1313 = vsel %vm208, %v1041, 0
    %v1315 = vsel %vm212, %v496, 0
    %1317 = vmatpush.bf16.msra.mxu0 0
    %1318 = vmatpush.bf16.msra.mxu0 0
    %1319 = vmatpush.bf16.msra.mxu0 0
    %1320 = vmatpush.bf16.msra.mxu0 0
    %1321 = vmatpush.bf16.msra.mxu0 0
    %1322 = vmatpush.bf16.msra.mxu0 0
    %1323 = vmatpush.bf16.msra.mxu0 0
    %1324 = vmatpush.bf16.msra.mxu0 %v1315
    %1325 = vmatmul.bf16.gmra.mxu0 %v1313
    %v1326 = vpop.f32.mrf.mxu0
    %v1327 = vadd.f32 0.0, %v1326
    %v1328 = vpop.f32.mrf.mxu0
    %1329 = vdwg.mxu0
    %v1330 = vpack.c.bf16 %v1075, %v1057
    %v1331 = vpack.c.bf16 %v1111, %v1093
    %v1332 = vpack.c.bf16 %v1147, %v1129
    %v1333 = vpack.c.bf16 %v1183, %v1165
    %v1334 = vld [vmem:[#allocation13] sm:$0xf]
    %v1335 = vld [vmem:[#allocation13 + $0x4] sm:$0xf]
    %v1336 = vld [vmem:[#allocation13 + $0x8] sm:$0xf]
    %v1337 = vld [vmem:[#allocation13 + $0xc] sm:$0xf]
    %v1338 = vld [vmem:[#allocation13 + $0x10] sm:$0xf]
    %v1339 = vld [vmem:[#allocation13 + $0x14] sm:$0xf]
    %v1340 = vld [vmem:[#allocation13 + $0x18] sm:$0xf]
    %v1341 = vld [vmem:[#allocation13 + $0x1c] sm:$0xf]
    %v1342 = vperm.slane %v174, 0
    %v1351 = vunpack.c.l.b16 %v1334
    %v1352 = vunpack.c.l.b16 %v1335
    %v1353 = vunpack.c.l.b16 %v1336
    %v1354 = vunpack.c.l.b16 %v1337
    %v1355 = vunpack.c.l.b16 %v1338
    %v1356 = vunpack.c.l.b16 %v1339
    %v1357 = vunpack.c.l.b16 %v1340
    %v1358 = vunpack.c.l.b16 %v1341
    %v1359 = vpack.c.b16 %v1352, %v1351
    %v1360 = vpack.c.b16 %v1354, %v1353
    %v1361 = vpack.c.b16 %v1356, %v1355
    %v1362 = vpack.c.b16 %v1358, %v1357
    %v1368 = vsel %vm545, %v1330, 0
    %v1371 = vsel %vm545, %v1331, 0
    %v1374 = vsel %vm545, %v1332, 0
    %v1377 = vsel %vm545, %v1333, 0
    %1379 = vmatpush.bf16.msra.mxu0 0
    %1380 = vmatpush.bf16.msra.mxu0 0
    %1381 = vmatpush.bf16.msra.mxu0 0
    %1382 = vmatpush.bf16.msra.mxu0 0
    %1383 = vmatpush.bf16.msra.mxu0 %v1362
    %1384 = vmatpush.bf16.msra.mxu0 %v1361
    %1385 = vmatpush.bf16.msra.mxu0 %v1360
    %1386 = vmatpush.bf16.msra.mxu0 %v1359
    %1387 = vmatmul.bf16.gmra.mxu0 %v1368
    %v1388 = vpop.f32.mrf.mxu0
    %v1389 = vadd.f32 %v1342, %v1388
    %v1390 = vpop.f32.mrf.mxu0
    %v1391 = vadd.f32 %v1342, %v1390
    %1392 = vmatmul.bf16.gmra.mxu0 %v1371
    %v1393 = vpop.f32.mrf.mxu0
    %v1394 = vadd.f32 %v1342, %v1393
    %v1395 = vpop.f32.mrf.mxu0
    %v1396 = vadd.f32 %v1342, %v1395
    %1397 = vmatmul.bf16.gmra.mxu0 %v1374
    %v1398 = vpop.f32.mrf.mxu0
    %v1399 = vadd.f32 %v1342, %v1398
    %v1400 = vpop.f32.mrf.mxu0
    %v1401 = vadd.f32 %v1342, %v1400
    %1402 = vmatmul.bf16.gmra.mxu0 %v1377
    %v1403 = vpop.f32.mrf.mxu0
    %v1404 = vadd.f32 %v1342, %v1403
    %v1405 = vpop.f32.mrf.mxu0
    %v1406 = vadd.f32 %v1342, %v1405
    %1407 = vdwg.mxu0
    %v1408 = vpack.c.bf16 %v1219, %v1201
    %v1409 = vpack.c.bf16 %v1255, %v1237
    %v1410 = vpack.c.bf16 %v1291, %v1273
    %v1411 = vpack.c.bf16 %v1327, %v1309
    %v1412 = vld [vmem:[#allocation14] sm:$0xf]
    %v1413 = vld [vmem:[#allocation14 + $0x4] sm:$0xf]
    %v1414 = vld [vmem:[#allocation14 + $0x8] sm:$0xf]
    %v1415 = vld [vmem:[#allocation14 + $0xc] sm:$0xf]
    %v1416 = vld [vmem:[#allocation14 + $0x10] sm:$0xf]
    %v1417 = vld [vmem:[#allocation14 + $0x14] sm:$0xf]
    %v1418 = vld [vmem:[#allocation14 + $0x18] sm:$0xf]
    %v1419 = vld [vmem:[#allocation14 + $0x1c] sm:$0xf]
    %v1420 = vperm.slane %v175, 0
    %v1429 = vunpack.c.l.b16 %v1412
    %v1430 = vunpack.c.l.b16 %v1413
    %v1431 = vunpack.c.l.b16 %v1414
    %v1432 = vunpack.c.l.b16 %v1415
    %v1433 = vunpack.c.l.b16 %v1416
    %v1434 = vunpack.c.l.b16 %v1417
    %v1435 = vunpack.c.l.b16 %v1418
    %v1436 = vunpack.c.l.b16 %v1419
    %v1437 = vpack.c.b16 %v1430, %v1429
    %v1438 = vpack.c.b16 %v1432, %v1431
    %v1439 = vpack.c.b16 %v1434, %v1433
    %v1440 = vpack.c.b16 %v1436, %v1435
    %v1446 = vsel %vm545, %v1408, 0
    %v1449 = vsel %vm545, %v1409, 0
    %v1452 = vsel %vm545, %v1410, 0
    %v1455 = vsel %vm545, %v1411, 0
    %1457 = vmatpush.bf16.msra.mxu0 0
    %1458 = vmatpush.bf16.msra.mxu0 0
    %1459 = vmatpush.bf16.msra.mxu0 0
    %1460 = vmatpush.bf16.msra.mxu0 0
    %1461 = vmatpush.bf16.msra.mxu0 %v1440
    %1462 = vmatpush.bf16.msra.mxu0 %v1439
    %1463 = vmatpush.bf16.msra.mxu0 %v1438
    %1464 = vmatpush.bf16.msra.mxu0 %v1437
    %1465 = vmatmul.bf16.gmra.mxu0 %v1446
    %v1466 = vpop.f32.mrf.mxu0
    %v1467 = vadd.f32 %v1420, %v1466
    %v1468 = vpop.f32.mrf.mxu0
    %v1469 = vadd.f32 %v1420, %v1468
    %1470 = vmatmul.bf16.gmra.mxu0 %v1449
    %v1471 = vpop.f32.mrf.mxu0
    %v1472 = vadd.f32 %v1420, %v1471
    %v1473 = vpop.f32.mrf.mxu0
    %v1474 = vadd.f32 %v1420, %v1473
    %1475 = vmatmul.bf16.gmra.mxu0 %v1452
    %v1476 = vpop.f32.mrf.mxu0
    %v1477 = vadd.f32 %v1420, %v1476
    %v1478 = vpop.f32.mrf.mxu0
    %v1479 = vadd.f32 %v1420, %v1478
    %1480 = vmatmul.bf16.gmra.mxu0 %v1455
    %v1481 = vpop.f32.mrf.mxu0
    %v1482 = vadd.f32 %v1420, %v1481
    %v1483 = vpop.f32.mrf.mxu0
    %v1484 = vadd.f32 %v1420, %v1483
    %1485 = vdwg.mxu0
    %v1486 = vpack.c.bf16 %v1389, %v1389
    %v1487 = vpack.c.bf16 %v1391, %v1391
    %v1488 = vpack.c.bf16 %v1394, %v1394
    %v1489 = vpack.c.bf16 %v1396, %v1396
    %v1490 = vpack.c.bf16 %v1399, %v1399
    %v1491 = vpack.c.bf16 %v1401, %v1401
    %v1492 = vpack.c.bf16 %v1404, %v1404
    %v1493 = vpack.c.bf16 %v1406, %v1406
    %v1494 = vpack.c.bf16 %v1467, %v1467
    %v1495 = vpack.c.bf16 %v1469, %v1469
    %v1496 = vpack.c.bf16 %v1472, %v1472
    %v1497 = vpack.c.bf16 %v1474, %v1474
    %v1498 = vpack.c.bf16 %v1477, %v1477
    %v1499 = vpack.c.bf16 %v1479, %v1479
    %v1500 = vpack.c.bf16 %v1482, %v1482
    %v1501 = vpack.c.bf16 %v1484, %v1484
    %1510 = vrot.lane.b32.xlu0 %v1486, 112
    %v1511 = vpop.permute.xlu0 %1510
    %1512 = vrot.lane.b32.xlu0 %v1487, 112
    %v1513 = vpop.permute.xlu0 %1512
    %1514 = vrot.lane.b32.xlu0 %v1488, 112
    %v1515 = vpop.permute.xlu0 %1514
    %1516 = vrot.lane.b32.xlu0 %v1489, 112
    %v1517 = vpop.permute.xlu0 %1516
    %1518 = vrot.lane.b32.xlu0 %v1490, 112
    %v1519 = vpop.permute.xlu0 %1518
    %1520 = vrot.lane.b32.xlu0 %v1491, 112
    %v1521 = vpop.permute.xlu0 %1520
    %1522 = vrot.lane.b32.xlu0 %v1492, 112
    %v1523 = vpop.permute.xlu0 %1522
    %1524 = vrot.lane.b32.xlu0 %v1493, 112
    %v1525 = vpop.permute.xlu0 %1524
    %1526 = vrot.lane.b32.xlu0 %v1486, 96
    %v1527 = vpop.permute.xlu0 %1526
    %1528 = vrot.lane.b32.xlu0 %v1487, 96
    %v1529 = vpop.permute.xlu0 %1528
    %1530 = vrot.lane.b32.xlu0 %v1488, 96
    %v1531 = vpop.permute.xlu0 %1530
    %1532 = vrot.lane.b32.xlu0 %v1489, 96
    %v1533 = vpop.permute.xlu0 %1532
    %1534 = vrot.lane.b32.xlu0 %v1490, 96
    %v1535 = vpop.permute.xlu0 %1534
    %1536 = vrot.lane.b32.xlu0 %v1491, 96
    %v1537 = vpop.permute.xlu0 %1536
    %1538 = vrot.lane.b32.xlu0 %v1492, 96
    %v1539 = vpop.permute.xlu0 %1538
    %1540 = vrot.lane.b32.xlu0 %v1493, 96
    %v1541 = vpop.permute.xlu0 %1540
    %1542 = vrot.lane.b32.xlu0 %v1486, 80
    %v1543 = vpop.permute.xlu0 %1542
    %1544 = vrot.lane.b32.xlu0 %v1487, 80
    %v1545 = vpop.permute.xlu0 %1544
    %1546 = vrot.lane.b32.xlu0 %v1488, 80
    %v1547 = vpop.permute.xlu0 %1546
    %1548 = vrot.lane.b32.xlu0 %v1489, 80
    %v1549 = vpop.permute.xlu0 %1548
    %1550 = vrot.lane.b32.xlu0 %v1490, 80
    %v1551 = vpop.permute.xlu0 %1550
    %1552 = vrot.lane.b32.xlu0 %v1491, 80
    %v1553 = vpop.permute.xlu0 %1552
    %1554 = vrot.lane.b32.xlu0 %v1492, 80
    %v1555 = vpop.permute.xlu0 %1554
    %1556 = vrot.lane.b32.xlu0 %v1493, 80
    %v1557 = vpop.permute.xlu0 %1556
    %1566 = vrot.lane.b32.xlu0 %v1494, 112
    %v1567 = vpop.permute.xlu0 %1566
    %1568 = vrot.lane.b32.xlu0 %v1495, 112
    %v1569 = vpop.permute.xlu0 %1568
    %1570 = vrot.lane.b32.xlu0 %v1496, 112
    %v1571 = vpop.permute.xlu0 %1570
    %1572 = vrot.lane.b32.xlu0 %v1497, 112
    %v1573 = vpop.permute.xlu0 %1572
    %1574 = vrot.lane.b32.xlu0 %v1498, 112
    %v1575 = vpop.permute.xlu0 %1574
    %1576 = vrot.lane.b32.xlu0 %v1499, 112
    %v1577 = vpop.permute.xlu0 %1576
    %1578 = vrot.lane.b32.xlu0 %v1500, 112
    %v1579 = vpop.permute.xlu0 %1578
    %1580 = vrot.lane.b32.xlu0 %v1501, 112
    %v1581 = vpop.permute.xlu0 %1580
    %1582 = vrot.lane.b32.xlu0 %v1494, 96
    %v1583 = vpop.permute.xlu0 %1582
    %1584 = vrot.lane.b32.xlu0 %v1495, 96
    %v1585 = vpop.permute.xlu0 %1584
    %1586 = vrot.lane.b32.xlu0 %v1496, 96
    %v1587 = vpop.permute.xlu0 %1586
    %1588 = vrot.lane.b32.xlu0 %v1497, 96
    %v1589 = vpop.permute.xlu0 %1588
    %1590 = vrot.lane.b32.xlu0 %v1498, 96
    %v1591 = vpop.permute.xlu0 %1590
    %1592 = vrot.lane.b32.xlu0 %v1499, 96
    %v1593 = vpop.permute.xlu0 %1592
    %1594 = vrot.lane.b32.xlu0 %v1500, 96
    %v1595 = vpop.permute.xlu0 %1594
    %1596 = vrot.lane.b32.xlu0 %v1501, 96
    %v1597 = vpop.permute.xlu0 %1596
    %1598 = vrot.lane.b32.xlu0 %v1494, 80
    %v1599 = vpop.permute.xlu0 %1598
    %1600 = vrot.lane.b32.xlu0 %v1495, 80
    %v1601 = vpop.permute.xlu0 %1600
    %1602 = vrot.lane.b32.xlu0 %v1496, 80
    %v1603 = vpop.permute.xlu0 %1602
    %1604 = vrot.lane.b32.xlu0 %v1497, 80
    %v1605 = vpop.permute.xlu0 %1604
    %1606 = vrot.lane.b32.xlu0 %v1498, 80
    %v1607 = vpop.permute.xlu0 %1606
    %1608 = vrot.lane.b32.xlu0 %v1499, 80
    %v1609 = vpop.permute.xlu0 %1608
    %1610 = vrot.lane.b32.xlu0 %v1500, 80
    %v1611 = vpop.permute.xlu0 %1610
    %1612 = vrot.lane.b32.xlu0 %v1501, 80
    %v1613 = vpop.permute.xlu0 %1612
    %vm1614 = vcmask 130048
    %v1616 = vsel %vm1614, %v1486, 0
    %v1619 = vsel %vm1614, %v1494, 0
    %1621 = vmatpush.bf16.xpose.msra.mxu0 0
    %1622 = vmatpush.bf16.xpose.msra.mxu0 0
    %1623 = vmatpush.bf16.xpose.msra.mxu0 0
    %1624 = vmatpush.bf16.xpose.msra.mxu0 0
    %1625 = vmatpush.bf16.xpose.msra.mxu0 0
    %1626 = vmatpush.bf16.xpose.msra.mxu0 0
    %1627 = vmatpush.bf16.xpose.msra.mxu0 0
    %1628 = vmatpush.bf16.xpose.msra.mxu0 %v1619
    %1629 = vmatmul.bf16.gmra.mxu0 %v1616
    %v1630 = vpop.f32.mrf.mxu0
    %v1631 = vadd.f32 0.0, %v1630
    %v1632 = vpop.f32.mrf.mxu0
    %1633 = vdwg.mxu0
    %v1635 = vsel %vm1614, %v1487, 0
    %v1638 = vsel %vm1614, %v1495, 0
    %1640 = vmatpush.bf16.xpose.msra.mxu0 0
    %1641 = vmatpush.bf16.xpose.msra.mxu0 0
    %1642 = vmatpush.bf16.xpose.msra.mxu0 0
    %1643 = vmatpush.bf16.xpose.msra.mxu0 0
    %1644 = vmatpush.bf16.xpose.msra.mxu0 0
    %1645 = vmatpush.bf16.xpose.msra.mxu0 0
    %1646 = vmatpush.bf16.xpose.msra.mxu0 0
    %1647 = vmatpush.bf16.xpose.msra.mxu0 %v1638
    %1648 = vmatmul.bf16.gmra.mxu0 %v1635
    %v1649 = vpop.f32.mrf.mxu0
    %v1650 = vadd.f32 0.0, %v1649
    %v1651 = vpop.f32.mrf.mxu0
    %1652 = vdwg.mxu0
    %v1654 = vsel %vm1614, %v1488, 0
    %v1657 = vsel %vm1614, %v1496, 0
    %1659 = vmatpush.bf16.xpose.msra.mxu0 0
    %1660 = vmatpush.bf16.xpose.msra.mxu0 0
    %1661 = vmatpush.bf16.xpose.msra.mxu0 0
    %1662 = vmatpush.bf16.xpose.msra.mxu0 0
    %1663 = vmatpush.bf16.xpose.msra.mxu0 0
    %1664 = vmatpush.bf16.xpose.msra.mxu0 0
    %1665 = vmatpush.bf16.xpose.msra.mxu0 0
    %1666 = vmatpush.bf16.xpose.msra.mxu0 %v1657
    %1667 = vmatmul.bf16.gmra.mxu0 %v1654
    %v1668 = vpop.f32.mrf.mxu0
    %v1669 = vadd.f32 0.0, %v1668
    %v1670 = vpop.f32.mrf.mxu0
    %1671 = vdwg.mxu0
    %v1673 = vsel %vm1614, %v1489, 0
    %v1676 = vsel %vm1614, %v1497, 0
    %1678 = vmatpush.bf16.xpose.msra.mxu0 0
    %1679 = vmatpush.bf16.xpose.msra.mxu0 0
    %1680 = vmatpush.bf16.xpose.msra.mxu0 0
    %1681 = vmatpush.bf16.xpose.msra.mxu0 0
    %1682 = vmatpush.bf16.xpose.msra.mxu0 0
    %1683 = vmatpush.bf16.xpose.msra.mxu0 0
    %1684 = vmatpush.bf16.xpose.msra.mxu0 0
    %1685 = vmatpush.bf16.xpose.msra.mxu0 %v1676
    %1686 = vmatmul.bf16.gmra.mxu0 %v1673
    %v1687 = vpop.f32.mrf.mxu0
    %v1688 = vadd.f32 0.0, %v1687
    %v1689 = vpop.f32.mrf.mxu0
    %1690 = vdwg.mxu0
    %v1692 = vsel %vm1614, %v1490, 0
    %v1695 = vsel %vm1614, %v1498, 0
    %1697 = vmatpush.bf16.xpose.msra.mxu0 0
    %1698 = vmatpush.bf16.xpose.msra.mxu0 0
    %1699 = vmatpush.bf16.xpose.msra.mxu0 0
    %1700 = vmatpush.bf16.xpose.msra.mxu0 0
    %1701 = vmatpush.bf16.xpose.msra.mxu0 0
    %1702 = vmatpush.bf16.xpose.msra.mxu0 0
    %1703 = vmatpush.bf16.xpose.msra.mxu0 0
    %1704 = vmatpush.bf16.xpose.msra.mxu0 %v1695
    %1705 = vmatmul.bf16.gmra.mxu0 %v1692
    %v1706 = vpop.f32.mrf.mxu0
    %v1707 = vadd.f32 0.0, %v1706
    %v1708 = vpop.f32.mrf.mxu0
    %1709 = vdwg.mxu0
    %v1711 = vsel %vm1614, %v1491, 0
    %v1714 = vsel %vm1614, %v1499, 0
    %1716 = vmatpush.bf16.xpose.msra.mxu0 0
    %1717 = vmatpush.bf16.xpose.msra.mxu0 0
    %1718 = vmatpush.bf16.xpose.msra.mxu0 0
    %1719 = vmatpush.bf16.xpose.msra.mxu0 0
    %1720 = vmatpush.bf16.xpose.msra.mxu0 0
    %1721 = vmatpush.bf16.xpose.msra.mxu0 0
    %1722 = vmatpush.bf16.xpose.msra.mxu0 0
    %1723 = vmatpush.bf16.xpose.msra.mxu0 %v1714
    %1724 = vmatmul.bf16.gmra.mxu0 %v1711
    %v1725 = vpop.f32.mrf.mxu0
    %v1726 = vadd.f32 0.0, %v1725
    %v1727 = vpop.f32.mrf.mxu0
    %1728 = vdwg.mxu0
    %v1730 = vsel %vm1614, %v1492, 0
    %v1733 = vsel %vm1614, %v1500, 0
    %1735 = vmatpush.bf16.xpose.msra.mxu0 0
    %1736 = vmatpush.bf16.xpose.msra.mxu0 0
    %1737 = vmatpush.bf16.xpose.msra.mxu0 0
    %1738 = vmatpush.bf16.xpose.msra.mxu0 0
    %1739 = vmatpush.bf16.xpose.msra.mxu0 0
    %1740 = vmatpush.bf16.xpose.msra.mxu0 0
    %1741 = vmatpush.bf16.xpose.msra.mxu0 0
    %1742 = vmatpush.bf16.xpose.msra.mxu0 %v1733
    %1743 = vmatmul.bf16.gmra.mxu0 %v1730
    %v1744 = vpop.f32.mrf.mxu0
    %v1745 = vadd.f32 0.0, %v1744
    %v1746 = vpop.f32.mrf.mxu0
    %1747 = vdwg.mxu0
    %v1749 = vsel %vm1614, %v1493, 0
    %v1752 = vsel %vm1614, %v1501, 0
    %1754 = vmatpush.bf16.xpose.msra.mxu0 0
    %1755 = vmatpush.bf16.xpose.msra.mxu0 0
    %1756 = vmatpush.bf16.xpose.msra.mxu0 0
    %1757 = vmatpush.bf16.xpose.msra.mxu0 0
    %1758 = vmatpush.bf16.xpose.msra.mxu0 0
    %1759 = vmatpush.bf16.xpose.msra.mxu0 0
    %1760 = vmatpush.bf16.xpose.msra.mxu0 0
    %1761 = vmatpush.bf16.xpose.msra.mxu0 %v1752
    %1762 = vmatmul.bf16.gmra.mxu0 %v1749
    %v1763 = vpop.f32.mrf.mxu0
    %v1764 = vadd.f32 0.0, %v1763
    %v1765 = vpop.f32.mrf.mxu0
    %1766 = vdwg.mxu0
    %v1768 = vsel %vm1614, %v1511, 0
    %v1771 = vsel %vm1614, %v1567, 0
    %1773 = vmatpush.bf16.xpose.msra.mxu0 0
    %1774 = vmatpush.bf16.xpose.msra.mxu0 0
    %1775 = vmatpush.bf16.xpose.msra.mxu0 0
    %1776 = vmatpush.bf16.xpose.msra.mxu0 0
    %1777 = vmatpush.bf16.xpose.msra.mxu0 0
    %1778 = vmatpush.bf16.xpose.msra.mxu0 0
    %1779 = vmatpush.bf16.xpose.msra.mxu0 0
    %1780 = vmatpush.bf16.xpose.msra.mxu0 %v1771
    %1781 = vmatmul.bf16.gmra.mxu0 %v1768
    %v1782 = vpop.f32.mrf.mxu0
    %v1783 = vadd.f32 0.0, %v1782
    %v1784 = vpop.f32.mrf.mxu0
    %1785 = vdwg.mxu0
    %v1787 = vsel %vm1614, %v1513, 0
    %v1790 = vsel %vm1614, %v1569, 0
    %1792 = vmatpush.bf16.xpose.msra.mxu0 0
    %1793 = vmatpush.bf16.xpose.msra.mxu0 0
    %1794 = vmatpush.bf16.xpose.msra.mxu0 0
    %1795 = vmatpush.bf16.xpose.msra.mxu0 0
    %1796 = vmatpush.bf16.xpose.msra.mxu0 0
    %1797 = vmatpush.bf16.xpose.msra.mxu0 0
    %1798 = vmatpush.bf16.xpose.msra.mxu0 0
    %1799 = vmatpush.bf16.xpose.msra.mxu0 %v1790
    %1800 = vmatmul.bf16.gmra.mxu0 %v1787
    %v1801 = vpop.f32.mrf.mxu0
    %v1802 = vadd.f32 0.0, %v1801
    %v1803 = vpop.f32.mrf.mxu0
    %1804 = vdwg.mxu0
    %v1806 = vsel %vm1614, %v1515, 0
    %v1809 = vsel %vm1614, %v1571, 0
    %1811 = vmatpush.bf16.xpose.msra.mxu0 0
    %1812 = vmatpush.bf16.xpose.msra.mxu0 0
    %1813 = vmatpush.bf16.xpose.msra.mxu0 0
    %1814 = vmatpush.bf16.xpose.msra.mxu0 0
    %1815 = vmatpush.bf16.xpose.msra.mxu0 0
    %1816 = vmatpush.bf16.xpose.msra.mxu0 0
    %1817 = vmatpush.bf16.xpose.msra.mxu0 0
    %1818 = vmatpush.bf16.xpose.msra.mxu0 %v1809
    %1819 = vmatmul.bf16.gmra.mxu0 %v1806
    %v1820 = vpop.f32.mrf.mxu0
    %v1821 = vadd.f32 0.0, %v1820
    %v1822 = vpop.f32.mrf.mxu0
    %1823 = vdwg.mxu0
    %v1825 = vsel %vm1614, %v1517, 0
    %v1828 = vsel %vm1614, %v1573, 0
    %1830 = vmatpush.bf16.xpose.msra.mxu0 0
    %1831 = vmatpush.bf16.xpose.msra.mxu0 0
    %1832 = vmatpush.bf16.xpose.msra.mxu0 0
    %1833 = vmatpush.bf16.xpose.msra.mxu0 0
    %1834 = vmatpush.bf16.xpose.msra.mxu0 0
    %1835 = vmatpush.bf16.xpose.msra.mxu0 0
    %1836 = vmatpush.bf16.xpose.msra.mxu0 0
    %1837 = vmatpush.bf16.xpose.msra.mxu0 %v1828
    %1838 = vmatmul.bf16.gmra.mxu0 %v1825
    %v1839 = vpop.f32.mrf.mxu0
    %v1840 = vadd.f32 0.0, %v1839
    %v1841 = vpop.f32.mrf.mxu0
    %1842 = vdwg.mxu0
    %v1844 = vsel %vm1614, %v1519, 0
    %v1847 = vsel %vm1614, %v1575, 0
    %1849 = vmatpush.bf16.xpose.msra.mxu0 0
    %1850 = vmatpush.bf16.xpose.msra.mxu0 0
    %1851 = vmatpush.bf16.xpose.msra.mxu0 0
    %1852 = vmatpush.bf16.xpose.msra.mxu0 0
    %1853 = vmatpush.bf16.xpose.msra.mxu0 0
    %1854 = vmatpush.bf16.xpose.msra.mxu0 0
    %1855 = vmatpush.bf16.xpose.msra.mxu0 0
    %1856 = vmatpush.bf16.xpose.msra.mxu0 %v1847
    %1857 = vmatmul.bf16.gmra.mxu0 %v1844
    %v1858 = vpop.f32.mrf.mxu0
    %v1859 = vadd.f32 0.0, %v1858
    %v1860 = vpop.f32.mrf.mxu0
    %1861 = vdwg.mxu0
    %v1863 = vsel %vm1614, %v1521, 0
    %v1866 = vsel %vm1614, %v1577, 0
    %1868 = vmatpush.bf16.xpose.msra.mxu0 0
    %1869 = vmatpush.bf16.xpose.msra.mxu0 0
    %1870 = vmatpush.bf16.xpose.msra.mxu0 0
    %1871 = vmatpush.bf16.xpose.msra.mxu0 0
    %1872 = vmatpush.bf16.xpose.msra.mxu0 0
    %1873 = vmatpush.bf16.xpose.msra.mxu0 0
    %1874 = vmatpush.bf16.xpose.msra.mxu0 0
    %1875 = vmatpush.bf16.xpose.msra.mxu0 %v1866
    %1876 = vmatmul.bf16.gmra.mxu0 %v1863
    %v1877 = vpop.f32.mrf.mxu0
    %v1878 = vadd.f32 0.0, %v1877
    %v1879 = vpop.f32.mrf.mxu0
    %1880 = vdwg.mxu0
    %v1882 = vsel %vm1614, %v1523, 0
    %v1885 = vsel %vm1614, %v1579, 0
    %1887 = vmatpush.bf16.xpose.msra.mxu0 0
    %1888 = vmatpush.bf16.xpose.msra.mxu0 0
    %1889 = vmatpush.bf16.xpose.msra.mxu0 0
    %1890 = vmatpush.bf16.xpose.msra.mxu0 0
    %1891 = vmatpush.bf16.xpose.msra.mxu0 0
    %1892 = vmatpush.bf16.xpose.msra.mxu0 0
    %1893 = vmatpush.bf16.xpose.msra.mxu0 0
    %1894 = vmatpush.bf16.xpose.msra.mxu0 %v1885
    %1895 = vmatmul.bf16.gmra.mxu0 %v1882
    %v1896 = vpop.f32.mrf.mxu0
    %v1897 = vadd.f32 0.0, %v1896
    %v1898 = vpop.f32.mrf.mxu0
    %1899 = vdwg.mxu0
    %v1901 = vsel %vm1614, %v1525, 0
    %v1904 = vsel %vm1614, %v1581, 0
    %1906 = vmatpush.bf16.xpose.msra.mxu0 0
    %1907 = vmatpush.bf16.xpose.msra.mxu0 0
    %1908 = vmatpush.bf16.xpose.msra.mxu0 0
    %1909 = vmatpush.bf16.xpose.msra.mxu0 0
    %1910 = vmatpush.bf16.xpose.msra.mxu0 0
    %1911 = vmatpush.bf16.xpose.msra.mxu0 0
    %1912 = vmatpush.bf16.xpose.msra.mxu0 0
    %1913 = vmatpush.bf16.xpose.msra.mxu0 %v1904
    %1914 = vmatmul.bf16.gmra.mxu0 %v1901
    %v1915 = vpop.f32.mrf.mxu0
    %v1916 = vadd.f32 0.0, %v1915
    %v1917 = vpop.f32.mrf.mxu0
    %1918 = vdwg.mxu0
    %v1920 = vsel %vm1614, %v1527, 0
    %v1923 = vsel %vm1614, %v1583, 0
    %1925 = vmatpush.bf16.xpose.msra.mxu0 0
    %1926 = vmatpush.bf16.xpose.msra.mxu0 0
    %1927 = vmatpush.bf16.xpose.msra.mxu0 0
    %1928 = vmatpush.bf16.xpose.msra.mxu0 0
    %1929 = vmatpush.bf16.xpose.msra.mxu0 0
    %1930 = vmatpush.bf16.xpose.msra.mxu0 0
    %1931 = vmatpush.bf16.xpose.msra.mxu0 0
    %1932 = vmatpush.bf16.xpose.msra.mxu0 %v1923
    %1933 = vmatmul.bf16.gmra.mxu0 %v1920
    %v1934 = vpop.f32.mrf.mxu0
    %v1935 = vadd.f32 0.0, %v1934
    %v1936 = vpop.f32.mrf.mxu0
    %1937 = vdwg.mxu0
    %v1939 = vsel %vm1614, %v1529, 0
    %v1942 = vsel %vm1614, %v1585, 0
    %1944 = vmatpush.bf16.xpose.msra.mxu0 0
    %1945 = vmatpush.bf16.xpose.msra.mxu0 0
    %1946 = vmatpush.bf16.xpose.msra.mxu0 0
    %1947 = vmatpush.bf16.xpose.msra.mxu0 0
    %1948 = vmatpush.bf16.xpose.msra.mxu0 0
    %1949 = vmatpush.bf16.xpose.msra.mxu0 0
    %1950 = vmatpush.bf16.xpose.msra.mxu0 0
    %1951 = vmatpush.bf16.xpose.msra.mxu0 %v1942
    %1952 = vmatmul.bf16.gmra.mxu0 %v1939
    %v1953 = vpop.f32.mrf.mxu0
    %v1954 = vadd.f32 0.0, %v1953
    %v1955 = vpop.f32.mrf.mxu0
    %1956 = vdwg.mxu0
    %v1958 = vsel %vm1614, %v1531, 0
    %v1961 = vsel %vm1614, %v1587, 0
    %1963 = vmatpush.bf16.xpose.msra.mxu0 0
    %1964 = vmatpush.bf16.xpose.msra.mxu0 0
    %1965 = vmatpush.bf16.xpose.msra.mxu0 0
    %1966 = vmatpush.bf16.xpose.msra.mxu0 0
    %1967 = vmatpush.bf16.xpose.msra.mxu0 0
    %1968 = vmatpush.bf16.xpose.msra.mxu0 0
    %1969 = vmatpush.bf16.xpose.msra.mxu0 0
    %1970 = vmatpush.bf16.xpose.msra.mxu0 %v1961
    %1971 = vmatmul.bf16.gmra.mxu0 %v1958
    %v1972 = vpop.f32.mrf.mxu0
    %v1973 = vadd.f32 0.0, %v1972
    %v1974 = vpop.f32.mrf.mxu0
    %1975 = vdwg.mxu0
    %v1977 = vsel %vm1614, %v1533, 0
    %v1980 = vsel %vm1614, %v1589, 0
    %1982 = vmatpush.bf16.xpose.msra.mxu0 0
    %1983 = vmatpush.bf16.xpose.msra.mxu0 0
    %1984 = vmatpush.bf16.xpose.msra.mxu0 0
    %1985 = vmatpush.bf16.xpose.msra.mxu0 0
    %1986 = vmatpush.bf16.xpose.msra.mxu0 0
    %1987 = vmatpush.bf16.xpose.msra.mxu0 0
    %1988 = vmatpush.bf16.xpose.msra.mxu0 0
    %1989 = vmatpush.bf16.xpose.msra.mxu0 %v1980
    %1990 = vmatmul.bf16.gmra.mxu0 %v1977
    %v1991 = vpop.f32.mrf.mxu0
    %v1992 = vadd.f32 0.0, %v1991
    %v1993 = vpop.f32.mrf.mxu0
    %1994 = vdwg.mxu0
    %v1996 = vsel %vm1614, %v1535, 0
    %v1999 = vsel %vm1614, %v1591, 0
    %2001 = vmatpush.bf16.xpose.msra.mxu0 0
    %2002 = vmatpush.bf16.xpose.msra.mxu0 0
    %2003 = vmatpush.bf16.xpose.msra.mxu0 0
    %2004 = vmatpush.bf16.xpose.msra.mxu0 0
    %2005 = vmatpush.bf16.xpose.msra.mxu0 0
    %2006 = vmatpush.bf16.xpose.msra.mxu0 0
    %2007 = vmatpush.bf16.xpose.msra.mxu0 0
    %2008 = vmatpush.bf16.xpose.msra.mxu0 %v1999
    %2009 = vmatmul.bf16.gmra.mxu0 %v1996
    %v2010 = vpop.f32.mrf.mxu0
    %v2011 = vadd.f32 0.0, %v2010
    %v2012 = vpop.f32.mrf.mxu0
    %2013 = vdwg.mxu0
    %v2015 = vsel %vm1614, %v1537, 0
    %v2018 = vsel %vm1614, %v1593, 0
    %2020 = vmatpush.bf16.xpose.msra.mxu0 0
    %2021 = vmatpush.bf16.xpose.msra.mxu0 0
    %2022 = vmatpush.bf16.xpose.msra.mxu0 0
    %2023 = vmatpush.bf16.xpose.msra.mxu0 0
    %2024 = vmatpush.bf16.xpose.msra.mxu0 0
    %2025 = vmatpush.bf16.xpose.msra.mxu0 0
    %2026 = vmatpush.bf16.xpose.msra.mxu0 0
    %2027 = vmatpush.bf16.xpose.msra.mxu0 %v2018
    %2028 = vmatmul.bf16.gmra.mxu0 %v2015
    %v2029 = vpop.f32.mrf.mxu0
    %v2030 = vadd.f32 0.0, %v2029
    %v2031 = vpop.f32.mrf.mxu0
    %2032 = vdwg.mxu0
    %v2034 = vsel %vm1614, %v1539, 0
    %v2037 = vsel %vm1614, %v1595, 0
    %2039 = vmatpush.bf16.xpose.msra.mxu0 0
    %2040 = vmatpush.bf16.xpose.msra.mxu0 0
    %2041 = vmatpush.bf16.xpose.msra.mxu0 0
    %2042 = vmatpush.bf16.xpose.msra.mxu0 0
    %2043 = vmatpush.bf16.xpose.msra.mxu0 0
    %2044 = vmatpush.bf16.xpose.msra.mxu0 0
    %2045 = vmatpush.bf16.xpose.msra.mxu0 0
    %2046 = vmatpush.bf16.xpose.msra.mxu0 %v2037
    %2047 = vmatmul.bf16.gmra.mxu0 %v2034
    %v2048 = vpop.f32.mrf.mxu0
    %v2049 = vadd.f32 0.0, %v2048
    %v2050 = vpop.f32.mrf.mxu0
    %2051 = vdwg.mxu0
    %v2053 = vsel %vm1614, %v1541, 0
    %v2056 = vsel %vm1614, %v1597, 0
    %2058 = vmatpush.bf16.xpose.msra.mxu0 0
    %2059 = vmatpush.bf16.xpose.msra.mxu0 0
    %2060 = vmatpush.bf16.xpose.msra.mxu0 0
    %2061 = vmatpush.bf16.xpose.msra.mxu0 0
    %2062 = vmatpush.bf16.xpose.msra.mxu0 0
    %2063 = vmatpush.bf16.xpose.msra.mxu0 0
    %2064 = vmatpush.bf16.xpose.msra.mxu0 0
    %2065 = vmatpush.bf16.xpose.msra.mxu0 %v2056
    %2066 = vmatmul.bf16.gmra.mxu0 %v2053
    %v2067 = vpop.f32.mrf.mxu0
    %v2068 = vadd.f32 0.0, %v2067
    %v2069 = vpop.f32.mrf.mxu0
    %2070 = vdwg.mxu0
    %v2072 = vsel %vm1614, %v1543, 0
    %v2075 = vsel %vm1614, %v1599, 0
    %2077 = vmatpush.bf16.xpose.msra.mxu0 0
    %2078 = vmatpush.bf16.xpose.msra.mxu0 0
    %2079 = vmatpush.bf16.xpose.msra.mxu0 0
    %2080 = vmatpush.bf16.xpose.msra.mxu0 0
    %2081 = vmatpush.bf16.xpose.msra.mxu0 0
    %2082 = vmatpush.bf16.xpose.msra.mxu0 0
    %2083 = vmatpush.bf16.xpose.msra.mxu0 0
    %2084 = vmatpush.bf16.xpose.msra.mxu0 %v2075
    %2085 = vmatmul.bf16.gmra.mxu0 %v2072
    %v2086 = vpop.f32.mrf.mxu0
    %v2087 = vadd.f32 0.0, %v2086
    %v2088 = vpop.f32.mrf.mxu0
    %2089 = vdwg.mxu0
    %v2091 = vsel %vm1614, %v1545, 0
    %v2094 = vsel %vm1614, %v1601, 0
    %2096 = vmatpush.bf16.xpose.msra.mxu0 0
    %2097 = vmatpush.bf16.xpose.msra.mxu0 0
    %2098 = vmatpush.bf16.xpose.msra.mxu0 0
    %2099 = vmatpush.bf16.xpose.msra.mxu0 0
    %2100 = vmatpush.bf16.xpose.msra.mxu0 0
    %2101 = vmatpush.bf16.xpose.msra.mxu0 0
    %2102 = vmatpush.bf16.xpose.msra.mxu0 0
    %2103 = vmatpush.bf16.xpose.msra.mxu0 %v2094
    %2104 = vmatmul.bf16.gmra.mxu0 %v2091
    %v2105 = vpop.f32.mrf.mxu0
    %v2106 = vadd.f32 0.0, %v2105
    %v2107 = vpop.f32.mrf.mxu0
    %2108 = vdwg.mxu0
    %v2110 = vsel %vm1614, %v1547, 0
    %v2113 = vsel %vm1614, %v1603, 0
    %2115 = vmatpush.bf16.xpose.msra.mxu0 0
    %2116 = vmatpush.bf16.xpose.msra.mxu0 0
    %2117 = vmatpush.bf16.xpose.msra.mxu0 0
    %2118 = vmatpush.bf16.xpose.msra.mxu0 0
    %2119 = vmatpush.bf16.xpose.msra.mxu0 0
    %2120 = vmatpush.bf16.xpose.msra.mxu0 0
    %2121 = vmatpush.bf16.xpose.msra.mxu0 0
    %2122 = vmatpush.bf16.xpose.msra.mxu0 %v2113
    %2123 = vmatmul.bf16.gmra.mxu0 %v2110
    %v2124 = vpop.f32.mrf.mxu0
    %v2125 = vadd.f32 0.0, %v2124
    %v2126 = vpop.f32.mrf.mxu0
    %2127 = vdwg.mxu0
    %v2129 = vsel %vm1614, %v1549, 0
    %v2132 = vsel %vm1614, %v1605, 0
    %2134 = vmatpush.bf16.xpose.msra.mxu0 0
    %2135 = vmatpush.bf16.xpose.msra.mxu0 0
    %2136 = vmatpush.bf16.xpose.msra.mxu0 0
    %2137 = vmatpush.bf16.xpose.msra.mxu0 0
    %2138 = vmatpush.bf16.xpose.msra.mxu0 0
    %2139 = vmatpush.bf16.xpose.msra.mxu0 0
    %2140 = vmatpush.bf16.xpose.msra.mxu0 0
    %2141 = vmatpush.bf16.xpose.msra.mxu0 %v2132
    %2142 = vmatmul.bf16.gmra.mxu0 %v2129
    %v2143 = vpop.f32.mrf.mxu0
    %v2144 = vadd.f32 0.0, %v2143
    %v2145 = vpop.f32.mrf.mxu0
    %2146 = vdwg.mxu0
    %v2148 = vsel %vm1614, %v1551, 0
    %v2151 = vsel %vm1614, %v1607, 0
    %2153 = vmatpush.bf16.xpose.msra.mxu0 0
    %2154 = vmatpush.bf16.xpose.msra.mxu0 0
    %2155 = vmatpush.bf16.xpose.msra.mxu0 0
    %2156 = vmatpush.bf16.xpose.msra.mxu0 0
    %2157 = vmatpush.bf16.xpose.msra.mxu0 0
    %2158 = vmatpush.bf16.xpose.msra.mxu0 0
    %2159 = vmatpush.bf16.xpose.msra.mxu0 0
    %2160 = vmatpush.bf16.xpose.msra.mxu0 %v2151
    %2161 = vmatmul.bf16.gmra.mxu0 %v2148
    %v2162 = vpop.f32.mrf.mxu0
    %v2163 = vadd.f32 0.0, %v2162
    %v2164 = vpop.f32.mrf.mxu0
    %2165 = vdwg.mxu0
    %v2167 = vsel %vm1614, %v1553, 0
    %v2170 = vsel %vm1614, %v1609, 0
    %2172 = vmatpush.bf16.xpose.msra.mxu0 0
    %2173 = vmatpush.bf16.xpose.msra.mxu0 0
    %2174 = vmatpush.bf16.xpose.msra.mxu0 0
    %2175 = vmatpush.bf16.xpose.msra.mxu0 0
    %2176 = vmatpush.bf16.xpose.msra.mxu0 0
    %2177 = vmatpush.bf16.xpose.msra.mxu0 0
    %2178 = vmatpush.bf16.xpose.msra.mxu0 0
    %2179 = vmatpush.bf16.xpose.msra.mxu0 %v2170
    %2180 = vmatmul.bf16.gmra.mxu0 %v2167
    %v2181 = vpop.f32.mrf.mxu0
    %v2182 = vadd.f32 0.0, %v2181
    %v2183 = vpop.f32.mrf.mxu0
    %2184 = vdwg.mxu0
    %v2186 = vsel %vm1614, %v1555, 0
    %v2189 = vsel %vm1614, %v1611, 0
    %2191 = vmatpush.bf16.xpose.msra.mxu0 0
    %2192 = vmatpush.bf16.xpose.msra.mxu0 0
    %2193 = vmatpush.bf16.xpose.msra.mxu0 0
    %2194 = vmatpush.bf16.xpose.msra.mxu0 0
    %2195 = vmatpush.bf16.xpose.msra.mxu0 0
    %2196 = vmatpush.bf16.xpose.msra.mxu0 0
    %2197 = vmatpush.bf16.xpose.msra.mxu0 0
    %2198 = vmatpush.bf16.xpose.msra.mxu0 %v2189
    %2199 = vmatmul.bf16.gmra.mxu0 %v2186
    %v2200 = vpop.f32.mrf.mxu0
    %v2201 = vadd.f32 0.0, %v2200
    %v2202 = vpop.f32.mrf.mxu0
    %2203 = vdwg.mxu0
    %v2205 = vsel %vm1614, %v1557, 0
    %v2208 = vsel %vm1614, %v1613, 0
    %2210 = vmatpush.bf16.xpose.msra.mxu0 0
    %2211 = vmatpush.bf16.xpose.msra.mxu0 0
    %2212 = vmatpush.bf16.xpose.msra.mxu0 0
    %2213 = vmatpush.bf16.xpose.msra.mxu0 0
    %2214 = vmatpush.bf16.xpose.msra.mxu0 0
    %2215 = vmatpush.bf16.xpose.msra.mxu0 0
    %2216 = vmatpush.bf16.xpose.msra.mxu0 0
    %2217 = vmatpush.bf16.xpose.msra.mxu0 %v2208
    %2218 = vmatmul.bf16.gmra.mxu0 %v2205
    %v2219 = vpop.f32.mrf.mxu0
    %v2220 = vadd.f32 0.0, %v2219
    %v2221 = vpop.f32.mrf.mxu0
    %2222 = vdwg.mxu0
    %v2223 = vsel %vm208, %v1631, -inf
    %2224 = vmax.xlane.f32.xlu0 %v2223
    %v2225 = vpop.xlane.xlu0 %2224
    %v2226 = vsel %vm208, %v1650, -inf
    %2227 = vmax.xlane.f32.xlu0 %v2226
    %v2228 = vpop.xlane.xlu0 %2227
    %v2229 = vsel %vm208, %v1669, -inf
    %2230 = vmax.xlane.f32.xlu0 %v2229
    %v2231 = vpop.xlane.xlu0 %2230
    %v2232 = vsel %vm208, %v1688, -inf
    %2233 = vmax.xlane.f32.xlu0 %v2232
    %v2234 = vpop.xlane.xlu0 %2233
    %v2235 = vsel %vm208, %v1707, -inf
    %2236 = vmax.xlane.f32.xlu0 %v2235
    %v2237 = vpop.xlane.xlu0 %2236
    %v2238 = vsel %vm208, %v1726, -inf
    %2239 = vmax.xlane.f32.xlu0 %v2238
    %v2240 = vpop.xlane.xlu0 %2239
    %v2241 = vsel %vm208, %v1745, -inf
    %2242 = vmax.xlane.f32.xlu0 %v2241
    %v2243 = vpop.xlane.xlu0 %2242
    %v2244 = vsel %vm208, %v1764, -inf
    %2245 = vmax.xlane.f32.xlu0 %v2244
    %v2246 = vpop.xlane.xlu0 %2245
    %v2247 = vsel %vm208, %v1783, -inf
    %2248 = vmax.xlane.f32.xlu0 %v2247
    %v2249 = vpop.xlane.xlu0 %2248
    %v2250 = vsel %vm208, %v1802, -inf
    %2251 = vmax.xlane.f32.xlu0 %v2250
    %v2252 = vpop.xlane.xlu0 %2251
    %v2253 = vsel %vm208, %v1821, -inf
    %2254 = vmax.xlane.f32.xlu0 %v2253
    %v2255 = vpop.xlane.xlu0 %2254
    %v2256 = vsel %vm208, %v1840, -inf
    %2257 = vmax.xlane.f32.xlu0 %v2256
    %v2258 = vpop.xlane.xlu0 %2257
    %v2259 = vsel %vm208, %v1859, -inf
    %2260 = vmax.xlane.f32.xlu0 %v2259
    %v2261 = vpop.xlane.xlu0 %2260
    %v2262 = vsel %vm208, %v1878, -inf
    %2263 = vmax.xlane.f32.xlu0 %v2262
    %v2264 = vpop.xlane.xlu0 %2263
    %v2265 = vsel %vm208, %v1897, -inf
    %2266 = vmax.xlane.f32.xlu0 %v2265
    %v2267 = vpop.xlane.xlu0 %2266
    %v2268 = vsel %vm208, %v1916, -inf
    %2269 = vmax.xlane.f32.xlu0 %v2268
    %v2270 = vpop.xlane.xlu0 %2269
    %v2271 = vsel %vm208, %v1935, -inf
    %2272 = vmax.xlane.f32.xlu0 %v2271
    %v2273 = vpop.xlane.xlu0 %2272
    %v2274 = vsel %vm208, %v1954, -inf
    %2275 = vmax.xlane.f32.xlu0 %v2274
    %v2276 = vpop.xlane.xlu0 %2275
    %v2277 = vsel %vm208, %v1973, -inf
    %2278 = vmax.xlane.f32.xlu0 %v2277
    %v2279 = vpop.xlane.xlu0 %2278
    %v2280 = vsel %vm208, %v1992, -inf
    %2281 = vmax.xlane.f32.xlu0 %v2280
    %v2282 = vpop.xlane.xlu0 %2281
    %v2283 = vsel %vm208, %v2011, -inf
    %2284 = vmax.xlane.f32.xlu0 %v2283
    %v2285 = vpop.xlane.xlu0 %2284
    %v2286 = vsel %vm208, %v2030, -inf
    %2287 = vmax.xlane.f32.xlu0 %v2286
    %v2288 = vpop.xlane.xlu0 %2287
    %v2289 = vsel %vm208, %v2049, -inf
    %2290 = vmax.xlane.f32.xlu0 %v2289
    %v2291 = vpop.xlane.xlu0 %2290
    %v2292 = vsel %vm208, %v2068, -inf
    %2293 = vmax.xlane.f32.xlu0 %v2292
    %v2294 = vpop.xlane.xlu0 %2293
    %v2295 = vsel %vm208, %v2087, -inf
    %2296 = vmax.xlane.f32.xlu0 %v2295
    %v2297 = vpop.xlane.xlu0 %2296
    %v2298 = vsel %vm208, %v2106, -inf
    %2299 = vmax.xlane.f32.xlu0 %v2298
    %v2300 = vpop.xlane.xlu0 %2299
    %v2301 = vsel %vm208, %v2125, -inf
    %2302 = vmax.xlane.f32.xlu0 %v2301
    %v2303 = vpop.xlane.xlu0 %2302
    %v2304 = vsel %vm208, %v2144, -inf
    %2305 = vmax.xlane.f32.xlu0 %v2304
    %v2306 = vpop.xlane.xlu0 %2305
    %v2307 = vsel %vm208, %v2163, -inf
    %2308 = vmax.xlane.f32.xlu0 %v2307
    %v2309 = vpop.xlane.xlu0 %2308
    %v2310 = vsel %vm208, %v2182, -inf
    %2311 = vmax.xlane.f32.xlu0 %v2310
    %v2312 = vpop.xlane.xlu0 %2311
    %v2313 = vsel %vm208, %v2201, -inf
    %2314 = vmax.xlane.f32.xlu0 %v2313
    %v2315 = vpop.xlane.xlu0 %2314
    %v2316 = vsel %vm208, %v2220, -inf
    %2317 = vmax.xlane.f32.xlu0 %v2316
    %v2318 = vpop.xlane.xlu0 %2317
    %v2319 = vsub.f32 %v1631, %v2225
    %v2320 = vsub.f32 %v1650, %v2228
    %v2321 = vsub.f32 %v1669, %v2231
    %v2322 = vsub.f32 %v1688, %v2234
    %v2323 = vsub.f32 %v1707, %v2237
    %v2324 = vsub.f32 %v1726, %v2240
    %v2325 = vsub.f32 %v1745, %v2243
    %v2326 = vsub.f32 %v1764, %v2246
    %v2327 = vsub.f32 %v1783, %v2249
    %v2328 = vsub.f32 %v1802, %v2252
    %v2329 = vsub.f32 %v1821, %v2255
    %v2330 = vsub.f32 %v1840, %v2258
    %v2331 = vsub.f32 %v1859, %v2261
    %v2332 = vsub.f32 %v1878, %v2264
    %v2333 = vsub.f32 %v1897, %v2267
    %v2334 = vsub.f32 %v1916, %v2270
    %v2335 = vsub.f32 %v1935, %v2273
    %v2336 = vsub.f32 %v1954, %v2276
    %v2337 = vsub.f32 %v1973, %v2279
    %v2338 = vsub.f32 %v1992, %v2282
    %v2339 = vsub.f32 %v2011, %v2285
    %v2340 = vsub.f32 %v2030, %v2288
    %v2341 = vsub.f32 %v2049, %v2291
    %v2342 = vsub.f32 %v2068, %v2294
    %v2343 = vsub.f32 %v2087, %v2297
    %v2344 = vsub.f32 %v2106, %v2300
    %v2345 = vsub.f32 %v2125, %v2303
    %v2346 = vsub.f32 %v2144, %v2306
    %v2347 = vsub.f32 %v2163, %v2309
    %v2348 = vsub.f32 %v2182, %v2312
    %v2349 = vsub.f32 %v2201, %v2315
    %v2350 = vsub.f32 %v2220, %v2318
    %v2351 = vmul.f32 %v2319, 1.442695
    %v2352 = vpow.pop %v2351
    %v2353 = vmul.f32 %v2320, 1.442695
    %v2354 = vpow.pop %v2353
    %v2355 = vmul.f32 %v2321, 1.442695
    %v2356 = vpow.pop %v2355
    %v2357 = vmul.f32 %v2322, 1.442695
    %v2358 = vpow.pop %v2357
    %v2359 = vmul.f32 %v2323, 1.442695
    %v2360 = vpow.pop %v2359
    %v2361 = vmul.f32 %v2324, 1.442695
    %v2362 = vpow.pop %v2361
    %v2363 = vmul.f32 %v2325, 1.442695
    %v2364 = vpow.pop %v2363
    %v2365 = vmul.f32 %v2326, 1.442695
    %v2366 = vpow.pop %v2365
    %v2367 = vmul.f32 %v2327, 1.442695
    %v2368 = vpow.pop %v2367
    %v2369 = vmul.f32 %v2328, 1.442695
    %v2370 = vpow.pop %v2369
    %v2371 = vmul.f32 %v2329, 1.442695
    %v2372 = vpow.pop %v2371
    %v2373 = vmul.f32 %v2330, 1.442695
    %v2374 = vpow.pop %v2373
    %v2375 = vmul.f32 %v2331, 1.442695
    %v2376 = vpow.pop %v2375
    %v2377 = vmul.f32 %v2332, 1.442695
    %v2378 = vpow.pop %v2377
    %v2379 = vmul.f32 %v2333, 1.442695
    %v2380 = vpow.pop %v2379
    %v2381 = vmul.f32 %v2334, 1.442695
    %v2382 = vpow.pop %v2381
    %v2383 = vmul.f32 %v2335, 1.442695
    %v2384 = vpow.pop %v2383
    %v2385 = vmul.f32 %v2336, 1.442695
    %v2386 = vpow.pop %v2385
    %v2387 = vmul.f32 %v2337, 1.442695
    %v2388 = vpow.pop %v2387
    %v2389 = vmul.f32 %v2338, 1.442695
    %v2390 = vpow.pop %v2389
    %v2391 = vmul.f32 %v2339, 1.442695
    %v2392 = vpow.pop %v2391
    %v2393 = vmul.f32 %v2340, 1.442695
    %v2394 = vpow.pop %v2393
    %v2395 = vmul.f32 %v2341, 1.442695
    %v2396 = vpow.pop %v2395
    %v2397 = vmul.f32 %v2342, 1.442695
    %v2398 = vpow.pop %v2397
    %v2399 = vmul.f32 %v2343, 1.442695
    %v2400 = vpow.pop %v2399
    %v2401 = vmul.f32 %v2344, 1.442695
    %v2402 = vpow.pop %v2401
    %v2403 = vmul.f32 %v2345, 1.442695
    %v2404 = vpow.pop %v2403
    %v2405 = vmul.f32 %v2346, 1.442695
    %v2406 = vpow.pop %v2405
    %v2407 = vmul.f32 %v2347, 1.442695
    %v2408 = vpow.pop %v2407
    %v2409 = vmul.f32 %v2348, 1.442695
    %v2410 = vpow.pop %v2409
    %v2411 = vmul.f32 %v2349, 1.442695
    %v2412 = vpow.pop %v2411
    %v2413 = vmul.f32 %v2350, 1.442695
    %v2414 = vpow.pop %v2413
    %v2415 = vsel %vm208, %v2352, 0.0
    %2416 = vadd.xlane.f32.xlu0 %v2415
    %v2417 = vpop.xlane.xlu0 %2416
    %v2418 = vsel %vm208, %v2354, 0.0
    %2419 = vadd.xlane.f32.xlu0 %v2418
    %v2420 = vpop.xlane.xlu0 %2419
    %v2421 = vsel %vm208, %v2356, 0.0
    %2422 = vadd.xlane.f32.xlu0 %v2421
    %v2423 = vpop.xlane.xlu0 %2422
    %v2424 = vsel %vm208, %v2358, 0.0
    %2425 = vadd.xlane.f32.xlu0 %v2424
    %v2426 = vpop.xlane.xlu0 %2425
    %v2427 = vsel %vm208, %v2360, 0.0
    %2428 = vadd.xlane.f32.xlu0 %v2427
    %v2429 = vpop.xlane.xlu0 %2428
    %v2430 = vsel %vm208, %v2362, 0.0
    %2431 = vadd.xlane.f32.xlu0 %v2430
    %v2432 = vpop.xlane.xlu0 %2431
    %v2433 = vsel %vm208, %v2364, 0.0
    %2434 = vadd.xlane.f32.xlu0 %v2433
    %v2435 = vpop.xlane.xlu0 %2434
    %v2436 = vsel %vm208, %v2366, 0.0
    %2437 = vadd.xlane.f32.xlu0 %v2436
    %v2438 = vpop.xlane.xlu0 %2437
    %v2439 = vsel %vm208, %v2368, 0.0
    %2440 = vadd.xlane.f32.xlu0 %v2439
    %v2441 = vpop.xlane.xlu0 %2440
    %v2442 = vsel %vm208, %v2370, 0.0
    %2443 = vadd.xlane.f32.xlu0 %v2442
    %v2444 = vpop.xlane.xlu0 %2443
    %v2445 = vsel %vm208, %v2372, 0.0
    %2446 = vadd.xlane.f32.xlu0 %v2445
    %v2447 = vpop.xlane.xlu0 %2446
    %v2448 = vsel %vm208, %v2374, 0.0
    %2449 = vadd.xlane.f32.xlu0 %v2448
    %v2450 = vpop.xlane.xlu0 %2449
    %v2451 = vsel %vm208, %v2376, 0.0
    %2452 = vadd.xlane.f32.xlu0 %v2451
    %v2453 = vpop.xlane.xlu0 %2452
    %v2454 = vsel %vm208, %v2378, 0.0
    %2455 = vadd.xlane.f32.xlu0 %v2454
    %v2456 = vpop.xlane.xlu0 %2455
    %v2457 = vsel %vm208, %v2380, 0.0
    %2458 = vadd.xlane.f32.xlu0 %v2457
    %v2459 = vpop.xlane.xlu0 %2458
    %v2460 = vsel %vm208, %v2382, 0.0
    %2461 = vadd.xlane.f32.xlu0 %v2460
    %v2462 = vpop.xlane.xlu0 %2461
    %v2463 = vsel %vm208, %v2384, 0.0
    %2464 = vadd.xlane.f32.xlu0 %v2463
    %v2465 = vpop.xlane.xlu0 %2464
    %v2466 = vsel %vm208, %v2386, 0.0
    %2467 = vadd.xlane.f32.xlu0 %v2466
    %v2468 = vpop.xlane.xlu0 %2467
    %v2469 = vsel %vm208, %v2388, 0.0
    %2470 = vadd.xlane.f32.xlu0 %v2469
    %v2471 = vpop.xlane.xlu0 %2470
    %v2472 = vsel %vm208, %v2390, 0.0
    %2473 = vadd.xlane.f32.xlu0 %v2472
    %v2474 = vpop.xlane.xlu0 %2473
    %v2475 = vsel %vm208, %v2392, 0.0
    %2476 = vadd.xlane.f32.xlu0 %v2475
    %v2477 = vpop.xlane.xlu0 %2476
    %v2478 = vsel %vm208, %v2394, 0.0
    %2479 = vadd.xlane.f32.xlu0 %v2478
    %v2480 = vpop.xlane.xlu0 %2479
    %v2481 = vsel %vm208, %v2396, 0.0
    %2482 = vadd.xlane.f32.xlu0 %v2481
    %v2483 = vpop.xlane.xlu0 %2482
    %v2484 = vsel %vm208, %v2398, 0.0
    %2485 = vadd.xlane.f32.xlu0 %v2484
    %v2486 = vpop.xlane.xlu0 %2485
    %v2487 = vsel %vm208, %v2400, 0.0
    %2488 = vadd.xlane.f32.xlu0 %v2487
    %v2489 = vpop.xlane.xlu0 %2488
    %v2490 = vsel %vm208, %v2402, 0.0
    %2491 = vadd.xlane.f32.xlu0 %v2490
    %v2492 = vpop.xlane.xlu0 %2491
    %v2493 = vsel %vm208, %v2404, 0.0
    %2494 = vadd.xlane.f32.xlu0 %v2493
    %v2495 = vpop.xlane.xlu0 %2494
    %v2496 = vsel %vm208, %v2406, 0.0
    %2497 = vadd.xlane.f32.xlu0 %v2496
    %v2498 = vpop.xlane.xlu0 %2497
    %v2499 = vsel %vm208, %v2408, 0.0
    %2500 = vadd.xlane.f32.xlu0 %v2499
    %v2501 = vpop.xlane.xlu0 %2500
    %v2502 = vsel %vm208, %v2410, 0.0
    %2503 = vadd.xlane.f32.xlu0 %v2502
    %v2504 = vpop.xlane.xlu0 %2503
    %v2505 = vsel %vm208, %v2412, 0.0
    %2506 = vadd.xlane.f32.xlu0 %v2505
    %v2507 = vpop.xlane.xlu0 %2506
    %v2508 = vsel %vm208, %v2414, 0.0
    %2509 = vadd.xlane.f32.xlu0 %v2508
    %v2510 = vpop.xlane.xlu0 %2509
    %v2511 = vrcp.pop %v2417
    %v2512 = vrcp.pop %v2420
    %v2513 = vrcp.pop %v2423
    %v2514 = vrcp.pop %v2426
    %v2515 = vrcp.pop %v2429
    %v2516 = vrcp.pop %v2432
    %v2517 = vrcp.pop %v2435
    %v2518 = vrcp.pop %v2438
    %v2519 = vrcp.pop %v2441
    %v2520 = vrcp.pop %v2444
    %v2521 = vrcp.pop %v2447
    %v2522 = vrcp.pop %v2450
    %v2523 = vrcp.pop %v2453
    %v2524 = vrcp.pop %v2456
    %v2525 = vrcp.pop %v2459
    %v2526 = vrcp.pop %v2462
    %v2527 = vrcp.pop %v2465
    %v2528 = vrcp.pop %v2468
    %v2529 = vrcp.pop %v2471
    %v2530 = vrcp.pop %v2474
    %v2531 = vrcp.pop %v2477
    %v2532 = vrcp.pop %v2480
    %v2533 = vrcp.pop %v2483
    %v2534 = vrcp.pop %v2486
    %v2535 = vrcp.pop %v2489
    %v2536 = vrcp.pop %v2492
    %v2537 = vrcp.pop %v2495
    %v2538 = vrcp.pop %v2498
    %v2539 = vrcp.pop %v2501
    %v2540 = vrcp.pop %v2504
    %v2541 = vrcp.pop %v2507
    %v2542 = vrcp.pop %v2510
    %v2543 = vmul.f32 %v2352, %v2511
    %v2544 = vmul.f32 %v2354, %v2512
    %v2545 = vmul.f32 %v2356, %v2513
    %v2546 = vmul.f32 %v2358, %v2514
    %v2547 = vmul.f32 %v2360, %v2515
    %v2548 = vmul.f32 %v2362, %v2516
    %v2549 = vmul.f32 %v2364, %v2517
    %v2550 = vmul.f32 %v2366, %v2518
    %v2551 = vmul.f32 %v2368, %v2519
    %v2552 = vmul.f32 %v2370, %v2520
    %v2553 = vmul.f32 %v2372, %v2521
    %v2554 = vmul.f32 %v2374, %v2522
    %v2555 = vmul.f32 %v2376, %v2523
    %v2556 = vmul.f32 %v2378, %v2524
    %v2557 = vmul.f32 %v2380, %v2525
    %v2558 = vmul.f32 %v2382, %v2526
    %v2559 = vmul.f32 %v2384, %v2527
    %v2560 = vmul.f32 %v2386, %v2528
    %v2561 = vmul.f32 %v2388, %v2529
    %v2562 = vmul.f32 %v2390, %v2530
    %v2563 = vmul.f32 %v2392, %v2531
    %v2564 = vmul.f32 %v2394, %v2532
    %v2565 = vmul.f32 %v2396, %v2533
    %v2566 = vmul.f32 %v2398, %v2534
    %v2567 = vmul.f32 %v2400, %v2535
    %v2568 = vmul.f32 %v2402, %v2536
    %v2569 = vmul.f32 %v2404, %v2537
    %v2570 = vmul.f32 %v2406, %v2538
    %v2571 = vmul.f32 %v2408, %v2539
    %v2572 = vmul.f32 %v2410, %v2540
    %v2573 = vmul.f32 %v2412, %v2541
    %v2574 = vmul.f32 %v2414, %v2542
    %v2575 = vpack.c.bf16 %v2543, %v2543
    %v2576 = vpack.c.bf16 %v2544, %v2544
    %v2577 = vpack.c.bf16 %v2545, %v2545
    %v2578 = vpack.c.bf16 %v2546, %v2546
    %v2579 = vpack.c.bf16 %v2547, %v2547
    %v2580 = vpack.c.bf16 %v2548, %v2548
    %v2581 = vpack.c.bf16 %v2549, %v2549
    %v2582 = vpack.c.bf16 %v2550, %v2550
    %v2583 = vpack.c.bf16 %v2551, %v2551
    %v2584 = vpack.c.bf16 %v2552, %v2552
    %v2585 = vpack.c.bf16 %v2553, %v2553
    %v2586 = vpack.c.bf16 %v2554, %v2554
    %v2587 = vpack.c.bf16 %v2555, %v2555
    %v2588 = vpack.c.bf16 %v2556, %v2556
    %v2589 = vpack.c.bf16 %v2557, %v2557
    %v2590 = vpack.c.bf16 %v2558, %v2558
    %v2591 = vpack.c.bf16 %v2559, %v2559
    %v2592 = vpack.c.bf16 %v2560, %v2560
    %v2593 = vpack.c.bf16 %v2561, %v2561
    %v2594 = vpack.c.bf16 %v2562, %v2562
    %v2595 = vpack.c.bf16 %v2563, %v2563
    %v2596 = vpack.c.bf16 %v2564, %v2564
    %v2597 = vpack.c.bf16 %v2565, %v2565
    %v2598 = vpack.c.bf16 %v2566, %v2566
    %v2599 = vpack.c.bf16 %v2567, %v2567
    %v2600 = vpack.c.bf16 %v2568, %v2568
    %v2601 = vpack.c.bf16 %v2569, %v2569
    %v2602 = vpack.c.bf16 %v2570, %v2570
    %v2603 = vpack.c.bf16 %v2571, %v2571
    %v2604 = vpack.c.bf16 %v2572, %v2572
    %v2605 = vpack.c.bf16 %v2573, %v2573
    %v2606 = vpack.c.bf16 %v2574, %v2574
    %v2607 = vunpack.c.l.b16 %v1494
    %v2608 = vpack.c.b16 %v2607, %v2607
    %2609 = vrot.lane.b32.xlu0 %v2608, 64
    %v2610 = vpop.permute.xlu0 %2609
    %v2612 = vsel %vm208, %v2575, 0
    %v2615 = vsel %vm212, %v2610, 0
    %2617 = vmatpush.bf16.msra.mxu0 0
    %2618 = vmatpush.bf16.msra.mxu0 0
    %2619 = vmatpush.bf16.msra.mxu0 0
    %2620 = vmatpush.bf16.msra.mxu0 0
    %2621 = vmatpush.bf16.msra.mxu0 0
    %2622 = vmatpush.bf16.msra.mxu0 0
    %2623 = vmatpush.bf16.msra.mxu0 0
    %2624 = vmatpush.bf16.msra.mxu0 %v2615
    %2625 = vmatmul.bf16.gmra.mxu0 %v2612
    %v2626 = vpop.f32.mrf.mxu0
    %v2627 = vadd.f32 0.0, %v2626
    %v2628 = vpop.f32.mrf.mxu0
    %2629 = vdwg.mxu0
    %v2630 = vunpack.c.l.b16 %v1495
    %v2631 = vpack.c.b16 %v2630, %v2630
    %2632 = vrot.lane.b32.xlu0 %v2631, 64
    %v2633 = vpop.permute.xlu0 %2632
    %v2635 = vsel %vm208, %v2576, 0
    %v2638 = vsel %vm212, %v2633, 0
    %2640 = vmatpush.bf16.msra.mxu0 0
    %2641 = vmatpush.bf16.msra.mxu0 0
    %2642 = vmatpush.bf16.msra.mxu0 0
    %2643 = vmatpush.bf16.msra.mxu0 0
    %2644 = vmatpush.bf16.msra.mxu0 0
    %2645 = vmatpush.bf16.msra.mxu0 0
    %2646 = vmatpush.bf16.msra.mxu0 0
    %2647 = vmatpush.bf16.msra.mxu0 %v2638
    %2648 = vmatmul.bf16.gmra.mxu0 %v2635
    %v2649 = vpop.f32.mrf.mxu0
    %v2650 = vadd.f32 0.0, %v2649
    %v2651 = vpop.f32.mrf.mxu0
    %2652 = vdwg.mxu0
    %v2653 = vunpack.c.l.b16 %v1496
    %v2654 = vpack.c.b16 %v2653, %v2653
    %2655 = vrot.lane.b32.xlu0 %v2654, 64
    %v2656 = vpop.permute.xlu0 %2655
    %v2658 = vsel %vm208, %v2577, 0
    %v2661 = vsel %vm212, %v2656, 0
    %2663 = vmatpush.bf16.msra.mxu0 0
    %2664 = vmatpush.bf16.msra.mxu0 0
    %2665 = vmatpush.bf16.msra.mxu0 0
    %2666 = vmatpush.bf16.msra.mxu0 0
    %2667 = vmatpush.bf16.msra.mxu0 0
    %2668 = vmatpush.bf16.msra.mxu0 0
    %2669 = vmatpush.bf16.msra.mxu0 0
    %2670 = vmatpush.bf16.msra.mxu0 %v2661
    %2671 = vmatmul.bf16.gmra.mxu0 %v2658
    %v2672 = vpop.f32.mrf.mxu0
    %v2673 = vadd.f32 0.0, %v2672
    %v2674 = vpop.f32.mrf.mxu0
    %2675 = vdwg.mxu0
    %v2676 = vunpack.c.l.b16 %v1497
    %v2677 = vpack.c.b16 %v2676, %v2676
    %2678 = vrot.lane.b32.xlu0 %v2677, 64
    %v2679 = vpop.permute.xlu0 %2678
    %v2681 = vsel %vm208, %v2578, 0
    %v2684 = vsel %vm212, %v2679, 0
    %2686 = vmatpush.bf16.msra.mxu0 0
    %2687 = vmatpush.bf16.msra.mxu0 0
    %2688 = vmatpush.bf16.msra.mxu0 0
    %2689 = vmatpush.bf16.msra.mxu0 0
    %2690 = vmatpush.bf16.msra.mxu0 0
    %2691 = vmatpush.bf16.msra.mxu0 0
    %2692 = vmatpush.bf16.msra.mxu0 0
    %2693 = vmatpush.bf16.msra.mxu0 %v2684
    %2694 = vmatmul.bf16.gmra.mxu0 %v2681
    %v2695 = vpop.f32.mrf.mxu0
    %v2696 = vadd.f32 0.0, %v2695
    %v2697 = vpop.f32.mrf.mxu0
    %2698 = vdwg.mxu0
    %v2699 = vunpack.c.l.b16 %v1498
    %v2700 = vpack.c.b16 %v2699, %v2699
    %2701 = vrot.lane.b32.xlu0 %v2700, 64
    %v2702 = vpop.permute.xlu0 %2701
    %v2704 = vsel %vm208, %v2579, 0
    %v2707 = vsel %vm212, %v2702, 0
    %2709 = vmatpush.bf16.msra.mxu0 0
    %2710 = vmatpush.bf16.msra.mxu0 0
    %2711 = vmatpush.bf16.msra.mxu0 0
    %2712 = vmatpush.bf16.msra.mxu0 0
    %2713 = vmatpush.bf16.msra.mxu0 0
    %2714 = vmatpush.bf16.msra.mxu0 0
    %2715 = vmatpush.bf16.msra.mxu0 0
    %2716 = vmatpush.bf16.msra.mxu0 %v2707
    %2717 = vmatmul.bf16.gmra.mxu0 %v2704
    %v2718 = vpop.f32.mrf.mxu0
    %v2719 = vadd.f32 0.0, %v2718
    %v2720 = vpop.f32.mrf.mxu0
    %2721 = vdwg.mxu0
    %v2722 = vunpack.c.l.b16 %v1499
    %v2723 = vpack.c.b16 %v2722, %v2722
    %2724 = vrot.lane.b32.xlu0 %v2723, 64
    %v2725 = vpop.permute.xlu0 %2724
    %v2727 = vsel %vm208, %v2580, 0
    %v2730 = vsel %vm212, %v2725, 0
    %2732 = vmatpush.bf16.msra.mxu0 0
    %2733 = vmatpush.bf16.msra.mxu0 0
    %2734 = vmatpush.bf16.msra.mxu0 0
    %2735 = vmatpush.bf16.msra.mxu0 0
    %2736 = vmatpush.bf16.msra.mxu0 0
    %2737 = vmatpush.bf16.msra.mxu0 0
    %2738 = vmatpush.bf16.msra.mxu0 0
    %2739 = vmatpush.bf16.msra.mxu0 %v2730
    %2740 = vmatmul.bf16.gmra.mxu0 %v2727
    %v2741 = vpop.f32.mrf.mxu0
    %v2742 = vadd.f32 0.0, %v2741
    %v2743 = vpop.f32.mrf.mxu0
    %2744 = vdwg.mxu0
    %v2745 = vunpack.c.l.b16 %v1500
    %v2746 = vpack.c.b16 %v2745, %v2745
    %2747 = vrot.lane.b32.xlu0 %v2746, 64
    %v2748 = vpop.permute.xlu0 %2747
    %v2750 = vsel %vm208, %v2581, 0
    %v2753 = vsel %vm212, %v2748, 0
    %2755 = vmatpush.bf16.msra.mxu0 0
    %2756 = vmatpush.bf16.msra.mxu0 0
    %2757 = vmatpush.bf16.msra.mxu0 0
    %2758 = vmatpush.bf16.msra.mxu0 0
    %2759 = vmatpush.bf16.msra.mxu0 0
    %2760 = vmatpush.bf16.msra.mxu0 0
    %2761 = vmatpush.bf16.msra.mxu0 0
    %2762 = vmatpush.bf16.msra.mxu0 %v2753
    %2763 = vmatmul.bf16.gmra.mxu0 %v2750
    %v2764 = vpop.f32.mrf.mxu0
    %v2765 = vadd.f32 0.0, %v2764
    %v2766 = vpop.f32.mrf.mxu0
    %2767 = vdwg.mxu0
    %v2768 = vunpack.c.l.b16 %v1501
    %v2769 = vpack.c.b16 %v2768, %v2768
    %2770 = vrot.lane.b32.xlu0 %v2769, 64
    %v2771 = vpop.permute.xlu0 %2770
    %v2773 = vsel %vm208, %v2582, 0
    %v2776 = vsel %vm212, %v2771, 0
    %2778 = vmatpush.bf16.msra.mxu0 0
    %2779 = vmatpush.bf16.msra.mxu0 0
    %2780 = vmatpush.bf16.msra.mxu0 0
    %2781 = vmatpush.bf16.msra.mxu0 0
    %2782 = vmatpush.bf16.msra.mxu0 0
    %2783 = vmatpush.bf16.msra.mxu0 0
    %2784 = vmatpush.bf16.msra.mxu0 0
    %2785 = vmatpush.bf16.msra.mxu0 %v2776
    %2786 = vmatmul.bf16.gmra.mxu0 %v2773
    %v2787 = vpop.f32.mrf.mxu0
    %v2788 = vadd.f32 0.0, %v2787
    %v2789 = vpop.f32.mrf.mxu0
    %2790 = vdwg.mxu0
    %v2791 = vunpack.c.l.b16 %v1567
    %v2792 = vpack.c.b16 %v2791, %v2791
    %2793 = vrot.lane.b32.xlu0 %v2792, 64
    %v2794 = vpop.permute.xlu0 %2793
    %v2796 = vsel %vm208, %v2583, 0
    %v2799 = vsel %vm212, %v2794, 0
    %2801 = vmatpush.bf16.msra.mxu0 0
    %2802 = vmatpush.bf16.msra.mxu0 0
    %2803 = vmatpush.bf16.msra.mxu0 0
    %2804 = vmatpush.bf16.msra.mxu0 0
    %2805 = vmatpush.bf16.msra.mxu0 0
    %2806 = vmatpush.bf16.msra.mxu0 0
    %2807 = vmatpush.bf16.msra.mxu0 0
    %2808 = vmatpush.bf16.msra.mxu0 %v2799
    %2809 = vmatmul.bf16.gmra.mxu0 %v2796
    %v2810 = vpop.f32.mrf.mxu0
    %v2811 = vadd.f32 0.0, %v2810
    %v2812 = vpop.f32.mrf.mxu0
    %2813 = vdwg.mxu0
    %v2814 = vunpack.c.l.b16 %v1569
    %v2815 = vpack.c.b16 %v2814, %v2814
    %2816 = vrot.lane.b32.xlu0 %v2815, 64
    %v2817 = vpop.permute.xlu0 %2816
    %v2819 = vsel %vm208, %v2584, 0
    %v2822 = vsel %vm212, %v2817, 0
    %2824 = vmatpush.bf16.msra.mxu0 0
    %2825 = vmatpush.bf16.msra.mxu0 0
    %2826 = vmatpush.bf16.msra.mxu0 0
    %2827 = vmatpush.bf16.msra.mxu0 0
    %2828 = vmatpush.bf16.msra.mxu0 0
    %2829 = vmatpush.bf16.msra.mxu0 0
    %2830 = vmatpush.bf16.msra.mxu0 0
    %2831 = vmatpush.bf16.msra.mxu0 %v2822
    %2832 = vmatmul.bf16.gmra.mxu0 %v2819
    %v2833 = vpop.f32.mrf.mxu0
    %v2834 = vadd.f32 0.0, %v2833
    %v2835 = vpop.f32.mrf.mxu0
    %2836 = vdwg.mxu0
    %v2837 = vunpack.c.l.b16 %v1571
    %v2838 = vpack.c.b16 %v2837, %v2837
    %2839 = vrot.lane.b32.xlu0 %v2838, 64
    %v2840 = vpop.permute.xlu0 %2839
    %v2842 = vsel %vm208, %v2585, 0
    %v2845 = vsel %vm212, %v2840, 0
    %2847 = vmatpush.bf16.msra.mxu0 0
    %2848 = vmatpush.bf16.msra.mxu0 0
    %2849 = vmatpush.bf16.msra.mxu0 0
    %2850 = vmatpush.bf16.msra.mxu0 0
    %2851 = vmatpush.bf16.msra.mxu0 0
    %2852 = vmatpush.bf16.msra.mxu0 0
    %2853 = vmatpush.bf16.msra.mxu0 0
    %2854 = vmatpush.bf16.msra.mxu0 %v2845
    %2855 = vmatmul.bf16.gmra.mxu0 %v2842
    %v2856 = vpop.f32.mrf.mxu0
    %v2857 = vadd.f32 0.0, %v2856
    %v2858 = vpop.f32.mrf.mxu0
    %2859 = vdwg.mxu0
    %v2860 = vunpack.c.l.b16 %v1573
    %v2861 = vpack.c.b16 %v2860, %v2860
    %2862 = vrot.lane.b32.xlu0 %v2861, 64
    %v2863 = vpop.permute.xlu0 %2862
    %v2865 = vsel %vm208, %v2586, 0
    %v2868 = vsel %vm212, %v2863, 0
    %2870 = vmatpush.bf16.msra.mxu0 0
    %2871 = vmatpush.bf16.msra.mxu0 0
    %2872 = vmatpush.bf16.msra.mxu0 0
    %2873 = vmatpush.bf16.msra.mxu0 0
    %2874 = vmatpush.bf16.msra.mxu0 0
    %2875 = vmatpush.bf16.msra.mxu0 0
    %2876 = vmatpush.bf16.msra.mxu0 0
    %2877 = vmatpush.bf16.msra.mxu0 %v2868
    %2878 = vmatmul.bf16.gmra.mxu0 %v2865
    %v2879 = vpop.f32.mrf.mxu0
    %v2880 = vadd.f32 0.0, %v2879
    %v2881 = vpop.f32.mrf.mxu0
    %2882 = vdwg.mxu0
    %v2883 = vunpack.c.l.b16 %v1575
    %v2884 = vpack.c.b16 %v2883, %v2883
    %2885 = vrot.lane.b32.xlu0 %v2884, 64
    %v2886 = vpop.permute.xlu0 %2885
    %v2888 = vsel %vm208, %v2587, 0
    %v2891 = vsel %vm212, %v2886, 0
    %2893 = vmatpush.bf16.msra.mxu0 0
    %2894 = vmatpush.bf16.msra.mxu0 0
    %2895 = vmatpush.bf16.msra.mxu0 0
    %2896 = vmatpush.bf16.msra.mxu0 0
    %2897 = vmatpush.bf16.msra.mxu0 0
    %2898 = vmatpush.bf16.msra.mxu0 0
    %2899 = vmatpush.bf16.msra.mxu0 0
    %2900 = vmatpush.bf16.msra.mxu0 %v2891
    %2901 = vmatmul.bf16.gmra.mxu0 %v2888
    %v2902 = vpop.f32.mrf.mxu0
    %v2903 = vadd.f32 0.0, %v2902
    %v2904 = vpop.f32.mrf.mxu0
    %2905 = vdwg.mxu0
    %v2906 = vunpack.c.l.b16 %v1577
    %v2907 = vpack.c.b16 %v2906, %v2906
    %2908 = vrot.lane.b32.xlu0 %v2907, 64
    %v2909 = vpop.permute.xlu0 %2908
    %v2911 = vsel %vm208, %v2588, 0
    %v2914 = vsel %vm212, %v2909, 0
    %2916 = vmatpush.bf16.msra.mxu0 0
    %2917 = vmatpush.bf16.msra.mxu0 0
    %2918 = vmatpush.bf16.msra.mxu0 0
    %2919 = vmatpush.bf16.msra.mxu0 0
    %2920 = vmatpush.bf16.msra.mxu0 0
    %2921 = vmatpush.bf16.msra.mxu0 0
    %2922 = vmatpush.bf16.msra.mxu0 0
    %2923 = vmatpush.bf16.msra.mxu0 %v2914
    %2924 = vmatmul.bf16.gmra.mxu0 %v2911
    %v2925 = vpop.f32.mrf.mxu0
    %v2926 = vadd.f32 0.0, %v2925
    %v2927 = vpop.f32.mrf.mxu0
    %2928 = vdwg.mxu0
    %v2929 = vunpack.c.l.b16 %v1579
    %v2930 = vpack.c.b16 %v2929, %v2929
    %2931 = vrot.lane.b32.xlu0 %v2930, 64
    %v2932 = vpop.permute.xlu0 %2931
    %v2934 = vsel %vm208, %v2589, 0
    %v2937 = vsel %vm212, %v2932, 0
    %2939 = vmatpush.bf16.msra.mxu0 0
    %2940 = vmatpush.bf16.msra.mxu0 0
    %2941 = vmatpush.bf16.msra.mxu0 0
    %2942 = vmatpush.bf16.msra.mxu0 0
    %2943 = vmatpush.bf16.msra.mxu0 0
    %2944 = vmatpush.bf16.msra.mxu0 0
    %2945 = vmatpush.bf16.msra.mxu0 0
    %2946 = vmatpush.bf16.msra.mxu0 %v2937
    %2947 = vmatmul.bf16.gmra.mxu0 %v2934
    %v2948 = vpop.f32.mrf.mxu0
    %v2949 = vadd.f32 0.0, %v2948
    %v2950 = vpop.f32.mrf.mxu0
    %2951 = vdwg.mxu0
    %v2952 = vunpack.c.l.b16 %v1581
    %v2953 = vpack.c.b16 %v2952, %v2952
    %2954 = vrot.lane.b32.xlu0 %v2953, 64
    %v2955 = vpop.permute.xlu0 %2954
    %v2957 = vsel %vm208, %v2590, 0
    %v2960 = vsel %vm212, %v2955, 0
    %2962 = vmatpush.bf16.msra.mxu0 0
    %2963 = vmatpush.bf16.msra.mxu0 0
    %2964 = vmatpush.bf16.msra.mxu0 0
    %2965 = vmatpush.bf16.msra.mxu0 0
    %2966 = vmatpush.bf16.msra.mxu0 0
    %2967 = vmatpush.bf16.msra.mxu0 0
    %2968 = vmatpush.bf16.msra.mxu0 0
    %2969 = vmatpush.bf16.msra.mxu0 %v2960
    %2970 = vmatmul.bf16.gmra.mxu0 %v2957
    %v2971 = vpop.f32.mrf.mxu0
    %v2972 = vadd.f32 0.0, %v2971
    %v2973 = vpop.f32.mrf.mxu0
    %2974 = vdwg.mxu0
    %v2975 = vunpack.c.l.b16 %v1583
    %v2976 = vpack.c.b16 %v2975, %v2975
    %2977 = vrot.lane.b32.xlu0 %v2976, 64
    %v2978 = vpop.permute.xlu0 %2977
    %v2980 = vsel %vm208, %v2591, 0
    %v2983 = vsel %vm212, %v2978, 0
    %2985 = vmatpush.bf16.msra.mxu0 0
    %2986 = vmatpush.bf16.msra.mxu0 0
    %2987 = vmatpush.bf16.msra.mxu0 0
    %2988 = vmatpush.bf16.msra.mxu0 0
    %2989 = vmatpush.bf16.msra.mxu0 0
    %2990 = vmatpush.bf16.msra.mxu0 0
    %2991 = vmatpush.bf16.msra.mxu0 0
    %2992 = vmatpush.bf16.msra.mxu0 %v2983
    %2993 = vmatmul.bf16.gmra.mxu0 %v2980
    %v2994 = vpop.f32.mrf.mxu0
    %v2995 = vadd.f32 0.0, %v2994
    %v2996 = vpop.f32.mrf.mxu0
    %2997 = vdwg.mxu0
    %v2998 = vunpack.c.l.b16 %v1585
    %v2999 = vpack.c.b16 %v2998, %v2998
    %3000 = vrot.lane.b32.xlu0 %v2999, 64
    %v3001 = vpop.permute.xlu0 %3000
    %v3003 = vsel %vm208, %v2592, 0
    %v3006 = vsel %vm212, %v3001, 0
    %3008 = vmatpush.bf16.msra.mxu0 0
    %3009 = vmatpush.bf16.msra.mxu0 0
    %3010 = vmatpush.bf16.msra.mxu0 0
    %3011 = vmatpush.bf16.msra.mxu0 0
    %3012 = vmatpush.bf16.msra.mxu0 0
    %3013 = vmatpush.bf16.msra.mxu0 0
    %3014 = vmatpush.bf16.msra.mxu0 0
    %3015 = vmatpush.bf16.msra.mxu0 %v3006
    %3016 = vmatmul.bf16.gmra.mxu0 %v3003
    %v3017 = vpop.f32.mrf.mxu0
    %v3018 = vadd.f32 0.0, %v3017
    %v3019 = vpop.f32.mrf.mxu0
    %3020 = vdwg.mxu0
    %v3021 = vunpack.c.l.b16 %v1587
    %v3022 = vpack.c.b16 %v3021, %v3021
    %3023 = vrot.lane.b32.xlu0 %v3022, 64
    %v3024 = vpop.permute.xlu0 %3023
    %v3026 = vsel %vm208, %v2593, 0
    %v3029 = vsel %vm212, %v3024, 0
    %3031 = vmatpush.bf16.msra.mxu0 0
    %3032 = vmatpush.bf16.msra.mxu0 0
    %3033 = vmatpush.bf16.msra.mxu0 0
    %3034 = vmatpush.bf16.msra.mxu0 0
    %3035 = vmatpush.bf16.msra.mxu0 0
    %3036 = vmatpush.bf16.msra.mxu0 0
    %3037 = vmatpush.bf16.msra.mxu0 0
    %3038 = vmatpush.bf16.msra.mxu0 %v3029
    %3039 = vmatmul.bf16.gmra.mxu0 %v3026
    %v3040 = vpop.f32.mrf.mxu0
    %v3041 = vadd.f32 0.0, %v3040
    %v3042 = vpop.f32.mrf.mxu0
    %3043 = vdwg.mxu0
    %v3044 = vunpack.c.l.b16 %v1589
    %v3045 = vpack.c.b16 %v3044, %v3044
    %3046 = vrot.lane.b32.xlu0 %v3045, 64
    %v3047 = vpop.permute.xlu0 %3046
    %v3049 = vsel %vm208, %v2594, 0
    %v3052 = vsel %vm212, %v3047, 0
    %3054 = vmatpush.bf16.msra.mxu0 0
    %3055 = vmatpush.bf16.msra.mxu0 0
    %3056 = vmatpush.bf16.msra.mxu0 0
    %3057 = vmatpush.bf16.msra.mxu0 0
    %3058 = vmatpush.bf16.msra.mxu0 0
    %3059 = vmatpush.bf16.msra.mxu0 0
    %3060 = vmatpush.bf16.msra.mxu0 0
    %3061 = vmatpush.bf16.msra.mxu0 %v3052
    %3062 = vmatmul.bf16.gmra.mxu0 %v3049
    %v3063 = vpop.f32.mrf.mxu0
    %v3064 = vadd.f32 0.0, %v3063
    %v3065 = vpop.f32.mrf.mxu0
    %3066 = vdwg.mxu0
    %v3067 = vunpack.c.l.b16 %v1591
    %v3068 = vpack.c.b16 %v3067, %v3067
    %3069 = vrot.lane.b32.xlu0 %v3068, 64
    %v3070 = vpop.permute.xlu0 %3069
    %v3072 = vsel %vm208, %v2595, 0
    %v3075 = vsel %vm212, %v3070, 0
    %3077 = vmatpush.bf16.msra.mxu0 0
    %3078 = vmatpush.bf16.msra.mxu0 0
    %3079 = vmatpush.bf16.msra.mxu0 0
    %3080 = vmatpush.bf16.msra.mxu0 0
    %3081 = vmatpush.bf16.msra.mxu0 0
    %3082 = vmatpush.bf16.msra.mxu0 0
    %3083 = vmatpush.bf16.msra.mxu0 0
    %3084 = vmatpush.bf16.msra.mxu0 %v3075
    %3085 = vmatmul.bf16.gmra.mxu0 %v3072
    %v3086 = vpop.f32.mrf.mxu0
    %v3087 = vadd.f32 0.0, %v3086
    %v3088 = vpop.f32.mrf.mxu0
    %3089 = vdwg.mxu0
    %v3090 = vunpack.c.l.b16 %v1593
    %v3091 = vpack.c.b16 %v3090, %v3090
    %3092 = vrot.lane.b32.xlu0 %v3091, 64
    %v3093 = vpop.permute.xlu0 %3092
    %v3095 = vsel %vm208, %v2596, 0
    %v3098 = vsel %vm212, %v3093, 0
    %3100 = vmatpush.bf16.msra.mxu0 0
    %3101 = vmatpush.bf16.msra.mxu0 0
    %3102 = vmatpush.bf16.msra.mxu0 0
    %3103 = vmatpush.bf16.msra.mxu0 0
    %3104 = vmatpush.bf16.msra.mxu0 0
    %3105 = vmatpush.bf16.msra.mxu0 0
    %3106 = vmatpush.bf16.msra.mxu0 0
    %3107 = vmatpush.bf16.msra.mxu0 %v3098
    %3108 = vmatmul.bf16.gmra.mxu0 %v3095
    %v3109 = vpop.f32.mrf.mxu0
    %v3110 = vadd.f32 0.0, %v3109
    %v3111 = vpop.f32.mrf.mxu0
    %3112 = vdwg.mxu0
    %v3113 = vunpack.c.l.b16 %v1595
    %v3114 = vpack.c.b16 %v3113, %v3113
    %3115 = vrot.lane.b32.xlu0 %v3114, 64
    %v3116 = vpop.permute.xlu0 %3115
    %v3118 = vsel %vm208, %v2597, 0
    %v3121 = vsel %vm212, %v3116, 0
    %3123 = vmatpush.bf16.msra.mxu0 0
    %3124 = vmatpush.bf16.msra.mxu0 0
    %3125 = vmatpush.bf16.msra.mxu0 0
    %3126 = vmatpush.bf16.msra.mxu0 0
    %3127 = vmatpush.bf16.msra.mxu0 0
    %3128 = vmatpush.bf16.msra.mxu0 0
    %3129 = vmatpush.bf16.msra.mxu0 0
    %3130 = vmatpush.bf16.msra.mxu0 %v3121
    %3131 = vmatmul.bf16.gmra.mxu0 %v3118
    %v3132 = vpop.f32.mrf.mxu0
    %v3133 = vadd.f32 0.0, %v3132
    %v3134 = vpop.f32.mrf.mxu0
    %3135 = vdwg.mxu0
    %v3136 = vunpack.c.l.b16 %v1597
    %v3137 = vpack.c.b16 %v3136, %v3136
    %3138 = vrot.lane.b32.xlu0 %v3137, 64
    %v3139 = vpop.permute.xlu0 %3138
    %v3141 = vsel %vm208, %v2598, 0
    %v3144 = vsel %vm212, %v3139, 0
    %3146 = vmatpush.bf16.msra.mxu0 0
    %3147 = vmatpush.bf16.msra.mxu0 0
    %3148 = vmatpush.bf16.msra.mxu0 0
    %3149 = vmatpush.bf16.msra.mxu0 0
    %3150 = vmatpush.bf16.msra.mxu0 0
    %3151 = vmatpush.bf16.msra.mxu0 0
    %3152 = vmatpush.bf16.msra.mxu0 0
    %3153 = vmatpush.bf16.msra.mxu0 %v3144
    %3154 = vmatmul.bf16.gmra.mxu0 %v3141
    %v3155 = vpop.f32.mrf.mxu0
    %v3156 = vadd.f32 0.0, %v3155
    %v3157 = vpop.f32.mrf.mxu0
    %3158 = vdwg.mxu0
    %v3159 = vunpack.c.l.b16 %v1599
    %v3160 = vpack.c.b16 %v3159, %v3159
    %3161 = vrot.lane.b32.xlu0 %v3160, 64
    %v3162 = vpop.permute.xlu0 %3161
    %v3164 = vsel %vm208, %v2599, 0
    %v3167 = vsel %vm212, %v3162, 0
    %3169 = vmatpush.bf16.msra.mxu0 0
    %3170 = vmatpush.bf16.msra.mxu0 0
    %3171 = vmatpush.bf16.msra.mxu0 0
    %3172 = vmatpush.bf16.msra.mxu0 0
    %3173 = vmatpush.bf16.msra.mxu0 0
    %3174 = vmatpush.bf16.msra.mxu0 0
    %3175 = vmatpush.bf16.msra.mxu0 0
    %3176 = vmatpush.bf16.msra.mxu0 %v3167
    %3177 = vmatmul.bf16.gmra.mxu0 %v3164
    %v3178 = vpop.f32.mrf.mxu0
    %v3179 = vadd.f32 0.0, %v3178
    %v3180 = vpop.f32.mrf.mxu0
    %3181 = vdwg.mxu0
    %v3182 = vunpack.c.l.b16 %v1601
    %v3183 = vpack.c.b16 %v3182, %v3182
    %3184 = vrot.lane.b32.xlu0 %v3183, 64
    %v3185 = vpop.permute.xlu0 %3184
    %v3187 = vsel %vm208, %v2600, 0
    %v3190 = vsel %vm212, %v3185, 0
    %3192 = vmatpush.bf16.msra.mxu0 0
    %3193 = vmatpush.bf16.msra.mxu0 0
    %3194 = vmatpush.bf16.msra.mxu0 0
    %3195 = vmatpush.bf16.msra.mxu0 0
    %3196 = vmatpush.bf16.msra.mxu0 0
    %3197 = vmatpush.bf16.msra.mxu0 0
    %3198 = vmatpush.bf16.msra.mxu0 0
    %3199 = vmatpush.bf16.msra.mxu0 %v3190
    %3200 = vmatmul.bf16.gmra.mxu0 %v3187
    %v3201 = vpop.f32.mrf.mxu0
    %v3202 = vadd.f32 0.0, %v3201
    %v3203 = vpop.f32.mrf.mxu0
    %3204 = vdwg.mxu0
    %v3205 = vunpack.c.l.b16 %v1603
    %v3206 = vpack.c.b16 %v3205, %v3205
    %3207 = vrot.lane.b32.xlu0 %v3206, 64
    %v3208 = vpop.permute.xlu0 %3207
    %v3210 = vsel %vm208, %v2601, 0
    %v3213 = vsel %vm212, %v3208, 0
    %3215 = vmatpush.bf16.msra.mxu0 0
    %3216 = vmatpush.bf16.msra.mxu0 0
    %3217 = vmatpush.bf16.msra.mxu0 0
    %3218 = vmatpush.bf16.msra.mxu0 0
    %3219 = vmatpush.bf16.msra.mxu0 0
    %3220 = vmatpush.bf16.msra.mxu0 0
    %3221 = vmatpush.bf16.msra.mxu0 0
    %3222 = vmatpush.bf16.msra.mxu0 %v3213
    %3223 = vmatmul.bf16.gmra.mxu0 %v3210
    %v3224 = vpop.f32.mrf.mxu0
    %v3225 = vadd.f32 0.0, %v3224
    %v3226 = vpop.f32.mrf.mxu0
    %3227 = vdwg.mxu0
    %v3228 = vunpack.c.l.b16 %v1605
    %v3229 = vpack.c.b16 %v3228, %v3228
    %3230 = vrot.lane.b32.xlu0 %v3229, 64
    %v3231 = vpop.permute.xlu0 %3230
    %v3233 = vsel %vm208, %v2602, 0
    %v3236 = vsel %vm212, %v3231, 0
    %3238 = vmatpush.bf16.msra.mxu0 0
    %3239 = vmatpush.bf16.msra.mxu0 0
    %3240 = vmatpush.bf16.msra.mxu0 0
    %3241 = vmatpush.bf16.msra.mxu0 0
    %3242 = vmatpush.bf16.msra.mxu0 0
    %3243 = vmatpush.bf16.msra.mxu0 0
    %3244 = vmatpush.bf16.msra.mxu0 0
    %3245 = vmatpush.bf16.msra.mxu0 %v3236
    %3246 = vmatmul.bf16.gmra.mxu0 %v3233
    %v3247 = vpop.f32.mrf.mxu0
    %v3248 = vadd.f32 0.0, %v3247
    %v3249 = vpop.f32.mrf.mxu0
    %3250 = vdwg.mxu0
    %v3251 = vunpack.c.l.b16 %v1607
    %v3252 = vpack.c.b16 %v3251, %v3251
    %3253 = vrot.lane.b32.xlu0 %v3252, 64
    %v3254 = vpop.permute.xlu0 %3253
    %v3256 = vsel %vm208, %v2603, 0
    %v3259 = vsel %vm212, %v3254, 0
    %3261 = vmatpush.bf16.msra.mxu0 0
    %3262 = vmatpush.bf16.msra.mxu0 0
    %3263 = vmatpush.bf16.msra.mxu0 0
    %3264 = vmatpush.bf16.msra.mxu0 0
    %3265 = vmatpush.bf16.msra.mxu0 0
    %3266 = vmatpush.bf16.msra.mxu0 0
    %3267 = vmatpush.bf16.msra.mxu0 0
    %3268 = vmatpush.bf16.msra.mxu0 %v3259
    %3269 = vmatmul.bf16.gmra.mxu0 %v3256
    %v3270 = vpop.f32.mrf.mxu0
    %v3271 = vadd.f32 0.0, %v3270
    %v3272 = vpop.f32.mrf.mxu0
    %3273 = vdwg.mxu0
    %v3274 = vunpack.c.l.b16 %v1609
    %v3275 = vpack.c.b16 %v3274, %v3274
    %3276 = vrot.lane.b32.xlu0 %v3275, 64
    %v3277 = vpop.permute.xlu0 %3276
    %v3279 = vsel %vm208, %v2604, 0
    %v3282 = vsel %vm212, %v3277, 0
    %3284 = vmatpush.bf16.msra.mxu0 0
    %3285 = vmatpush.bf16.msra.mxu0 0
    %3286 = vmatpush.bf16.msra.mxu0 0
    %3287 = vmatpush.bf16.msra.mxu0 0
    %3288 = vmatpush.bf16.msra.mxu0 0
    %3289 = vmatpush.bf16.msra.mxu0 0
    %3290 = vmatpush.bf16.msra.mxu0 0
    %3291 = vmatpush.bf16.msra.mxu0 %v3282
    %3292 = vmatmul.bf16.gmra.mxu0 %v3279
    %v3293 = vpop.f32.mrf.mxu0
    %v3294 = vadd.f32 0.0, %v3293
    %v3295 = vpop.f32.mrf.mxu0
    %3296 = vdwg.mxu0
    %v3297 = vunpack.c.l.b16 %v1611
    %v3298 = vpack.c.b16 %v3297, %v3297
    %3299 = vrot.lane.b32.xlu0 %v3298, 64
    %v3300 = vpop.permute.xlu0 %3299
    %v3302 = vsel %vm208, %v2605, 0
    %v3305 = vsel %vm212, %v3300, 0
    %3307 = vmatpush.bf16.msra.mxu0 0
    %3308 = vmatpush.bf16.msra.mxu0 0
    %3309 = vmatpush.bf16.msra.mxu0 0
    %3310 = vmatpush.bf16.msra.mxu0 0
    %3311 = vmatpush.bf16.msra.mxu0 0
    %3312 = vmatpush.bf16.msra.mxu0 0
    %3313 = vmatpush.bf16.msra.mxu0 0
    %3314 = vmatpush.bf16.msra.mxu0 %v3305
    %3315 = vmatmul.bf16.gmra.mxu0 %v3302
    %v3316 = vpop.f32.mrf.mxu0
    %v3317 = vadd.f32 0.0, %v3316
    %v3318 = vpop.f32.mrf.mxu0
    %3319 = vdwg.mxu0
    %v3320 = vunpack.c.l.b16 %v1613
    %v3321 = vpack.c.b16 %v3320, %v3320
    %3322 = vrot.lane.b32.xlu0 %v3321, 64
    %v3323 = vpop.permute.xlu0 %3322
    %v3325 = vsel %vm208, %v2606, 0
    %v3328 = vsel %vm212, %v3323, 0
    %3330 = vmatpush.bf16.msra.mxu0 0
    %3331 = vmatpush.bf16.msra.mxu0 0
    %3332 = vmatpush.bf16.msra.mxu0 0
    %3333 = vmatpush.bf16.msra.mxu0 0
    %3334 = vmatpush.bf16.msra.mxu0 0
    %3335 = vmatpush.bf16.msra.mxu0 0
    %3336 = vmatpush.bf16.msra.mxu0 0
    %3337 = vmatpush.bf16.msra.mxu0 %v3328
    %3338 = vmatmul.bf16.gmra.mxu0 %v3325
    %v3339 = vpop.f32.mrf.mxu0
    %v3340 = vadd.f32 0.0, %v3339
    %v3341 = vpop.f32.mrf.mxu0
    %3342 = vdwg.mxu0
    %v3343 = vpack.c.bf16 %v2627, %v2627
    %v3344 = vpack.c.bf16 %v2650, %v2650
    %v3345 = vpack.c.bf16 %v2673, %v2673
    %v3346 = vpack.c.bf16 %v2696, %v2696
    %v3347 = vpack.c.bf16 %v2719, %v2719
    %v3348 = vpack.c.bf16 %v2742, %v2742
    %v3349 = vpack.c.bf16 %v2765, %v2765
    %v3350 = vpack.c.bf16 %v2788, %v2788
    %v3351 = vpack.c.bf16 %v2811, %v2811
    %v3352 = vpack.c.bf16 %v2834, %v2834
    %v3353 = vpack.c.bf16 %v2857, %v2857
    %v3354 = vpack.c.bf16 %v2880, %v2880
    %v3355 = vpack.c.bf16 %v2903, %v2903
    %v3356 = vpack.c.bf16 %v2926, %v2926
    %v3357 = vpack.c.bf16 %v2949, %v2949
    %v3358 = vpack.c.bf16 %v2972, %v2972
    %v3359 = vpack.c.bf16 %v2995, %v2995
    %v3360 = vpack.c.bf16 %v3018, %v3018
    %v3361 = vpack.c.bf16 %v3041, %v3041
    %v3362 = vpack.c.bf16 %v3064, %v3064
    %v3363 = vpack.c.bf16 %v3087, %v3087
    %v3364 = vpack.c.bf16 %v3110, %v3110
    %v3365 = vpack.c.bf16 %v3133, %v3133
    %v3366 = vpack.c.bf16 %v3156, %v3156
    %v3367 = vpack.c.bf16 %v3179, %v3179
    %v3368 = vpack.c.bf16 %v3202, %v3202
    %v3369 = vpack.c.bf16 %v3225, %v3225
    %v3370 = vpack.c.bf16 %v3248, %v3248
    %v3371 = vpack.c.bf16 %v3271, %v3271
    %v3372 = vpack.c.bf16 %v3294, %v3294
    %v3373 = vpack.c.bf16 %v3317, %v3317
    %v3374 = vpack.c.bf16 %v3340, %v3340
    %v3375 = vld [vmem:[#allocation16] sm:$0xf]
    %v3376 = vld [vmem:[#allocation16 + $0x4] sm:$0xf]
    %v3377 = vld [vmem:[#allocation16 + $0x8] sm:$0xf]
    %v3378 = vld [vmem:[#allocation16 + $0xc] sm:$0xf]
    %v3379 = vld [vmem:[#allocation16 + $0x10] sm:$0xf]
    %v3380 = vld [vmem:[#allocation16 + $0x14] sm:$0xf]
    %v3381 = vld [vmem:[#allocation16 + $0x18] sm:$0xf]
    %v3382 = vld [vmem:[#allocation16 + $0x1c] sm:$0xf]
    %v3391 = vunpack.c.l.b16 %v3343
    %v3392 = vunpack.c.l.b16 %v3344
    %v3393 = vunpack.c.l.b16 %v3345
    %v3394 = vunpack.c.l.b16 %v3346
    %v3395 = vunpack.c.l.b16 %v3347
    %v3396 = vunpack.c.l.b16 %v3348
    %v3397 = vunpack.c.l.b16 %v3349
    %v3398 = vunpack.c.l.b16 %v3350
    %v3399 = vpack.c.b16 %v3392, %v3391
    %v3400 = vpack.c.b16 %v3394, %v3393
    %v3401 = vpack.c.b16 %v3396, %v3395
    %v3402 = vpack.c.b16 %v3398, %v3397
    %v3405 = vunpack.c.l.b16 %v3375
    %v3406 = vunpack.c.l.b16 %v3376
    %v3407 = vpack.c.b16 %v3406, %v3405
    %v3410 = vsel %vm1614, %v3399, 0
    %v3413 = vsel %vm1614, %v3400, 0
    %v3416 = vsel %vm1614, %v3401, 0
    %v3419 = vsel %vm1614, %v3402, 0
    %3421 = vmatpush.bf16.msra.mxu0 0
    %3422 = vmatpush.bf16.msra.mxu0 0
    %3423 = vmatpush.bf16.msra.mxu0 0
    %3424 = vmatpush.bf16.msra.mxu0 0
    %3425 = vmatpush.bf16.msra.mxu0 0
    %3426 = vmatpush.bf16.msra.mxu0 0
    %3427 = vmatpush.bf16.msra.mxu0 0
    %3428 = vmatpush.bf16.msra.mxu0 %v3407
    %3429 = vmatmul.bf16.gmra.mxu0 %v3410
    %v3430 = vpop.f32.mrf.mxu0
    %v3431 = vadd.f32 0.0, %v3430
    %v3432 = vpop.f32.mrf.mxu0
    %v3433 = vadd.f32 0.0, %v3432
    %3434 = vmatmul.bf16.gmra.mxu0 %v3413
    %v3435 = vpop.f32.mrf.mxu0
    %v3436 = vadd.f32 0.0, %v3435
    %v3437 = vpop.f32.mrf.mxu0
    %v3438 = vadd.f32 0.0, %v3437
    %3439 = vmatmul.bf16.gmra.mxu0 %v3416
    %v3440 = vpop.f32.mrf.mxu0
    %v3441 = vadd.f32 0.0, %v3440
    %v3442 = vpop.f32.mrf.mxu0
    %v3443 = vadd.f32 0.0, %v3442
    %3444 = vmatmul.bf16.gmra.mxu0 %v3419
    %v3445 = vpop.f32.mrf.mxu0
    %v3446 = vadd.f32 0.0, %v3445
    %v3447 = vpop.f32.mrf.mxu0
    %v3448 = vadd.f32 0.0, %v3447
    %3449 = vdwg.mxu0
    %v3458 = vunpack.c.l.b16 %v3351
    %v3459 = vunpack.c.l.b16 %v3352
    %v3460 = vunpack.c.l.b16 %v3353
    %v3461 = vunpack.c.l.b16 %v3354
    %v3462 = vunpack.c.l.b16 %v3355
    %v3463 = vunpack.c.l.b16 %v3356
    %v3464 = vunpack.c.l.b16 %v3357
    %v3465 = vunpack.c.l.b16 %v3358
    %v3466 = vpack.c.b16 %v3459, %v3458
    %v3467 = vpack.c.b16 %v3461, %v3460
    %v3468 = vpack.c.b16 %v3463, %v3462
    %v3469 = vpack.c.b16 %v3465, %v3464
    %v3472 = vunpack.c.l.b16 %v3377
    %v3473 = vunpack.c.l.b16 %v3378
    %v3474 = vpack.c.b16 %v3473, %v3472
    %v3477 = vsel %vm1614, %v3466, 0
    %v3480 = vsel %vm1614, %v3467, 0
    %v3483 = vsel %vm1614, %v3468, 0
    %v3486 = vsel %vm1614, %v3469, 0
    %3488 = vmatpush.bf16.msra.mxu0 0
    %3489 = vmatpush.bf16.msra.mxu0 0
    %3490 = vmatpush.bf16.msra.mxu0 0
    %3491 = vmatpush.bf16.msra.mxu0 0
    %3492 = vmatpush.bf16.msra.mxu0 0
    %3493 = vmatpush.bf16.msra.mxu0 0
    %3494 = vmatpush.bf16.msra.mxu0 0
    %3495 = vmatpush.bf16.msra.mxu0 %v3474
    %3496 = vmatmul.bf16.gmra.mxu0 %v3477
    %v3497 = vpop.f32.mrf.mxu0
    %v3498 = vadd.f32 0.0, %v3497
    %v3499 = vpop.f32.mrf.mxu0
    %v3500 = vadd.f32 0.0, %v3499
    %3501 = vmatmul.bf16.gmra.mxu0 %v3480
    %v3502 = vpop.f32.mrf.mxu0
    %v3503 = vadd.f32 0.0, %v3502
    %v3504 = vpop.f32.mrf.mxu0
    %v3505 = vadd.f32 0.0, %v3504
    %3506 = vmatmul.bf16.gmra.mxu0 %v3483
    %v3507 = vpop.f32.mrf.mxu0
    %v3508 = vadd.f32 0.0, %v3507
    %v3509 = vpop.f32.mrf.mxu0
    %v3510 = vadd.f32 0.0, %v3509
    %3511 = vmatmul.bf16.gmra.mxu0 %v3486
    %v3512 = vpop.f32.mrf.mxu0
    %v3513 = vadd.f32 0.0, %v3512
    %v3514 = vpop.f32.mrf.mxu0
    %v3515 = vadd.f32 0.0, %v3514
    %3516 = vdwg.mxu0
    %v3525 = vunpack.c.l.b16 %v3359
    %v3526 = vunpack.c.l.b16 %v3360
    %v3527 = vunpack.c.l.b16 %v3361
    %v3528 = vunpack.c.l.b16 %v3362
    %v3529 = vunpack.c.l.b16 %v3363
    %v3530 = vunpack.c.l.b16 %v3364
    %v3531 = vunpack.c.l.b16 %v3365
    %v3532 = vunpack.c.l.b16 %v3366
    %v3533 = vpack.c.b16 %v3526, %v3525
    %v3534 = vpack.c.b16 %v3528, %v3527
    %v3535 = vpack.c.b16 %v3530, %v3529
    %v3536 = vpack.c.b16 %v3532, %v3531
    %v3539 = vunpack.c.l.b16 %v3379
    %v3540 = vunpack.c.l.b16 %v3380
    %v3541 = vpack.c.b16 %v3540, %v3539
    %v3544 = vsel %vm1614, %v3533, 0
    %v3547 = vsel %vm1614, %v3534, 0
    %v3550 = vsel %vm1614, %v3535, 0
    %v3553 = vsel %vm1614, %v3536, 0
    %3555 = vmatpush.bf16.msra.mxu0 0
    %3556 = vmatpush.bf16.msra.mxu0 0
    %3557 = vmatpush.bf16.msra.mxu0 0
    %3558 = vmatpush.bf16.msra.mxu0 0
    %3559 = vmatpush.bf16.msra.mxu0 0
    %3560 = vmatpush.bf16.msra.mxu0 0
    %3561 = vmatpush.bf16.msra.mxu0 0
    %3562 = vmatpush.bf16.msra.mxu0 %v3541
    %3563 = vmatmul.bf16.gmra.mxu0 %v3544
    %v3564 = vpop.f32.mrf.mxu0
    %v3565 = vadd.f32 0.0, %v3564
    %v3566 = vpop.f32.mrf.mxu0
    %v3567 = vadd.f32 0.0, %v3566
    %3568 = vmatmul.bf16.gmra.mxu0 %v3547
    %v3569 = vpop.f32.mrf.mxu0
    %v3570 = vadd.f32 0.0, %v3569
    %v3571 = vpop.f32.mrf.mxu0
    %v3572 = vadd.f32 0.0, %v3571
    %3573 = vmatmul.bf16.gmra.mxu0 %v3550
    %v3574 = vpop.f32.mrf.mxu0
    %v3575 = vadd.f32 0.0, %v3574
    %v3576 = vpop.f32.mrf.mxu0
    %v3577 = vadd.f32 0.0, %v3576
    %3578 = vmatmul.bf16.gmra.mxu0 %v3553
    %v3579 = vpop.f32.mrf.mxu0
    %v3580 = vadd.f32 0.0, %v3579
    %v3581 = vpop.f32.mrf.mxu0
    %v3582 = vadd.f32 0.0, %v3581
    %3583 = vdwg.mxu0
    %v3592 = vunpack.c.l.b16 %v3367
    %v3593 = vunpack.c.l.b16 %v3368
    %v3594 = vunpack.c.l.b16 %v3369
    %v3595 = vunpack.c.l.b16 %v3370
    %v3596 = vunpack.c.l.b16 %v3371
    %v3597 = vunpack.c.l.b16 %v3372
    %v3598 = vunpack.c.l.b16 %v3373
    %v3599 = vunpack.c.l.b16 %v3374
    %v3600 = vpack.c.b16 %v3593, %v3592
    %v3601 = vpack.c.b16 %v3595, %v3594
    %v3602 = vpack.c.b16 %v3597, %v3596
    %v3603 = vpack.c.b16 %v3599, %v3598
    %v3606 = vunpack.c.l.b16 %v3381
    %v3607 = vunpack.c.l.b16 %v3382
    %v3608 = vpack.c.b16 %v3607, %v3606
    %v3611 = vsel %vm1614, %v3600, 0
    %v3614 = vsel %vm1614, %v3601, 0
    %v3617 = vsel %vm1614, %v3602, 0
    %v3620 = vsel %vm1614, %v3603, 0
    %3622 = vmatpush.bf16.msra.mxu0 0
    %3623 = vmatpush.bf16.msra.mxu0 0
    %3624 = vmatpush.bf16.msra.mxu0 0
    %3625 = vmatpush.bf16.msra.mxu0 0
    %3626 = vmatpush.bf16.msra.mxu0 0
    %3627 = vmatpush.bf16.msra.mxu0 0
    %3628 = vmatpush.bf16.msra.mxu0 0
    %3629 = vmatpush.bf16.msra.mxu0 %v3608
    %3630 = vmatmul.bf16.gmra.mxu0 %v3611
    %v3631 = vpop.f32.mrf.mxu0
    %v3632 = vadd.f32 0.0, %v3631
    %v3633 = vpop.f32.mrf.mxu0
    %v3634 = vadd.f32 0.0, %v3633
    %3635 = vmatmul.bf16.gmra.mxu0 %v3614
    %v3636 = vpop.f32.mrf.mxu0
    %v3637 = vadd.f32 0.0, %v3636
    %v3638 = vpop.f32.mrf.mxu0
    %v3639 = vadd.f32 0.0, %v3638
    %3640 = vmatmul.bf16.gmra.mxu0 %v3617
    %v3641 = vpop.f32.mrf.mxu0
    %v3642 = vadd.f32 0.0, %v3641
    %v3643 = vpop.f32.mrf.mxu0
    %v3644 = vadd.f32 0.0, %v3643
    %3645 = vmatmul.bf16.gmra.mxu0 %v3620
    %v3646 = vpop.f32.mrf.mxu0
    %v3647 = vadd.f32 0.0, %v3646
    %v3648 = vpop.f32.mrf.mxu0
    %v3649 = vadd.f32 0.0, %v3648
    %3650 = vdwg.mxu0
    %v3651 = vsel %vm361, %v3431, 0.0
    %v3652 = vsel %vm361, %v3498, 0.0
    %v3653 = vadd.f32 %v3651, %v3652
    %v3654 = vsel %vm361, %v3565, 0.0
    %v3655 = vadd.f32 %v3653, %v3654
    %v3656 = vsel %vm361, %v3632, 0.0
    %v3657 = vadd.f32 %v3655, %v3656
    %v3658 = vsel %vm361, %v3433, 0.0
    %v3659 = vsel %vm361, %v3500, 0.0
    %v3660 = vadd.f32 %v3658, %v3659
    %v3661 = vsel %vm361, %v3567, 0.0
    %v3662 = vadd.f32 %v3660, %v3661
    %v3663 = vsel %vm361, %v3634, 0.0
    %v3664 = vadd.f32 %v3662, %v3663
    %v3665 = vsel %vm361, %v3436, 0.0
    %v3666 = vsel %vm361, %v3503, 0.0
    %v3667 = vadd.f32 %v3665, %v3666
    %v3668 = vsel %vm361, %v3570, 0.0
    %v3669 = vadd.f32 %v3667, %v3668
    %v3670 = vsel %vm361, %v3637, 0.0
    %v3671 = vadd.f32 %v3669, %v3670
    %v3672 = vsel %vm361, %v3438, 0.0
    %v3673 = vsel %vm361, %v3505, 0.0
    %v3674 = vadd.f32 %v3672, %v3673
    %v3675 = vsel %vm361, %v3572, 0.0
    %v3676 = vadd.f32 %v3674, %v3675
    %v3677 = vsel %vm361, %v3639, 0.0
    %v3678 = vadd.f32 %v3676, %v3677
    %v3679 = vsel %vm361, %v3441, 0.0
    %v3680 = vsel %vm361, %v3508, 0.0
    %v3681 = vadd.f32 %v3679, %v3680
    %v3682 = vsel %vm361, %v3575, 0.0
    %v3683 = vadd.f32 %v3681, %v3682
    %v3684 = vsel %vm361, %v3642, 0.0
    %v3685 = vadd.f32 %v3683, %v3684
    %v3686 = vsel %vm361, %v3443, 0.0
    %v3687 = vsel %vm361, %v3510, 0.0
    %v3688 = vadd.f32 %v3686, %v3687
    %v3689 = vsel %vm361, %v3577, 0.0
    %v3690 = vadd.f32 %v3688, %v3689
    %v3691 = vsel %vm361, %v3644, 0.0
    %v3692 = vadd.f32 %v3690, %v3691
    %v3693 = vsel %vm361, %v3446, 0.0
    %v3694 = vsel %vm361, %v3513, 0.0
    %v3695 = vadd.f32 %v3693, %v3694
    %v3696 = vsel %vm361, %v3580, 0.0
    %v3697 = vadd.f32 %v3695, %v3696
    %v3698 = vsel %vm361, %v3647, 0.0
    %v3699 = vadd.f32 %v3697, %v3698
    %v3700 = vsel %vm361, %v3448, 0.0
    %v3701 = vsel %vm361, %v3515, 0.0
    %v3702 = vadd.f32 %v3700, %v3701
    %v3703 = vsel %vm361, %v3582, 0.0
    %v3704 = vadd.f32 %v3702, %v3703
    %v3705 = vsel %vm361, %v3649, 0.0
    %v3706 = vadd.f32 %v3704, %v3705
    %v3707 = vperm.slane %v176, 0
    %v3708 = vadd.f32 %v3657, %v3707
    %v3709 = vadd.f32 %v3664, %v3707
    %v3710 = vadd.f32 %v3671, %v3707
    %v3711 = vadd.f32 %v3678, %v3707
    %v3712 = vadd.f32 %v3685, %v3707
    %v3713 = vadd.f32 %v3692, %v3707
    %v3714 = vadd.f32 %v3699, %v3707
    %v3715 = vadd.f32 %v3706, %v3707
    %v3716 = vmax.f32 %v3708, 0.0
    %v3717 = vmax.f32 %v3709, 0.0
    %v3718 = vmax.f32 %v3710, 0.0
    %v3719 = vmax.f32 %v3711, 0.0
    %v3720 = vmax.f32 %v3712, 0.0
    %v3721 = vmax.f32 %v3713, 0.0
    %v3722 = vmax.f32 %v3714, 0.0
    %v3723 = vmax.f32 %v3715, 0.0
    %v3724 = vsel %vm361, %v3716, 0.0
    %3725 = vadd.xlane.f32.xlu0 %v3724
    %v3726 = vpop.xlane.xlu0 %3725
    %v3727 = vsel %vm361, %v3717, 0.0
    %3728 = vadd.xlane.f32.xlu0 %v3727
    %v3729 = vpop.xlane.xlu0 %3728
    %v3730 = vsel %vm361, %v3718, 0.0
    %3731 = vadd.xlane.f32.xlu0 %v3730
    %v3732 = vpop.xlane.xlu0 %3731
    %v3733 = vsel %vm361, %v3719, 0.0
    %3734 = vadd.xlane.f32.xlu0 %v3733
    %v3735 = vpop.xlane.xlu0 %3734
    %v3736 = vsel %vm361, %v3720, 0.0
    %3737 = vadd.xlane.f32.xlu0 %v3736
    %v3738 = vpop.xlane.xlu0 %3737
    %v3739 = vsel %vm361, %v3721, 0.0
    %3740 = vadd.xlane.f32.xlu0 %v3739
    %v3741 = vpop.xlane.xlu0 %3740
    %v3742 = vsel %vm361, %v3722, 0.0
    %3743 = vadd.xlane.f32.xlu0 %v3742
    %v3744 = vpop.xlane.xlu0 %3743
    %v3745 = vsel %vm361, %v3723, 0.0
    %3746 = vadd.xlane.f32.xlu0 %v3745
    %v3747 = vpop.xlane.xlu0 %3746
    %v3748 = vrcp.pop 32.0
    %v3749 = vmul.f32 32.0, %v3748
    %v3750 = vsub.f32 1.0, %v3749
    %v3751 = vmul.f32 %v3748, %v3750
    %v3752 = vadd.f32 %v3748, %v3751
    %vm3753 = vweird.f32 %v3748
    %v3754 = vsel %vm3753, %v3748, %v3752
    %v3755 = vmul.f32 %v3726, %v3754
    %v3756 = vmul.f32 %v3729, %v3754
    %v3757 = vmul.f32 %v3732, %v3754
    %v3758 = vmul.f32 %v3735, %v3754
    %v3759 = vmul.f32 %v3738, %v3754
    %v3760 = vmul.f32 %v3741, %v3754
    %v3761 = vmul.f32 %v3744, %v3754
    %v3762 = vmul.f32 %v3747, %v3754
    %v3763 = vsub.f32 %v3716, %v3755
    %v3764 = vsub.f32 %v3717, %v3756
    %v3765 = vsub.f32 %v3718, %v3757
    %v3766 = vsub.f32 %v3719, %v3758
    %v3767 = vsub.f32 %v3720, %v3759
    %v3768 = vsub.f32 %v3721, %v3760
    %v3769 = vsub.f32 %v3722, %v3761
    %v3770 = vsub.f32 %v3723, %v3762
    %v3771 = vmul.f32 %v3763, %v3763
    %v3772 = vmul.f32 %v3764, %v3764
    %v3773 = vmul.f32 %v3765, %v3765
    %v3774 = vmul.f32 %v3766, %v3766
    %v3775 = vmul.f32 %v3767, %v3767
    %v3776 = vmul.f32 %v3768, %v3768
    %v3777 = vmul.f32 %v3769, %v3769
    %v3778 = vmul.f32 %v3770, %v3770
    %v3779 = vsel %vm361, %v3771, 0.0
    %3780 = vadd.xlane.f32.xlu0 %v3779
    %v3781 = vpop.xlane.xlu0 %3780
    %v3782 = vsel %vm361, %v3772, 0.0
    %3783 = vadd.xlane.f32.xlu0 %v3782
    %v3784 = vpop.xlane.xlu0 %3783
    %v3785 = vsel %vm361, %v3773, 0.0
    %3786 = vadd.xlane.f32.xlu0 %v3785
    %v3787 = vpop.xlane.xlu0 %3786
    %v3788 = vsel %vm361, %v3774, 0.0
    %3789 = vadd.xlane.f32.xlu0 %v3788
    %v3790 = vpop.xlane.xlu0 %3789
    %v3791 = vsel %vm361, %v3775, 0.0
    %3792 = vadd.xlane.f32.xlu0 %v3791
    %v3793 = vpop.xlane.xlu0 %3792
    %v3794 = vsel %vm361, %v3776, 0.0
    %3795 = vadd.xlane.f32.xlu0 %v3794
    %v3796 = vpop.xlane.xlu0 %3795
    %v3797 = vsel %vm361, %v3777, 0.0
    %3798 = vadd.xlane.f32.xlu0 %v3797
    %v3799 = vpop.xlane.xlu0 %3798
    %v3800 = vsel %vm361, %v3778, 0.0
    %3801 = vadd.xlane.f32.xlu0 %v3800
    %v3802 = vpop.xlane.xlu0 %3801
    %v3803 = vmul.f32 %v3781, %v3754
    %v3804 = vmul.f32 %v3784, %v3754
    %v3805 = vmul.f32 %v3787, %v3754
    %v3806 = vmul.f32 %v3790, %v3754
    %v3807 = vmul.f32 %v3793, %v3754
    %v3808 = vmul.f32 %v3796, %v3754
    %v3809 = vmul.f32 %v3799, %v3754
    %v3810 = vmul.f32 %v3802, %v3754
    %v3811 = vadd.f32 %v3803, 1e-05
    %v3812 = vadd.f32 %v3804, 1e-05
    %v3813 = vadd.f32 %v3805, 1e-05
    %v3814 = vadd.f32 %v3806, 1e-05
    %v3815 = vadd.f32 %v3807, 1e-05
    %v3816 = vadd.f32 %v3808, 1e-05
    %v3817 = vadd.f32 %v3809, 1e-05
    %v3818 = vadd.f32 %v3810, 1e-05
    %v3819 = vrsqrt.pop %v3811
    %v3820 = vmul.f32 %v3819, %v3811
    %v3821 = vmul.f32 %v3820, %v3819
    %v3822 = vmul.f32 0.5, %v3821
    %v3823 = vsub.f32 1.5, %v3822
    %v3824 = vmul.f32 %v3819, %v3823
    %vm3825 = vweird.f32 %v3811
    %vm3826 = vweird.f32 %v3819
    %vm3827 = vmor %vm3825, %vm3826
    %v3828 = vsel %vm3827, %v3819, %v3824
    %v3829 = vrsqrt.pop %v3812
    %v3830 = vmul.f32 %v3829, %v3812
    %v3831 = vmul.f32 %v3830, %v3829
    %v3832 = vmul.f32 0.5, %v3831
    %v3833 = vsub.f32 1.5, %v3832
    %v3834 = vmul.f32 %v3829, %v3833
    %vm3835 = vweird.f32 %v3812
    %vm3836 = vweird.f32 %v3829
    %vm3837 = vmor %vm3835, %vm3836
    %v3838 = vsel %vm3837, %v3829, %v3834
    %v3839 = vrsqrt.pop %v3813
    %v3840 = vmul.f32 %v3839, %v3813
    %v3841 = vmul.f32 %v3840, %v3839
    %v3842 = vmul.f32 0.5, %v3841
    %v3843 = vsub.f32 1.5, %v3842
    %v3844 = vmul.f32 %v3839, %v3843
    %vm3845 = vweird.f32 %v3813
    %vm3846 = vweird.f32 %v3839
    %vm3847 = vmor %vm3845, %vm3846
    %v3848 = vsel %vm3847, %v3839, %v3844
    %v3849 = vrsqrt.pop %v3814
    %v3850 = vmul.f32 %v3849, %v3814
    %v3851 = vmul.f32 %v3850, %v3849
    %v3852 = vmul.f32 0.5, %v3851
    %v3853 = vsub.f32 1.5, %v3852
    %v3854 = vmul.f32 %v3849, %v3853
    %vm3855 = vweird.f32 %v3814
    %vm3856 = vweird.f32 %v3849
    %vm3857 = vmor %vm3855, %vm3856
    %v3858 = vsel %vm3857, %v3849, %v3854
    %v3859 = vrsqrt.pop %v3815
    %v3860 = vmul.f32 %v3859, %v3815
    %v3861 = vmul.f32 %v3860, %v3859
    %v3862 = vmul.f32 0.5, %v3861
    %v3863 = vsub.f32 1.5, %v3862
    %v3864 = vmul.f32 %v3859, %v3863
    %vm3865 = vweird.f32 %v3815
    %vm3866 = vweird.f32 %v3859
    %vm3867 = vmor %vm3865, %vm3866
    %v3868 = vsel %vm3867, %v3859, %v3864
    %v3869 = vrsqrt.pop %v3816
    %v3870 = vmul.f32 %v3869, %v3816
    %v3871 = vmul.f32 %v3870, %v3869
    %v3872 = vmul.f32 0.5, %v3871
    %v3873 = vsub.f32 1.5, %v3872
    %v3874 = vmul.f32 %v3869, %v3873
    %vm3875 = vweird.f32 %v3816
    %vm3876 = vweird.f32 %v3869
    %vm3877 = vmor %vm3875, %vm3876
    %v3878 = vsel %vm3877, %v3869, %v3874
    %v3879 = vrsqrt.pop %v3817
    %v3880 = vmul.f32 %v3879, %v3817
    %v3881 = vmul.f32 %v3880, %v3879
    %v3882 = vmul.f32 0.5, %v3881
    %v3883 = vsub.f32 1.5, %v3882
    %v3884 = vmul.f32 %v3879, %v3883
    %vm3885 = vweird.f32 %v3817
    %vm3886 = vweird.f32 %v3879
    %vm3887 = vmor %vm3885, %vm3886
    %v3888 = vsel %vm3887, %v3879, %v3884
    %v3889 = vrsqrt.pop %v3818
    %v3890 = vmul.f32 %v3889, %v3818
    %v3891 = vmul.f32 %v3890, %v3889
    %v3892 = vmul.f32 0.5, %v3891
    %v3893 = vsub.f32 1.5, %v3892
    %v3894 = vmul.f32 %v3889, %v3893
    %vm3895 = vweird.f32 %v3818
    %vm3896 = vweird.f32 %v3889
    %vm3897 = vmor %vm3895, %vm3896
    %v3898 = vsel %vm3897, %v3889, %v3894
    %v3899 = vmul.f32 %v3763, %v3828
    %v3900 = vmul.f32 %v3764, %v3838
    %v3901 = vmul.f32 %v3765, %v3848
    %v3902 = vmul.f32 %v3766, %v3858
    %v3903 = vmul.f32 %v3767, %v3868
    %v3904 = vmul.f32 %v3768, %v3878
    %v3905 = vmul.f32 %v3769, %v3888
    %v3906 = vmul.f32 %v3770, %v3898
    %v3907 = vperm.slane %v177, 0
    %v3908 = vmul.f32 %v3899, %v3907
    %v3909 = vmul.f32 %v3900, %v3907
    %v3910 = vmul.f32 %v3901, %v3907
    %v3911 = vmul.f32 %v3902, %v3907
    %v3912 = vmul.f32 %v3903, %v3907
    %v3913 = vmul.f32 %v3904, %v3907
    %v3914 = vmul.f32 %v3905, %v3907
    %v3915 = vmul.f32 %v3906, %v3907
    %v3916 = vperm.slane %v178, 0
    %v3917 = vadd.f32 %v3908, %v3916
    %v3918 = vadd.f32 %v3909, %v3916
    %v3919 = vadd.f32 %v3910, %v3916
    %v3920 = vadd.f32 %v3911, %v3916
    %v3921 = vadd.f32 %v3912, %v3916
    %v3922 = vadd.f32 %v3913, %v3916
    %v3923 = vadd.f32 %v3914, %v3916
    %v3924 = vadd.f32 %v3915, %v3916
    %s3925 = scalar_lea.vmem [#allocation17], %s181
    %3926 = vst.msk [vmem:[%s3925] sm:$0xff] %vm361, %v3917
    %3927 = vst.msk [vmem:[%s3925 + $0x8] sm:$0xff] %vm361, %v3918
    %3928 = vst.msk [vmem:[%s3925 + $0x10] sm:$0xff] %vm361, %v3919
    %3929 = vst.msk [vmem:[%s3925 + $0x18] sm:$0xff] %vm361, %v3920
    %3930 = vst.msk [vmem:[%s3925 + $0x20] sm:$0xff] %vm361, %v3921
    %3931 = vst.msk [vmem:[%s3925 + $0x28] sm:$0xff] %vm361, %v3922
    %3932 = vst.msk [vmem:[%s3925 + $0x30] sm:$0xff] %vm361, %v3923
    %3933 = vst.msk [vmem:[%s3925 + $0x38] sm:$0xff] %vm361, %v3924
    // Predicated region
    $region78: #{tpu_custom_call.1} parent=1 // pred_check
      _
    $region79: #{tpu_custom_call.1} parent=1 // pred_check_branch
      %3935 = sbr.rel (0) target = $region81
    $region80: #{tpu_custom_call.1} parent=1 // pred_region
      %3937 = vsyncadd [#allocation4], 0
      %s3938 = sshll.u32 [#allocation17], 4
      %s3939 = int_to_ptr.vmem [resolvable:$true] %s3938
      %s3940 = sshll.u32 %s10, 4
      %s3941 = int_to_ptr.hbm [resolvable:$true] %s3940
      %3946 = dma.vmem_to_hbm [thread:$0]  %s3939, 1024, %s3941, [#allocation4], 128, 128, 8
    $region81: #{tpu_custom_call.1} parent=1 // pred_fallthru
      _
    // Predicated region
    $region82: #{tpu_custom_call.1} parent=1 // pred_check
      _
    $region83: #{tpu_custom_call.1} parent=1 // pred_check_branch
      %3948 = sbr.rel (0) target = $region85
    $region84: #{tpu_custom_call.1} parent=1 // pred_region
      %3950 = dma.done [#allocation4], 1024
    $region85: #{tpu_custom_call.1} parent=1 // pred_fallthru
      _
    %3951 = vsyncpa [#allocation3], 1
    %3952 = vsyncpa [#allocation6], 1
    %3953 = vsyncpa [#allocation9], 1
    %3954 = vsyncpa [#allocation12], 1
    %3955 = vsyncpa [#allocation15], 1
    %3956 = vsyncpa [#allocation4], 1

</llo_original>
